<compile_context>
chip_gen: v7x
topology: tpu7x:2x2x1
jax: 0.10.0
libtpu: 0.0.40
codegen_flags: <defaults>
</compile_context>

<pallas_src>
import math
import jax
import jax.numpy as jnp
from jax.experimental import pallas as pl
from jax.experimental.pallas import tpu as pltpu


# ------------------------------ small helpers -------------------------------

def _round_up(x, m):
    return ((x + m - 1) // m) * m


def _pick_tm(M, cap):
    """Row tile: as large as possible up to `cap`, but keep >= 2 grid programs when M allows."""
    half = _round_up(max(1, (M + 1) // 2), 128)
    return int(max(128, min(cap, half)))


# ----------------------------- Pallas kernels ------------------------------

def _gemm_bias_stats_kernel(a_ref, w_ref, b_ref, o_ref, st_ref, acc_ref):
    """Tiled GEMM (bf16 in, f32 acc) + bias, emitting per-tile column sum / sum-of-squares."""
    @pl.when(pl.program_id(1) == 0)
    def _():
        acc_ref[...] = jnp.zeros_like(acc_ref)

    acc_ref[...] += jnp.dot(a_ref[...], w_ref[...], preferred_element_type=jnp.float32)

    @pl.when(pl.program_id(1) == pl.num_programs(1) - 1)
    def _():
        y = acc_ref[...] + b_ref[...]
        o_ref[...] = y.astype(o_ref.dtype)
        s = jnp.sum(y, axis=0, keepdims=True)          # (1, Np)
        q = jnp.sum(y * y, axis=0, keepdims=True)      # (1, Np)
        rid = jax.lax.broadcasted_iota(jnp.int32, (2, y.shape[1]), 0)
        st_ref[...] = jnp.where(rid == 0, s, q)[None]  # row 0 = sum, row 1 = sum of squares


def _bn_relu_kernel(x_ref, scale_ref, shift_ref, o_ref):
    y = x_ref[...] * scale_ref[...] + shift_ref[...]
    o_ref[...] = jnp.maximum(y, 0.0).astype(o_ref.dtype)


# ------------------------------ Pallas wrappers -----------------------------

def pallas_gemm_bias_stats(a, w, b, tm=None, tk=512):
    """a: (M, K), w: (K, N), b: (N,).  Returns:
       y_pad (Mp, Np) f32, col_sum (Np,), col_sumsq (Np,), M, N
       (sums are over the M *valid* rows; padded-row bias contributions are corrected out)."""
    M, K = a.shape
    K2, N = w.shape
    assert K2 == K
    Np = _round_up(N, 128)                      # lane-dense output
    tm = tm if tm is not None else _pick_tm(M, 512)
    Mp = _round_up(M, tm)
    if K > tk:                                  # K tiling for large CenterNet-sized K
        kb = tk
        Kp = _round_up(K, tk)
    else:
        kb = K
        Kp = K

    a_p = a
    if (Mp != M) or (Kp != K):
        a_p = jnp.pad(a, ((0, Mp - M), (0, Kp - K)))
    w_p = w
    if (Kp != K) or (Np != N):
        w_p = jnp.pad(w, ((0, Kp - K), (0, Np - N)))
    b_p = jnp.pad(b, (0, Np - N)) if Np != N else b

    a_p = a_p.astype(jnp.bfloat16)              # bf16 MXU operands, f32 accumulate
    w_p = w_p.astype(jnp.bfloat16)
    b_p = b_p.astype(jnp.float32).reshape(1, Np)

    gm, gk = Mp // tm, Kp // kb
    y_pad, stats = pl.pallas_call(
        _gemm_bias_stats_kernel,
        out_shape=(jax.ShapeDtypeStruct((Mp, Np), jnp.float32),
                   jax.ShapeDtypeStruct((gm, 2, Np), jnp.float32)),
        grid=(gm, gk),
        in_specs=[
            pl.BlockSpec((tm, kb), lambda i, k: (i, k)),
            pl.BlockSpec((kb, Np), lambda i, k: (k, 0)),
            pl.BlockSpec((1, Np), lambda i, k: (0, 0)),
        ],
        out_specs=(
            pl.BlockSpec((tm, Np), lambda i, k: (i, 0)),
            pl.BlockSpec((1, 2, Np), lambda i, k: (i, 0, 0)),
        ),
        scratch_shapes=[pltpu.VMEM((tm, Np), jnp.float32)],
        compiler_params=pltpu.CompilerParams(
            dimension_semantics=("parallel", "arbitrary"),
            vmem_limit_bytes=32 * 1024 * 1024),
    )(a_p, w_p, b_p)

    # Padded rows of `a` are zero, so their GEMM output is exactly the bias: correct the sums.
    n_pad = Mp - M
    bias_row = b_p[0]
    col_sum = stats[:, 0, :].sum(axis=0) - n_pad * bias_row
    col_ssq = stats[:, 1, :].sum(axis=0) - n_pad * (bias_row * bias_row)
    return y_pad, col_sum, col_ssq, M, N


def pallas_bn_relu(x_pad, mean_p, var_p, gamma_p, beta_p, eps=1e-5, tm=None):
    """x_pad: (Mp, Cp) with Cp a multiple of 128; per-channel affine normalize + ReLU."""
    Mp, Cp = x_pad.shape
    inv = gamma_p * jax.lax.rsqrt(var_p + eps)                       # tiny glue, (Cp,)
    scale = inv.reshape(1, Cp).astype(jnp.float32)
    shift = (beta_p - mean_p * inv).reshape(1, Cp).astype(jnp.float32)

    tm = tm if tm is not None else _pick_tm(Mp, 1024)
    Mq = _round_up(Mp, tm)
    xq = jnp.pad(x_pad, ((0, Mq - Mp), (0, 0))) if Mq != Mp else x_pad

    out = pl.pallas_call(
        _bn_relu_kernel,
        out_shape=jax.ShapeDtypeStruct((Mq, Cp), jnp.float32),
        grid=(Mq // tm,),
        in_specs=[
            pl.BlockSpec((tm, Cp), lambda i: (i, 0)),
            pl.BlockSpec((1, Cp), lambda i: (0, 0)),
            pl.BlockSpec((1, Cp), lambda i: (0, 0)),
        ],
        out_specs=pl.BlockSpec((tm, Cp), lambda i: (i, 0)),
        compiler_params=pltpu.CompilerParams(
            dimension_semantics=("parallel",),
            vmem_limit_bytes=32 * 1024 * 1024),
    )(xq, scale, shift)
    return out[:Mp] if Mq != Mp else out


# ------------------------------ JAX glue ops --------------------------------

def im2col_nhwc(xp, k):
    """xp: (B, Hp, Wp, C) already padded, stride 1 -> (B*Ho*Wo, k*k*C), Ho, Wo.
    Column order: (ki*k+kj)*C + c  (matches weight.transpose(2,3,1,0).reshape(k*k*C, Cout))."""
    B, Hp, Wp, C = xp.shape
    Ho, Wo = Hp - k + 1, Wp - k + 1
    patches = [xp[:, i:i + Ho, j:j + Wo, :] for i in range(k) for j in range(k)]
    cols = jnp.stack(patches, axis=3)                     # (B, Ho, Wo, k*k, C)
    return cols.reshape(B * Ho * Wo, k * k * C), Ho, Wo


def dilate_and_pad_nhwc(x, stride, pad, out_pad):
    """Turn ConvTranspose2d input into an equivalent regular-conv input (NHWC)."""
    B, H, W, C = x.shape
    Hd, Wd = (H - 1) * stride + 1, (W - 1) * stride + 1
    xd = jnp.zeros((B, Hd, Wd, C), x.dtype).at[:, ::stride, ::stride, :].set(x)
    return jnp.pad(xd, ((0, 0), (pad, pad + out_pad), (pad, pad + out_pad), (0, 0)))


def dcn_sample_nhwc(x_nhwc, off_y, off_x, mask):
    """Modulated deformable sampling (3x3, dilation 1), NHWC, flattened 1-D gather per corner.
    x_nhwc: (B, H, W, C); off_y/off_x/mask: (B, H, W, 9).  Returns (B, H, W, 9, C)."""
    # TODO(synk): data-dependent bilinear gather has no clean Pallas/TPU equivalent; kept as a
    # single flattened XLA gather per corner with mask modulation fused in.
    B, H, W, C = x_nhwc.shape
    ki, kj = jnp.meshgrid(jnp.arange(3), jnp.arange(3), indexing="ij")
    ky = ki.reshape(9).astype(jnp.float32) - 1.0
    kx = kj.reshape(9).astype(jnp.float32) - 1.0

    base_y = jnp.arange(H, dtype=jnp.float32)[None, :, None, None]
    base_x = jnp.arange(W, dtype=jnp.float32)[None, None, :, None]
    py = base_y + ky[None, None, None, :] + off_y           # (B, H, W, 9)
    px = base_x + kx[None, None, None, :] + off_x

    y0 = jnp.floor(py).astype(jnp.int32)
    x0 = jnp.floor(px).astype(jnp.int32)
    y1, x1 = y0 + 1, x0 + 1
    dy = py - y0.astype(jnp.float32)
    dx = px - x0.astype(jnp.float32)

    x_flat = x_nhwc.reshape(B, H * W, C)

    def corner(yi, xi):
        valid = ((yi >= 0) & (yi < H) & (xi >= 0) & (xi < W)).astype(x_nhwc.dtype)
        yc = jnp.clip(yi, 0, H - 1)
        xc = jnp.clip(xi, 0, W - 1)
        idx = (yc * W + xc).reshape(B, H * W * 9)
        g = jax.vmap(lambda img, ind: jnp.take(img, ind, axis=0))(x_flat, idx)
        return g.reshape(B, H, W, 9, C) * valid[..., None]

    v00, v01 = corner(y0, x0), corner(y0, x1)
    v10, v11 = corner(y1, x0), corner(y1, x1)
    w00 = ((1 - dy) * (1 - dx))[..., None]
    w01 = ((1 - dy) * dx)[..., None]
    w10 = (dy * (1 - dx))[..., None]
    w11 = (dy * dx)[..., None]
    out = v00 * w00 + v01 * w01 + v10 * w10 + v11 * w11     # (B, H, W, 9, C)
    return out * mask[..., None]                            # DCNv2 modulation


# ------------------------------ DeconvLayer ---------------------------------

class DeconvLayerPallas:
    def __init__(self, in_planes, out_planes, deconv_kernel,
                 deconv_stride=2, deconv_pad=1, deconv_out_pad=0, seed=0):
        self.in_planes, self.out_planes = in_planes, out_planes
        self.k_up, self.s_up = deconv_kernel, deconv_stride
        self.p_up, self.op_up = deconv_pad, deconv_out_pad
        key = jax.random.PRNGKey(seed)
        k_dcn, k_up = jax.random.split(key)

        # --- ModulatedDeformConvPack(3x3, stride 1, pad 1, deformable_groups=1) ---
        fan_in = in_planes * 9
        stdv = 1.0 / math.sqrt(fan_in)
        self.w_dcn = jax.random.uniform(k_dcn, (out_planes, in_planes, 3, 3),
                                        jnp.float32, -stdv, stdv)
        self.b_dcn = jnp.zeros((out_planes,), jnp.float32)
        # conv_offset_mask: Conv2d(in_planes, 27, 3, pad=1) zero-initialized (DCNv2 init_offset)
        self.w_off = jnp.zeros((27, in_planes, 3, 3), jnp.float32)
        self.b_off = jnp.zeros((27,), jnp.float32)

        # --- BatchNorms (affine, fresh init; training-mode forward with batch stats) ---
        self.g1 = jnp.ones((out_planes,), jnp.float32)
        self.bt1 = jnp.zeros((out_planes,), jnp.float32)
        self.g2 = jnp.ones((out_planes,), jnp.float32)
        self.bt2 = jnp.zeros((out_planes,), jnp.float32)
        self.eps = 1e-5

        # --- ConvTranspose2d(out_planes, out_planes, k, stride, pad, out_pad, bias=False) ---
        fan_in_up = out_planes * deconv_kernel * deconv_kernel
        bound = 1.0 / math.sqrt(fan_in_up)
        w_up = jax.random.uniform(k_up, (out_planes, out_planes, deconv_kernel, deconv_kernel),
                                  jnp.float32, -bound, bound)
        # _deconv_init: bilinear kernel written into output-channel 0 of every input channel
        f = math.ceil(deconv_kernel / 2)
        c = (2 * f - 1 - f % 2) / (2.0 * f)
        bil = jnp.array([[(1 - abs(i / f - c)) * (1 - abs(j / f - c))
                          for j in range(deconv_kernel)] for i in range(deconv_kernel)],
                        dtype=jnp.float32)
        self.w_up = w_up.at[:, 0, :, :].set(bil)

        # --- Pre-flattened weights in (k*k, Cin) column order (matches im2col_nhwc) ---
        C, Co, k = in_planes, out_planes, deconv_kernel
        self.w_off_flat = self.w_off.transpose(2, 3, 1, 0).reshape(9 * C, 27)
        self.w_dcn_flat = self.w_dcn.transpose(2, 3, 1, 0).reshape(9 * C, Co)
        # equivalent regular-conv weight of the ConvTranspose: flip spatial, swap in/out channels
        w_conv = jnp.flip(self.w_up, axis=(2, 3)).transpose(1, 0, 2, 3)   # (out, in, k, k)
        self.w_up_flat = w_conv.transpose(2, 3, 1, 0).reshape(k * k * Co, Co)
        self.b_up = jnp.zeros((Co,), jnp.float32)

        self._jit_forward = jax.jit(self._forward)

    # -------------------------------------------------------------------------
    def _bn_relu_from_stats(self, y_pad, col_sum, col_ssq, M, gamma, beta):
        Np = y_pad.shape[1]
        Co = gamma.shape[0]
        mean = col_sum / M
        var = jnp.maximum(col_ssq / M - mean * mean, 0.0)   # biased var (training-mode BN)
        gamma_p = jnp.pad(gamma, (0, Np - Co))
        beta_p = jnp.pad(beta, (0, Np - Co))
        return pallas_bn_relu(y_pad, mean, var, gamma_p, beta_p, self.eps)

    def _forward(self, x):
        B, C, H, W = x.shape
        Co = self.out_planes
        x_nhwc = x.transpose(0, 2, 3, 1)                               # single boundary transpose

        # ---- offset/mask conv (Pallas GEMM on NHWC im2col) ----
        xp = jnp.pad(x_nhwc, ((0, 0), (1, 1), (1, 1), (0, 0)))
        cols_x, _, _ = im2col_nhwc(xp, 3)                              # (B*H*W, 9*C)
        om_pad, _, _, M0, _ = pallas_gemm_bias_stats(cols_x, self.w_off_flat, self.b_off)
        om = om_pad[:M0, :27].reshape(B, H, W, 27)
        off_y = om[..., 0:18:2]                                        # (B, H, W, 9)
        off_x = om[..., 1:18:2]
        mask = jax.nn.sigmoid(om[..., 18:27])

        # ---- modulated deformable sampling (flattened gather, NHWC) ----
        sampled = dcn_sample_nhwc(x_nhwc, off_y, off_x, mask)          # (B, H, W, 9, C)
        cols_dcn = sampled.reshape(B * H * W, 9 * C)

        # ---- DCN main conv: Pallas GEMM + bias + fused BN batch stats ----
        y_pad, s1, q1, M1, _ = pallas_gemm_bias_stats(cols_dcn, self.w_dcn_flat, self.b_dcn)
        y_bn = self._bn_relu_from_stats(y_pad, s1, q1, M1, self.g1, self.bt1)
        y_nhwc = y_bn[:M1, :Co].reshape(B, H, W, Co)

        # ---- ConvTranspose2d as dilate+pad -> regular conv (Pallas GEMM) ----
        pad_eq = self.k_up - 1 - self.p_up
        z = dilate_and_pad_nhwc(y_nhwc, self.s_up, pad_eq, self.op_up)
        cols_up, Ho, Wo = im2col_nhwc(z, self.k_up)                    # (B*Ho*Wo, k*k*Co)
        u_pad, s2, q2, M2, _ = pallas_gemm_bias_stats(cols_up, self.w_up_flat, self.b_up)
        u_bn = self._bn_relu_from_stats(u_pad, s2, q2, M2, self.g2, self.bt2)
        out = u_bn[:M2, :Co].reshape(B, Ho, Wo, Co)
        return out.transpose(0, 3, 1, 2)                               # back to NCHW

    def __call__(self, x):
        return self._jit_forward(x)


# --------------------------------- main --------------------------------------

if __name__ == "__main__":
    in_planes, out_planes, deconv_kernel = 4, 8, 4
    B, H, W = 2, 16, 16

    key = jax.random.PRNGKey(0)
    x = jax.random.normal(key, (B, in_planes, H, W), jnp.float32)

    layer = DeconvLayerPallas(in_planes, out_planes, deconv_kernel, seed=0)
    out = layer(x)
    out = jax.block_until_ready(out)

    assert out.shape == (B, out_planes, 2 * H, 2 * W), out.shape
    assert bool(jnp.all(jnp.isfinite(out)))
    assert bool(jnp.all(out >= 0.0))  # final ReLU
    print("KERNEL_OK")
</pallas_src>

<mosaic_0001>
module attributes {stable_mosaic.version = 11 : i64} {
  func.func @_gemm_bias_stats_kernel(%arg0: i32, %arg1: i32, %arg2: memref<256x36xbf16, #tpu.memory_space<vmem>>, %arg3: memref<36x128xbf16, #tpu.memory_space<vmem>>, %arg4: memref<1x128xf32, #tpu.memory_space<vmem>>, %arg5: memref<256x128xf32, #tpu.memory_space<vmem>>, %arg6: memref<1x2x128xf32, #tpu.memory_space<vmem>>, %arg7: memref<256x128xf32, #tpu.memory_space<vmem>>) attributes {dimension_semantics = [#tpu.dimension_semantics<parallel>, #tpu.dimension_semantics<arbitrary>], iteration_bounds = array<i64: 2, 1>, scalar_prefetch = 0 : i64, scratch_operands = 1 : i64, tpu.core_type = #tpu.core_type<tc>, window_params = [{transform_indices = @transform_0, window_bounds = array<i64: 256, 36>}, {transform_indices = @transform_1, window_bounds = array<i64: 36, 128>}, {pipeline_mode = #tpu.pipeline_mode<synchronous>, transform_indices = @transform_2, window_bounds = array<i64: 1, 128>}, {transform_indices = @transform_3, window_bounds = array<i64: 256, 128>}, {transform_indices = @transform_4, window_bounds = array<i64: 1, 2, 128>}]} {
    %c0_i32 = arith.constant 0 : i32
    %0 = arith.cmpi eq, %arg1, %c0_i32 : i32
    %1 = arith.extui %0 : i1 to i32
    %c0_i32_0 = arith.constant 0 : i32
    %2 = arith.cmpi ne, %1, %c0_i32_0 : i32
    scf.if %2 {
      %cst_10 = arith.constant 0.000000e+00 : f32
      %12 = vector.broadcast %cst_10 : f32 to vector<256x128xf32>
      %c0_11 = arith.constant 0 : index
      %c0_12 = arith.constant 0 : index
      %13 = vector.load %arg7[%c0_11, %c0_12] : memref<256x128xf32, #tpu.memory_space<vmem>>, vector<256x128xf32>
      tpu.vector_store %arg7[%c0_11, %c0_12], %12 {strides = array<i32>} : memref<256x128xf32, #tpu.memory_space<vmem>>, vector<256x128xf32>,
    } else {
    }
    %c0 = arith.constant 0 : index
    %c0_1 = arith.constant 0 : index
    %3 = vector.load %arg7[%c0, %c0_1] : memref<256x128xf32, #tpu.memory_space<vmem>>, vector<256x128xf32>
    %c0_2 = arith.constant 0 : index
    %c0_3 = arith.constant 0 : index
    %4 = vector.load %arg2[%c0_2, %c0_3] : memref<256x36xbf16, #tpu.memory_space<vmem>>, vector<256x36xbf16>
    %c0_4 = arith.constant 0 : index
    %c0_5 = arith.constant 0 : index
    %5 = vector.load %arg3[%c0_4, %c0_5] : memref<36x128xbf16, #tpu.memory_space<vmem>>, vector<36x128xbf16>
    %cst = arith.constant dense<0.000000e+00> : vector<256x128xf32>
    %6 = tpu.matmul %4, %5, %cst {dimension_numbers = #tpu.dot_dimension_numbers<[1], [0], [0], [1], [0, 0, 1, 1], [], []>} : vector<256x36xbf16>, vector<36x128xbf16>, vector<256x128xf32> -> vector<256x128xf32>
    %7 = arith.addf %3, %6 : vector<256x128xf32>
    %c0_6 = arith.constant 0 : index
    %c0_7 = arith.constant 0 : index
    %8 = vector.load %arg7[%c0_6, %c0_7] : memref<256x128xf32, #tpu.memory_space<vmem>>, vector<256x128xf32>
    tpu.vector_store %arg7[%c0_6, %c0_7], %7 {strides = array<i32>} : memref<256x128xf32, #tpu.memory_space<vmem>>, vector<256x128xf32>,
    %c0_i32_8 = arith.constant 0 : i32
    %9 = arith.cmpi eq, %arg1, %c0_i32_8 : i32
    %10 = arith.extui %9 : i1 to i32
    %c0_i32_9 = arith.constant 0 : i32
    %11 = arith.cmpi ne, %10, %c0_i32_9 : i32
    scf.if %11 {
      %c0_10 = arith.constant 0 : index
      %c0_11 = arith.constant 0 : index
      %12 = vector.load %arg7[%c0_10, %c0_11] : memref<256x128xf32, #tpu.memory_space<vmem>>, vector<256x128xf32>
      %c0_12 = arith.constant 0 : index
      %c0_13 = arith.constant 0 : index
      %13 = vector.load %arg4[%c0_12, %c0_13] : memref<1x128xf32, #tpu.memory_space<vmem>>, vector<1x128xf32>
      %14 = vector.broadcast %13 : vector<1x128xf32> to vector<256x128xf32>
      %15 = arith.addf %12, %14 : vector<256x128xf32>
      %c0_14 = arith.constant 0 : index
      %c0_15 = arith.constant 0 : index
      %16 = vector.load %arg5[%c0_14, %c0_15] : memref<256x128xf32, #tpu.memory_space<vmem>>, vector<256x128xf32>
      tpu.vector_store %arg5[%c0_14, %c0_15], %15 {strides = array<i32>} : memref<256x128xf32, #tpu.memory_space<vmem>>, vector<256x128xf32>,
      %cst_16 = arith.constant dense<0.000000e+00> : vector<128xf32>
      %17 = vector.multi_reduction <add>, %15, %cst_16 [0] : vector<256x128xf32> to vector<128xf32>
      %18 = vector.shape_cast %17 : vector<128xf32> to vector<1x128xf32>
      %19 = arith.mulf %15, %15 : vector<256x128xf32>
      %cst_17 = arith.constant dense<0.000000e+00> : vector<128xf32>
      %20 = vector.multi_reduction <add>, %19, %cst_17 [0] : vector<256x128xf32> to vector<128xf32>
      %21 = vector.shape_cast %20 : vector<128xf32> to vector<1x128xf32>
      %22 = tpu.iota {dimensions = array<i32: 0>} : vector<2x128xi32>
      %c0_i32_18 = arith.constant 0 : i32
      %23 = vector.broadcast %c0_i32_18 : i32 to vector<2x128xi32>
      %24 = arith.cmpi eq, %22, %23 : vector<2x128xi32>
      %25 = vector.shape_cast %18 : vector<1x128xf32> to vector<1x128xf32>
      %26 = vector.broadcast %25 : vector<1x128xf32> to vector<2x128xf32>
      %27 = vector.shape_cast %21 : vector<1x128xf32> to vector<1x128xf32>
      %28 = vector.broadcast %27 : vector<1x128xf32> to vector<2x128xf32>
      %29 = arith.select %24, %26, %28 : vector<2x128xi1>, vector<2x128xf32>
      %30 = vector.shape_cast %29 : vector<2x128xf32> to vector<1x2x128xf32>
      %c0_19 = arith.constant 0 : index
      %c0_20 = arith.constant 0 : index
      %c0_21 = arith.constant 0 : index
      %31 = vector.load %arg6[%c0_19, %c0_20, %c0_21] : memref<1x2x128xf32, #tpu.memory_space<vmem>>, vector<1x2x128xf32>
      tpu.vector_store %arg6[%c0_19, %c0_20, %c0_21], %30 {strides = array<i32>} : memref<1x2x128xf32, #tpu.memory_space<vmem>>, vector<1x2x128xf32>,
    } else {
    }
    return
  }
  func.func @transform_0(%arg0: i32, %arg1: i32) -> (i32, i32) {
    %c0_i32 = arith.constant 0 : i32
    return %arg0, %arg1 : i32, i32
  }
  func.func @transform_1(%arg0: i32, %arg1: i32) -> (i32, i32) {
    %c0_i32 = arith.constant 0 : i32
    %c0_i32_0 = arith.constant 0 : i32
    return %arg1, %c0_i32 : i32, i32
  }
  func.func @transform_2(%arg0: i32, %arg1: i32) -> (i32, i32) {
    %c0_i32 = arith.constant 0 : i32
    %c0_i32_0 = arith.constant 0 : i32
    %c0_i32_1 = arith.constant 0 : i32
    return %c0_i32, %c0_i32_0 : i32, i32
  }
  func.func @transform_3(%arg0: i32, %arg1: i32) -> (i32, i32) {
    %c0_i32 = arith.constant 0 : i32
    %c0_i32_0 = arith.constant 0 : i32
    return %arg0, %c0_i32 : i32, i32
  }
  func.func @transform_4(%arg0: i32, %arg1: i32) -> (i32, i32, i32) {
    %c0_i32 = arith.constant 0 : i32
    %c0_i32_0 = arith.constant 0 : i32
    %c0_i32_1 = arith.constant 0 : i32
    return %arg0, %c0_i32, %c0_i32_0 : i32, i32, i32
  }
}

module attributes {stable_mosaic.version = 11 : i64} {
  func.func @_gemm_bias_stats_kernel(%arg0: i32, %arg1: i32, %arg2: memref<256x36xbf16, #tpu.memory_space<vmem>>, %arg3: memref<36x128xbf16, #tpu.memory_space<vmem>>, %arg4: memref<1x128xf32, #tpu.memory_space<vmem>>, %arg5: memref<256x128xf32, #tpu.memory_space<vmem>>, %arg6: memref<1x2x128xf32, #tpu.memory_space<vmem>>, %arg7: memref<256x128xf32, #tpu.memory_space<vmem>>) attributes {dimension_semantics = [#tpu.dimension_semantics<parallel>, #tpu.dimension_semantics<arbitrary>], iteration_bounds = array<i64: 2, 1>, scalar_prefetch = 0 : i64, scratch_operands = 1 : i64, tpu.core_type = #tpu.core_type<tc>, window_params = [{transform_indices = @transform_0, window_bounds = array<i64: 256, 36>}, {transform_indices = @transform_1, window_bounds = array<i64: 36, 128>}, {pipeline_mode = #tpu.pipeline_mode<synchronous>, transform_indices = @transform_2, window_bounds = array<i64: 1, 128>}, {transform_indices = @transform_3, window_bounds = array<i64: 256, 128>}, {transform_indices = @transform_4, window_bounds = array<i64: 1, 2, 128>}]} {
    %c0_i32 = arith.constant 0 : i32
    %0 = arith.cmpi eq, %arg1, %c0_i32 : i32
    %1 = arith.extui %0 : i1 to i32
    %c0_i32_0 = arith.constant 0 : i32
    %2 = arith.cmpi ne, %1, %c0_i32_0 : i32
    scf.if %2 {
      %cst_10 = arith.constant 0.000000e+00 : f32
      %12 = vector.broadcast %cst_10 : f32 to vector<256x128xf32>
      %c0_11 = arith.constant 0 : index
      %c0_12 = arith.constant 0 : index
      %13 = vector.load %arg7[%c0_11, %c0_12] : memref<256x128xf32, #tpu.memory_space<vmem>>, vector<256x128xf32>
      tpu.vector_store %arg7[%c0_11, %c0_12], %12 {strides = array<i32>} : memref<256x128xf32, #tpu.memory_space<vmem>>, vector<256x128xf32>,
    } else {
    }
    %c0 = arith.constant 0 : index
    %c0_1 = arith.constant 0 : index
    %3 = vector.load %arg7[%c0, %c0_1] : memref<256x128xf32, #tpu.memory_space<vmem>>, vector<256x128xf32>
    %c0_2 = arith.constant 0 : index
    %c0_3 = arith.constant 0 : index
    %4 = vector.load %arg2[%c0_2, %c0_3] : memref<256x36xbf16, #tpu.memory_space<vmem>>, vector<256x36xbf16>
    %c0_4 = arith.constant 0 : index
    %c0_5 = arith.constant 0 : index
    %5 = vector.load %arg3[%c0_4, %c0_5] : memref<36x128xbf16, #tpu.memory_space<vmem>>, vector<36x128xbf16>
    %cst = arith.constant dense<0.000000e+00> : vector<256x128xf32>
    %6 = tpu.matmul %4, %5, %cst {dimension_numbers = #tpu.dot_dimension_numbers<[1], [0], [0], [1], [0, 0, 1, 1], [], []>} : vector<256x36xbf16>, vector<36x128xbf16>, vector<256x128xf32> -> vector<256x128xf32>
    %7 = arith.addf %3, %6 : vector<256x128xf32>
    %c0_6 = arith.constant 0 : index
    %c0_7 = arith.constant 0 : index
    %8 = vector.load %arg7[%c0_6, %c0_7] : memref<256x128xf32, #tpu.memory_space<vmem>>, vector<256x128xf32>
    tpu.vector_store %arg7[%c0_6, %c0_7], %7 {strides = array<i32>} : memref<256x128xf32, #tpu.memory_space<vmem>>, vector<256x128xf32>,
    %c0_i32_8 = arith.constant 0 : i32
    %9 = arith.cmpi eq, %arg1, %c0_i32_8 : i32
    %10 = arith.extui %9 : i1 to i32
    %c0_i32_9 = arith.constant 0 : i32
    %11 = arith.cmpi ne, %10, %c0_i32_9 : i32
    scf.if %11 {
      %c0_10 = arith.constant 0 : index
      %c0_11 = arith.constant 0 : index
      %12 = vector.load %arg7[%c0_10, %c0_11] : memref<256x128xf32, #tpu.memory_space<vmem>>, vector<256x128xf32>
      %c0_12 = arith.constant 0 : index
      %c0_13 = arith.constant 0 : index
      %13 = vector.load %arg4[%c0_12, %c0_13] : memref<1x128xf32, #tpu.memory_space<vmem>>, vector<1x128xf32>
      %14 = vector.broadcast %13 : vector<1x128xf32> to vector<256x128xf32>
      %15 = arith.addf %12, %14 : vector<256x128xf32>
      %c0_14 = arith.constant 0 : index
      %c0_15 = arith.constant 0 : index
      %16 = vector.load %arg5[%c0_14, %c0_15] : memref<256x128xf32, #tpu.memory_space<vmem>>, vector<256x128xf32>
      tpu.vector_store %arg5[%c0_14, %c0_15], %15 {strides = array<i32>} : memref<256x128xf32, #tpu.memory_space<vmem>>, vector<256x128xf32>,
      %cst_16 = arith.constant dense<0.000000e+00> : vector<128xf32>
      %17 = vector.multi_reduction <add>, %15, %cst_16 [0] : vector<256x128xf32> to vector<128xf32>
      %18 = vector.shape_cast %17 : vector<128xf32> to vector<1x128xf32>
      %19 = arith.mulf %15, %15 : vector<256x128xf32>
      %cst_17 = arith.constant dense<0.000000e+00> : vector<128xf32>
      %20 = vector.multi_reduction <add>, %19, %cst_17 [0] : vector<256x128xf32> to vector<128xf32>
      %21 = vector.shape_cast %20 : vector<128xf32> to vector<1x128xf32>
      %22 = tpu.iota {dimensions = array<i32: 0>} : vector<2x128xi32>
      %c0_i32_18 = arith.constant 0 : i32
      %23 = vector.broadcast %c0_i32_18 : i32 to vector<2x128xi32>
      %24 = arith.cmpi eq, %22, %23 : vector<2x128xi32>
      %25 = vector.shape_cast %18 : vector<1x128xf32> to vector<1x128xf32>
      %26 = vector.broadcast %25 : vector<1x128xf32> to vector<2x128xf32>
      %27 = vector.shape_cast %21 : vector<1x128xf32> to vector<1x128xf32>
      %28 = vector.broadcast %27 : vector<1x128xf32> to vector<2x128xf32>
      %29 = arith.select %24, %26, %28 : vector<2x128xi1>, vector<2x128xf32>
      %30 = vector.shape_cast %29 : vector<2x128xf32> to vector<1x2x128xf32>
      %c0_19 = arith.constant 0 : index
      %c0_20 = arith.constant 0 : index
      %c0_21 = arith.constant 0 : index
      %31 = vector.load %arg6[%c0_19, %c0_20, %c0_21] : memref<1x2x128xf32, #tpu.memory_space<vmem>>, vector<1x2x128xf32>
      tpu.vector_store %arg6[%c0_19, %c0_20, %c0_21], %30 {strides = array<i32>} : memref<1x2x128xf32, #tpu.memory_space<vmem>>, vector<1x2x128xf32>,
    } else {
    }
    return
  }
  func.func @transform_0(%arg0: i32, %arg1: i32) -> (i32, i32) {
    %c0_i32 = arith.constant 0 : i32
    return %arg0, %arg1 : i32, i32
  }
  func.func @transform_1(%arg0: i32, %arg1: i32) -> (i32, i32) {
    %c0_i32 = arith.constant 0 : i32
    %c0_i32_0 = arith.constant 0 : i32
    return %arg1, %c0_i32 : i32, i32
  }
  func.func @transform_2(%arg0: i32, %arg1: i32) -> (i32, i32) {
    %c0_i32 = arith.constant 0 : i32
    %c0_i32_0 = arith.constant 0 : i32
    %c0_i32_1 = arith.constant 0 : i32
    return %c0_i32, %c0_i32_0 : i32, i32
  }
  func.func @transform_3(%arg0: i32, %arg1: i32) -> (i32, i32) {
    %c0_i32 = arith.constant 0 : i32
    %c0_i32_0 = arith.constant 0 : i32
    return %arg0, %c0_i32 : i32, i32
  }
  func.func @transform_4(%arg0: i32, %arg1: i32) -> (i32, i32, i32) {
    %c0_i32 = arith.constant 0 : i32
    %c0_i32_0 = arith.constant 0 : i32
    %c0_i32_1 = arith.constant 0 : i32
    return %arg0, %c0_i32, %c0_i32_0 : i32, i32, i32
  }
}

module attributes {stable_mosaic.version = 11 : i64} {
  func.func @_bn_relu_kernel(%arg0: i32, %arg1: memref<256x128xf32, #tpu.memory_space<vmem>>, %arg2: memref<1x128xf32, #tpu.memory_space<vmem>>, %arg3: memref<1x128xf32, #tpu.memory_space<vmem>>, %arg4: memref<256x128xf32, #tpu.memory_space<vmem>>) attributes {dimension_semantics = [#tpu.dimension_semantics<parallel>], iteration_bounds = array<i64: 2>, scalar_prefetch = 0 : i64, scratch_operands = 0 : i64, tpu.core_type = #tpu.core_type<tc>, window_params = [{transform_indices = @transform_0, window_bounds = array<i64: 256, 128>}, {pipeline_mode = #tpu.pipeline_mode<synchronous>, transform_indices = @transform_1, window_bounds = array<i64: 1, 128>}, {pipeline_mode = #tpu.pipeline_mode<synchronous>, transform_indices = @transform_2, window_bounds = array<i64: 1, 128>}, {transform_indices = @transform_3, window_bounds = array<i64: 256, 128>}]} {
    %c0 = arith.constant 0 : index
    %c0_0 = arith.constant 0 : index
    %0 = vector.load %arg1[%c0, %c0_0] : memref<256x128xf32, #tpu.memory_space<vmem>>, vector<256x128xf32>
    %c0_1 = arith.constant 0 : index
    %c0_2 = arith.constant 0 : index
    %1 = vector.load %arg2[%c0_1, %c0_2] : memref<1x128xf32, #tpu.memory_space<vmem>>, vector<1x128xf32>
    %2 = vector.broadcast %1 : vector<1x128xf32> to vector<256x128xf32>
    %3 = arith.mulf %0, %2 : vector<256x128xf32>
    %c0_3 = arith.constant 0 : index
    %c0_4 = arith.constant 0 : index
    %4 = vector.load %arg3[%c0_3, %c0_4] : memref<1x128xf32, #tpu.memory_space<vmem>>, vector<1x128xf32>
    %5 = vector.broadcast %4 : vector<1x128xf32> to vector<256x128xf32>
    %6 = arith.addf %3, %5 : vector<256x128xf32>
    %cst = arith.constant 0.000000e+00 : f32
    %7 = vector.broadcast %cst : f32 to vector<256x128xf32>
    %8 = arith.maximumf %6, %7 : vector<256x128xf32>
    %c0_5 = arith.constant 0 : index
    %c0_6 = arith.constant 0 : index
    %9 = vector.load %arg4[%c0_5, %c0_6] : memref<256x128xf32, #tpu.memory_space<vmem>>, vector<256x128xf32>
    tpu.vector_store %arg4[%c0_5, %c0_6], %8 {strides = array<i32>} : memref<256x128xf32, #tpu.memory_space<vmem>>, vector<256x128xf32>,
    return
  }
  func.func @transform_0(%arg0: i32) -> (i32, i32) {
    %c0_i32 = arith.constant 0 : i32
    %c0_i32_0 = arith.constant 0 : i32
    return %arg0, %c0_i32 : i32, i32
  }
  func.func @transform_1(%arg0: i32) -> (i32, i32) {
    %c0_i32 = arith.constant 0 : i32
    %c0_i32_0 = arith.constant 0 : i32
    %c0_i32_1 = arith.constant 0 : i32
    return %c0_i32, %c0_i32_0 : i32, i32
  }
  func.func @transform_2(%arg0: i32) -> (i32, i32) {
    %c0_i32 = arith.constant 0 : i32
    %c0_i32_0 = arith.constant 0 : i32
    %c0_i32_1 = arith.constant 0 : i32
    return %c0_i32, %c0_i32_0 : i32, i32
  }
  func.func @transform_3(%arg0: i32) -> (i32, i32) {
    %c0_i32 = arith.constant 0 : i32
    %c0_i32_0 = arith.constant 0 : i32
    return %arg0, %c0_i32 : i32, i32
  }
}

module attributes {stable_mosaic.version = 11 : i64} {
  func.func @_gemm_bias_stats_kernel(%arg0: i32, %arg1: i32, %arg2: memref<512x128xbf16, #tpu.memory_space<vmem>>, %arg3: memref<128x128xbf16, #tpu.memory_space<vmem>>, %arg4: memref<1x128xf32, #tpu.memory_space<vmem>>, %arg5: memref<512x128xf32, #tpu.memory_space<vmem>>, %arg6: memref<1x2x128xf32, #tpu.memory_space<vmem>>, %arg7: memref<512x128xf32, #tpu.memory_space<vmem>>) attributes {dimension_semantics = [#tpu.dimension_semantics<parallel>, #tpu.dimension_semantics<arbitrary>], iteration_bounds = array<i64: 4, 1>, scalar_prefetch = 0 : i64, scratch_operands = 1 : i64, tpu.core_type = #tpu.core_type<tc>, window_params = [{transform_indices = @transform_0, window_bounds = array<i64: 512, 128>}, {transform_indices = @transform_1, window_bounds = array<i64: 128, 128>}, {pipeline_mode = #tpu.pipeline_mode<synchronous>, transform_indices = @transform_2, window_bounds = array<i64: 1, 128>}, {transform_indices = @transform_3, window_bounds = array<i64: 512, 128>}, {transform_indices = @transform_4, window_bounds = array<i64: 1, 2, 128>}]} {
    %c0_i32 = arith.constant 0 : i32
    %0 = arith.cmpi eq, %arg1, %c0_i32 : i32
    %1 = arith.extui %0 : i1 to i32
    %c0_i32_0 = arith.constant 0 : i32
    %2 = arith.cmpi ne, %1, %c0_i32_0 : i32
    scf.if %2 {
      %cst_10 = arith.constant 0.000000e+00 : f32
      %12 = vector.broadcast %cst_10 : f32 to vector<512x128xf32>
      %c0_11 = arith.constant 0 : index
      %c0_12 = arith.constant 0 : index
      %13 = vector.load %arg7[%c0_11, %c0_12] : memref<512x128xf32, #tpu.memory_space<vmem>>, vector<512x128xf32>
      tpu.vector_store %arg7[%c0_11, %c0_12], %12 {strides = array<i32>} : memref<512x128xf32, #tpu.memory_space<vmem>>, vector<512x128xf32>,
    } else {
    }
    %c0 = arith.constant 0 : index
    %c0_1 = arith.constant 0 : index
    %3 = vector.load %arg7[%c0, %c0_1] : memref<512x128xf32, #tpu.memory_space<vmem>>, vector<512x128xf32>
    %c0_2 = arith.constant 0 : index
    %c0_3 = arith.constant 0 : index
    %4 = vector.load %arg2[%c0_2, %c0_3] : memref<512x128xbf16, #tpu.memory_space<vmem>>, vector<512x128xbf16>
    %c0_4 = arith.constant 0 : index
    %c0_5 = arith.constant 0 : index
    %5 = vector.load %arg3[%c0_4, %c0_5] : memref<128x128xbf16, #tpu.memory_space<vmem>>, vector<128x128xbf16>
    %cst = arith.constant dense<0.000000e+00> : vector<512x128xf32>
    %6 = tpu.matmul %4, %5, %cst {dimension_numbers = #tpu.dot_dimension_numbers<[1], [0], [0], [1], [0, 0, 1, 1], [], []>} : vector<512x128xbf16>, vector<128x128xbf16>, vector<512x128xf32> -> vector<512x128xf32>
    %7 = arith.addf %3, %6 : vector<512x128xf32>
    %c0_6 = arith.constant 0 : index
    %c0_7 = arith.constant 0 : index
    %8 = vector.load %arg7[%c0_6, %c0_7] : memref<512x128xf32, #tpu.memory_space<vmem>>, vector<512x128xf32>
    tpu.vector_store %arg7[%c0_6, %c0_7], %7 {strides = array<i32>} : memref<512x128xf32, #tpu.memory_space<vmem>>, vector<512x128xf32>,
    %c0_i32_8 = arith.constant 0 : i32
    %9 = arith.cmpi eq, %arg1, %c0_i32_8 : i32
    %10 = arith.extui %9 : i1 to i32
    %c0_i32_9 = arith.constant 0 : i32
    %11 = arith.cmpi ne, %10, %c0_i32_9 : i32
    scf.if %11 {
      %c0_10 = arith.constant 0 : index
      %c0_11 = arith.constant 0 : index
      %12 = vector.load %arg7[%c0_10, %c0_11] : memref<512x128xf32, #tpu.memory_space<vmem>>, vector<512x128xf32>
      %c0_12 = arith.constant 0 : index
      %c0_13 = arith.constant 0 : index
      %13 = vector.load %arg4[%c0_12, %c0_13] : memref<1x128xf32, #tpu.memory_space<vmem>>, vector<1x128xf32>
      %14 = vector.broadcast %13 : vector<1x128xf32> to vector<512x128xf32>
      %15 = arith.addf %12, %14 : vector<512x128xf32>
      %c0_14 = arith.constant 0 : index
      %c0_15 = arith.constant 0 : index
      %16 = vector.load %arg5[%c0_14, %c0_15] : memref<512x128xf32, #tpu.memory_space<vmem>>, vector<512x128xf32>
      tpu.vector_store %arg5[%c0_14, %c0_15], %15 {strides = array<i32>} : memref<512x128xf32, #tpu.memory_space<vmem>>, vector<512x128xf32>,
      %cst_16 = arith.constant dense<0.000000e+00> : vector<128xf32>
      %17 = vector.multi_reduction <add>, %15, %cst_16 [0] : vector<512x128xf32> to vector<128xf32>
      %18 = vector.shape_cast %17 : vector<128xf32> to vector<1x128xf32>
      %19 = arith.mulf %15, %15 : vector<512x128xf32>
      %cst_17 = arith.constant dense<0.000000e+00> : vector<128xf32>
      %20 = vector.multi_reduction <add>, %19, %cst_17 [0] : vector<512x128xf32> to vector<128xf32>
      %21 = vector.shape_cast %20 : vector<128xf32> to vector<1x128xf32>
      %22 = tpu.iota {dimensions = array<i32: 0>} : vector<2x128xi32>
      %c0_i32_18 = arith.constant 0 : i32
      %23 = vector.broadcast %c0_i32_18 : i32 to vector<2x128xi32>
      %24 = arith.cmpi eq, %22, %23 : vector<2x128xi32>
      %25 = vector.shape_cast %18 : vector<1x128xf32> to vector<1x128xf32>
      %26 = vector.broadcast %25 : vector<1x128xf32> to vector<2x128xf32>
      %27 = vector.shape_cast %21 : vector<1x128xf32> to vector<1x128xf32>
      %28 = vector.broadcast %27 : vector<1x128xf32> to vector<2x128xf32>
      %29 = arith.select %24, %26, %28 : vector<2x128xi1>, vector<2x128xf32>
      %30 = vector.shape_cast %29 : vector<2x128xf32> to vector<1x2x128xf32>
      %c0_19 = arith.constant 0 : index
      %c0_20 = arith.constant 0 : index
      %c0_21 = arith.constant 0 : index
      %31 = vector.load %arg6[%c0_19, %c0_20, %c0_21] : memref<1x2x128xf32, #tpu.memory_space<vmem>>, vector<1x2x128xf32>
      tpu.vector_store %arg6[%c0_19, %c0_20, %c0_21], %30 {strides = array<i32>} : memref<1x2x128xf32, #tpu.memory_space<vmem>>, vector<1x2x128xf32>,
    } else {
    }
    return
  }
  func.func @transform_0(%arg0: i32, %arg1: i32) -> (i32, i32) {
    %c0_i32 = arith.constant 0 : i32
    return %arg0, %arg1 : i32, i32
  }
  func.func @transform_1(%arg0: i32, %arg1: i32) -> (i32, i32) {
    %c0_i32 = arith.constant 0 : i32
    %c0_i32_0 = arith.constant 0 : i32
    return %arg1, %c0_i32 : i32, i32
  }
  func.func @transform_2(%arg0: i32, %arg1: i32) -> (i32, i32) {
    %c0_i32 = arith.constant 0 : i32
    %c0_i32_0 = arith.constant 0 : i32
    %c0_i32_1 = arith.constant 0 : i32
    return %c0_i32, %c0_i32_0 : i32, i32
  }
  func.func @transform_3(%arg0: i32, %arg1: i32) -> (i32, i32) {
    %c0_i32 = arith.constant 0 : i32
    %c0_i32_0 = arith.constant 0 : i32
    return %arg0, %c0_i32 : i32, i32
  }
  func.func @transform_4(%arg0: i32, %arg1: i32) -> (i32, i32, i32) {
    %c0_i32 = arith.constant 0 : i32
    %c0_i32_0 = arith.constant 0 : i32
    %c0_i32_1 = arith.constant 0 : i32
    return %arg0, %c0_i32, %c0_i32_0 : i32, i32, i32
  }
}

module attributes {stable_mosaic.version = 11 : i64} {
  func.func @_bn_relu_kernel(%arg0: i32, %arg1: memref<1024x128xf32, #tpu.memory_space<vmem>>, %arg2: memref<1x128xf32, #tpu.memory_space<vmem>>, %arg3: memref<1x128xf32, #tpu.memory_space<vmem>>, %arg4: memref<1024x128xf32, #tpu.memory_space<vmem>>) attributes {dimension_semantics = [#tpu.dimension_semantics<parallel>], iteration_bounds = array<i64: 2>, scalar_prefetch = 0 : i64, scratch_operands = 0 : i64, tpu.core_type = #tpu.core_type<tc>, window_params = [{transform_indices = @transform_0, window_bounds = array<i64: 1024, 128>}, {pipeline_mode = #tpu.pipeline_mode<synchronous>, transform_indices = @transform_1, window_bounds = array<i64: 1, 128>}, {pipeline_mode = #tpu.pipeline_mode<synchronous>, transform_indices = @transform_2, window_bounds = array<i64: 1, 128>}, {transform_indices = @transform_3, window_bounds = array<i64: 1024, 128>}]} {
    %c0 = arith.constant 0 : index
    %c0_0 = arith.constant 0 : index
    %0 = vector.load %arg1[%c0, %c0_0] : memref<1024x128xf32, #tpu.memory_space<vmem>>, vector<1024x128xf32>
    %c0_1 = arith.constant 0 : index
    %c0_2 = arith.constant 0 : index
    %1 = vector.load %arg2[%c0_1, %c0_2] : memref<1x128xf32, #tpu.memory_space<vmem>>, vector<1x128xf32>
    %2 = vector.broadcast %1 : vector<1x128xf32> to vector<1024x128xf32>
    %3 = arith.mulf %0, %2 : vector<1024x128xf32>
    %c0_3 = arith.constant 0 : index
    %c0_4 = arith.constant 0 : index
    %4 = vector.load %arg3[%c0_3, %c0_4] : memref<1x128xf32, #tpu.memory_space<vmem>>, vector<1x128xf32>
    %5 = vector.broadcast %4 : vector<1x128xf32> to vector<1024x128xf32>
    %6 = arith.addf %3, %5 : vector<1024x128xf32>
    %cst = arith.constant 0.000000e+00 : f32
    %7 = vector.broadcast %cst : f32 to vector<1024x128xf32>
    %8 = arith.maximumf %6, %7 : vector<1024x128xf32>
    %c0_5 = arith.constant 0 : index
    %c0_6 = arith.constant 0 : index
    %9 = vector.load %arg4[%c0_5, %c0_6] : memref<1024x128xf32, #tpu.memory_space<vmem>>, vector<1024x128xf32>
    tpu.vector_store %arg4[%c0_5, %c0_6], %8 {strides = array<i32>} : memref<1024x128xf32, #tpu.memory_space<vmem>>, vector<1024x128xf32>,
    return
  }
  func.func @transform_0(%arg0: i32) -> (i32, i32) {
    %c0_i32 = arith.constant 0 : i32
    %c0_i32_0 = arith.constant 0 : i32
    return %arg0, %c0_i32 : i32, i32
  }
  func.func @transform_1(%arg0: i32) -> (i32, i32) {
    %c0_i32 = arith.constant 0 : i32
    %c0_i32_0 = arith.constant 0 : i32
    %c0_i32_1 = arith.constant 0 : i32
    return %c0_i32, %c0_i32_0 : i32, i32
  }
  func.func @transform_2(%arg0: i32) -> (i32, i32) {
    %c0_i32 = arith.constant 0 : i32
    %c0_i32_0 = arith.constant 0 : i32
    %c0_i32_1 = arith.constant 0 : i32
    return %c0_i32, %c0_i32_0 : i32, i32
  }
  func.func @transform_3(%arg0: i32) -> (i32, i32) {
    %c0_i32 = arith.constant 0 : i32
    %c0_i32_0 = arith.constant 0 : i32
    return %arg0, %c0_i32 : i32, i32
  }
}

</mosaic_0001>

<llo_original>
// kernel: _forward.5
$region0: #{_forward.5}
  #allocation0 [shape = 'u32[]', space=smem, size = 0x4, offset = 0x4, fixed_abs, tag = 'smem constant byte address 0x4 - core index']
  #allocation1 [shape = 'u32[144,128]{1,0:T(1,128)}', space=vmem, size = 0x12000, scoped, tag = 'internal scratch']
  #allocation2 [shape = 'f32[256,128]{1,0:T(8,128)}', space=vmem, size = 0x20000, scoped, tag = 'scratch operand']
  %s0 = inlined_call_operand.vmem [shape: bf16[512,36], index: 0, kind: input, shape index: {}]
  %s1 = inlined_call_operand.vmem [shape: bf16[36,128], index: 1, kind: input, shape index: {}]
  %s2 = inlined_call_operand.vmem [shape: f32[1,128], index: 2, kind: input, shape index: {}]
  %s3 = inlined_call_operand.vmem [shape: f32[512,128], index: 3, kind: output, shape index: {0}]
  %s4 = inlined_call_operand.hbm [shape: f32[2,2,128], index: 4, kind: output, shape index: {1}]
  %5 = xla_tuple %s3, %s4
  %s6 = sld [smem:[#allocation0]]
  $region61: #{_forward.5} parent=0
    _
  %s8 = ssub.s32 1, %s6
  %s9 = scalar_select 0, %s8, %s6
  $region1: #{_forward.5} parent=0
    #allocation3 [shape = 'u8[2048]{0}', space=vmem, size = 0x800, scoped, tag = 'output window, operand 1']
    #allocation4 [shape = 's32[2]{0}', space=sflag, size = 0x8, scoped, tag = 'scoped memory for _forward.5']
    %10 = vsyncpa [#allocation4], 0
    %s11 = scalar_lea.sflag [#allocation4], 1
    %12 = vsyncpa %s11, 0
    loop: start=0, step=1, limit=4
    $region2: #{_forward.5} parent=1 // loop_pre_header
      _
    $region3: #{_forward.5} parent=1 // loop_header
      %s14 = sphi 0, %s18
      %p15 = scmp.ge.s32.totalorder %s14, 4
      %s21 = sphi 0, %s33
      %s22 = sphi 0, %s29
      %s23 = sphi 0, %s21
      %s24 = sphi 0, %s22
      %s25 = sphi 0, %s23
      %s26 = sphi 0, %s24
      %s38 = sphi 0, %s40
      %s41 = sphi 0, %s38
      %s42 = sphi 0, %s41
      %s58 = sphi 0, %s42
      %s64 = sphi 0, %s66
      %s67 = sphi 0, %s64
      %s68 = sphi 0, %s67
      %s84 = sphi 0, %s68
      %s88 = sphi 0, %s88
      %s90 = sphi 0, %s88
      %s91 = sphi 0, %s90
      %s105 = sphi 0, %s91
      %s111 = sphi 0, %s113
      %s114 = sphi 0, %s111
      %s115 = sphi 0, %s114
      %s131 = sphi 0, %s115
      %s137 = sphi 0, %s139
      %s140 = sphi 0, %s137
      %s141 = sphi 0, %s140
      %s157 = sphi 0, %s141
    $region4: #{_forward.5} parent=1 // loop_header_branch
      %17 = sbr.rel (%p15) target = $region8
    $region5: #{_forward.5} parent=1 // loop_body
      %s19 = ssub.s32 %s14, 1
      %s20 = ssub.s32 %s14, 2
      %s27 = sadd.s32 1, %s22
      %p28 = scmp.ge.s32.totalorder %s27, 1
      %s29 = scalar_select %p28, 0, %s27
      %s30 = sadd.s32 1, %s21
      %s31 = scalar_select %p28, %s30, %s21
      %p32 = scmp.ge.s32.totalorder %s31, 2
      %s33 = scalar_select %p32, 0, %s31
      %s34 = ssub.s32 %s21, %s33
      %s35 = ssub.s32 %s22, %s29
      %s36 = sor.u32 %s34, %s35
      %p37 = scmp.eq.s32.totalorder %s36, 0
      %s39 = sadd.s32 %s38, 1
      %s40 = scalar_select %p37, %s38, %s39
      %p43 = pneg %p37
      %p44 = scmp.eq.s32.totalorder %s14, 1
      %p45 = por %p43, %p44
      %p46 = scmp.ne.s32.totalorder %s38, %s41
      %p47 = scmp.eq.s32.totalorder %s14, 0
      %p48 = por %p46, %p47
      %p49 = scmp.ne.s32.totalorder %s38, %s41
      %p50 = scmp.eq.s32.totalorder %s19, 1
      %p51 = por %p49, %p50
      %p52 = scmp.ne.s32.totalorder %s41, %s42
      %p53 = scmp.eq.s32.totalorder %s19, 0
      %p54 = por %p52, %p53
      %p55 = scmp.ne.s32.totalorder %s41, %s42
      %p56 = scmp.eq.s32.totalorder %s20, 1
      %p57 = por %p55, %p56
      %p59 = scmp.ne.s32.totalorder %s42, %s58
      %p60 = scmp.eq.s32.totalorder %s20, 0
      %p61 = por %p59, %p60
      %s62 = ssub.s32 %s22, %s29
      %p63 = scmp.eq.s32.totalorder %s62, 0
      %s65 = sadd.s32 %s64, 1
      %s66 = scalar_select %p63, %s64, %s65
      %p69 = pneg %p63
      %p70 = scmp.eq.s32.totalorder %s14, 1
      %p71 = por %p69, %p70
      %p72 = scmp.ne.s32.totalorder %s64, %s67
      %p73 = scmp.eq.s32.totalorder %s14, 0
      %p74 = por %p72, %p73
      %p75 = scmp.ne.s32.totalorder %s64, %s67
      %p76 = scmp.eq.s32.totalorder %s19, 1
      %p77 = por %p75, %p76
      %p78 = scmp.ne.s32.totalorder %s67, %s68
      %p79 = scmp.eq.s32.totalorder %s19, 0
      %p80 = por %p78, %p79
      %p81 = scmp.ne.s32.totalorder %s67, %s68
      %p82 = scmp.eq.s32.totalorder %s20, 1
      %p83 = por %p81, %p82
      %p85 = scmp.ne.s32.totalorder %s68, %s84
      %p86 = scmp.eq.s32.totalorder %s20, 0
      %p87 = por %p85, %p86
      %s89 = sadd.s32 %s88, 1
      %p92 = scmp.eq.s32.totalorder %s14, 1
      %p93 = scmp.ne.s32.totalorder %s88, %s90
      %p94 = scmp.eq.s32.totalorder %s14, 0
      %p95 = por %p93, %p94
      %p96 = scmp.ne.s32.totalorder %s88, %s90
      %p97 = scmp.eq.s32.totalorder %s19, 1
      %p98 = por %p96, %p97
      %p99 = scmp.ne.s32.totalorder %s90, %s91
      %p100 = scmp.eq.s32.totalorder %s19, 0
      %p101 = por %p99, %p100
      %p102 = scmp.ne.s32.totalorder %s90, %s91
      %p103 = scmp.eq.s32.totalorder %s20, 1
      %p104 = por %p102, %p103
      %p106 = scmp.ne.s32.totalorder %s91, %s105
      %p107 = scmp.eq.s32.totalorder %s20, 0
      %p108 = por %p106, %p107
      %s109 = ssub.s32 %s21, %s33
      %p110 = scmp.eq.s32.totalorder %s109, 0
      %s112 = sadd.s32 %s111, 1
      %s113 = scalar_select %p110, %s111, %s112
      %p116 = pneg %p110
      %p117 = scmp.eq.s32.totalorder %s14, 1
      %p118 = por %p116, %p117
      %p119 = scmp.ne.s32.totalorder %s111, %s114
      %p120 = scmp.eq.s32.totalorder %s14, 0
      %p121 = por %p119, %p120
      %p122 = scmp.ne.s32.totalorder %s111, %s114
      %p123 = scmp.eq.s32.totalorder %s19, 1
      %p124 = por %p122, %p123
      %p125 = scmp.ne.s32.totalorder %s114, %s115
      %p126 = scmp.eq.s32.totalorder %s19, 0
      %p127 = por %p125, %p126
      %p128 = scmp.ne.s32.totalorder %s114, %s115
      %p129 = scmp.eq.s32.totalorder %s20, 1
      %p130 = por %p128, %p129
      %p132 = scmp.ne.s32.totalorder %s115, %s131
      %p133 = scmp.eq.s32.totalorder %s20, 0
      %p134 = por %p132, %p133
      %s135 = ssub.s32 %s21, %s33
      %p136 = scmp.eq.s32.totalorder %s135, 0
      %s138 = sadd.s32 %s137, 1
      %s139 = scalar_select %p136, %s137, %s138
      %p142 = pneg %p136
      %p143 = scmp.eq.s32.totalorder %s14, 1
      %p144 = por %p142, %p143
      %p145 = scmp.ne.s32.totalorder %s137, %s140
      %p146 = scmp.eq.s32.totalorder %s14, 0
      %p147 = por %p145, %p146
      %p148 = scmp.ne.s32.totalorder %s137, %s140
      %p149 = scmp.eq.s32.totalorder %s19, 1
      %p150 = por %p148, %p149
      %p151 = scmp.ne.s32.totalorder %s140, %s141
      %p152 = scmp.eq.s32.totalorder %s19, 0
      %p153 = por %p151, %p152
      %p154 = scmp.ne.s32.totalorder %s140, %s141
      %p155 = scmp.eq.s32.totalorder %s20, 1
      %p156 = por %p154, %p155
      %p158 = scmp.ne.s32.totalorder %s141, %s157
      %p159 = scmp.eq.s32.totalorder %s20, 0
      %p160 = por %p158, %p159
      %p161 = scmp.le.s32.totalorder 1, %s14
      %p162 = scmp.lt.s32.totalorder %s14, 3
      %p163 = pnand %p161, %p162
      %p164 = pneg %p163
      // Predicated region
      $region9: #{_forward.5} parent=5 // pred_check
        _
      $region10: #{_forward.5} parent=5 // pred_check_branch
        %166 = sbr.rel (%p163) target = $region12
      $region11: #{_forward.5} parent=5 // pred_region
        %s167 = ssub.s32 %s14, 1
        // Predicated region
        $region13: #{_forward.5} parent=11 // pred_check
          %p168 = pneg %p80
        $region14: #{_forward.5} parent=11 // pred_check_branch
          %170 = sbr.rel (%p168) target = $region16
        $region15: #{_forward.5} parent=11 // pred_region
          %s171 = smul.u32 5, %s24
          %p172 = scmp.lt.s32.totalorder %s171, 4
          %s173 = scalar_select %p172, %s171, 4
          %s174 = smul.addr %s173, 4
          %s175 = scalar_lea.vmem %s1, %s174
          %s176 = smul.u32 5, %s24
        $region16: #{_forward.5} parent=11 // pred_fallthru
          _
        // Predicated region
        $region17: #{_forward.5} parent=11 // pred_check
          %p177 = pneg %p101
        $region18: #{_forward.5} parent=11 // pred_check_branch
          %179 = sbr.rel (%p177) target = $region20
        $region19: #{_forward.5} parent=11 // pred_region
          _
        $region20: #{_forward.5} parent=11 // pred_fallthru
          _
      $region12: #{_forward.5} parent=5 // pred_fallthru
        _
      %p180 = scmp.lt.s32.totalorder %s14, 2
      // Predicated region
      $region21: #{_forward.5} parent=5 // pred_check
        %p181 = pneg %p180
      $region22: #{_forward.5} parent=5 // pred_check_branch
        %183 = sbr.rel (%p181) target = $region24
      $region23: #{_forward.5} parent=5 // pred_region
        // Predicated region
        $region25: #{_forward.5} parent=23 // pred_check
          %p184 = pneg %p48
        $region26: #{_forward.5} parent=23 // pred_check_branch
          %186 = sbr.rel (%p184) target = $region28
        $region27: #{_forward.5} parent=23 // pred_region
          %s187 = smul.u32 32, %s21
          %p188 = scmp.lt.s32.totalorder %s187, 63
          %s189 = scalar_select %p188, %s187, 63
          %p190 = scmp.lt.s32.totalorder %s22, 0
          %s191 = scalar_select %p190, %s22, 0
          %s192 = sadd.s32 %s191, %s189
          %s193 = smul.addr %s192, 4
          %s194 = scalar_lea.vmem %s0, %s193
          %s195 = smul.u32 32, %s21
        $region28: #{_forward.5} parent=23 // pred_fallthru
          _
      $region24: #{_forward.5} parent=5 // pred_fallthru
        _
      %p196 = scmp.le.s32.totalorder 1, %s14
      %p197 = scmp.lt.s32.totalorder %s14, 3
      %p198 = pnand %p196, %p197
      %p199 = pneg %p198
      // Predicated region
      $region29: #{_forward.5} parent=5 // pred_check
        _
      $region30: #{_forward.5} parent=5 // pred_check_branch
        %201 = sbr.rel (%p198) target = $region32
      $region31: #{_forward.5} parent=5 // pred_region
        %s202 = ssub.s32 %s14, 1
        %s203 = smul.u32 32, %s23
        %p204 = scmp.lt.s32.totalorder %s203, 63
        %s205 = scalar_select %p204, %s203, 63
        %p206 = scmp.lt.s32.totalorder %s24, 0
        %s207 = scalar_select %p206, %s24, 0
        %s208 = sadd.s32 %s207, %s205
        %s209 = smul.addr %s208, 4
        %s210 = scalar_lea.vmem %s0, %s209
        %p211 = pneg %p54
        %p212 = pneg %p51
        %s213 = smul.u32 5, %s24
        %p214 = scmp.lt.s32.totalorder %s213, 4
        %s215 = scalar_select %p214, %s213, 4
        %s216 = smul.addr %s215, 4
        %s217 = scalar_lea.vmem %s1, %s216
        %p218 = pneg %p80
        %p219 = pneg %p77
        %p220 = pneg %p101
        %p221 = pneg %p98
        %p222 = pneg %p127
        %p223 = pneg %p124
        %s224 = smul.u32 32, %s23
        %p225 = scmp.lt.s32.totalorder %s224, 63
        %s226 = scalar_select %p225, %s224, 63
        %s227 = smul.addr %s226, 8
        %s228 = scalar_lea.vmem %s3, %s227
        %p229 = pneg %p153
        %p230 = pneg %p150
        %s231 = sand.u32 %s140, 1
        %s232 = scalar_lea.sflag [#allocation4], %s231
        %s233 = sand.u32 %s140, 1
        %s234 = smul.addr %s233, 2
        %s235 = scalar_lea.vmem [#allocation3], %s234
        %s236 = smul.u32 32, %s23
        %p237 = scmp.lt.s32.totalorder %s236, 63
        %s238 = scalar_select %p237, %s236, 63
        %p239 = scmp.lt.s32.totalorder %s24, 0
        %s240 = scalar_select %p239, %s24, 0
        %s241 = sadd.s32 %s240, %s238
        %s242 = smul.addr %s241, 4
        %s243 = scalar_lea.vmem %s0, %s242
        %s244 = smul.u32 32, %s23
        %s245 = smul.u32 5, %s24
        %p246 = scmp.lt.s32.totalorder %s245, 4
        %s247 = scalar_select %p246, %s245, 4
        %s248 = smul.addr %s247, 4
        %s249 = scalar_lea.vmem %s1, %s248
        %s250 = smul.u32 5, %s24
        %s251 = smul.u32 32, %s23
        %p252 = scmp.lt.s32.totalorder %s251, 63
        %s253 = scalar_select %p252, %s251, 63
        %s254 = smul.addr %s253, 8
        %s255 = scalar_lea.vmem %s3, %s254
        %s256 = smul.u32 32, %s23
        %p258 = scmp.eq.s32.totalorder %s24, 0
        // Predicated region
        $region33: #{_forward.5} parent=31 // pred_check
          %p259 = pneg %p258
        $region34: #{_forward.5} parent=31 // pred_check_branch
          %261 = sbr.rel (%p259) target = $region36
        $region35: #{_forward.5} parent=31 // pred_region
          %262 = vst [vmem:[#allocation2] sm:$0xff] 0.0
          %263 = vst [vmem:[#allocation2 + $0x8] sm:$0xff] 0.0
          %264 = vst [vmem:[#allocation2 + $0x10] sm:$0xff] 0.0
          %265 = vst [vmem:[#allocation2 + $0x18] sm:$0xff] 0.0
          %266 = vst [vmem:[#allocation2 + $0x20] sm:$0xff] 0.0
          %267 = vst [vmem:[#allocation2 + $0x28] sm:$0xff] 0.0
          %268 = vst [vmem:[#allocation2 + $0x30] sm:$0xff] 0.0
          %269 = vst [vmem:[#allocation2 + $0x38] sm:$0xff] 0.0
          %270 = vst [vmem:[#allocation2 + $0x40] sm:$0xff] 0.0
          %271 = vst [vmem:[#allocation2 + $0x48] sm:$0xff] 0.0
          %272 = vst [vmem:[#allocation2 + $0x50] sm:$0xff] 0.0
          %273 = vst [vmem:[#allocation2 + $0x58] sm:$0xff] 0.0
          %274 = vst [vmem:[#allocation2 + $0x60] sm:$0xff] 0.0
          %275 = vst [vmem:[#allocation2 + $0x68] sm:$0xff] 0.0
          %276 = vst [vmem:[#allocation2 + $0x70] sm:$0xff] 0.0
          %277 = vst [vmem:[#allocation2 + $0x78] sm:$0xff] 0.0
          %278 = vst [vmem:[#allocation2 + $0x80] sm:$0xff] 0.0
          %279 = vst [vmem:[#allocation2 + $0x88] sm:$0xff] 0.0
          %280 = vst [vmem:[#allocation2 + $0x90] sm:$0xff] 0.0
          %281 = vst [vmem:[#allocation2 + $0x98] sm:$0xff] 0.0
          %282 = vst [vmem:[#allocation2 + $0xa0] sm:$0xff] 0.0
          %283 = vst [vmem:[#allocation2 + $0xa8] sm:$0xff] 0.0
          %284 = vst [vmem:[#allocation2 + $0xb0] sm:$0xff] 0.0
          %285 = vst [vmem:[#allocation2 + $0xb8] sm:$0xff] 0.0
          %286 = vst [vmem:[#allocation2 + $0xc0] sm:$0xff] 0.0
          %287 = vst [vmem:[#allocation2 + $0xc8] sm:$0xff] 0.0
          %288 = vst [vmem:[#allocation2 + $0xd0] sm:$0xff] 0.0
          %289 = vst [vmem:[#allocation2 + $0xd8] sm:$0xff] 0.0
          %290 = vst [vmem:[#allocation2 + $0xe0] sm:$0xff] 0.0
          %291 = vst [vmem:[#allocation2 + $0xe8] sm:$0xff] 0.0
          %292 = vst [vmem:[#allocation2 + $0xf0] sm:$0xff] 0.0
          %293 = vst [vmem:[#allocation2 + $0xf8] sm:$0xff] 0.0
        $region36: #{_forward.5} parent=31 // pred_fallthru
          _
        %v294 = vld [vmem:[#allocation2] sm:$0xff]
        %v295 = vld [vmem:[#allocation2 + $0x8] sm:$0xff]
        %v296 = vld [vmem:[#allocation2 + $0x10] sm:$0xff]
        %v297 = vld [vmem:[#allocation2 + $0x18] sm:$0xff]
        %v298 = vld [vmem:[#allocation2 + $0x20] sm:$0xff]
        %v299 = vld [vmem:[#allocation2 + $0x28] sm:$0xff]
        %v300 = vld [vmem:[#allocation2 + $0x30] sm:$0xff]
        %v301 = vld [vmem:[#allocation2 + $0x38] sm:$0xff]
        %v302 = vld [vmem:[#allocation2 + $0x40] sm:$0xff]
        %v303 = vld [vmem:[#allocation2 + $0x48] sm:$0xff]
        %v304 = vld [vmem:[#allocation2 + $0x50] sm:$0xff]
        %v305 = vld [vmem:[#allocation2 + $0x58] sm:$0xff]
        %v306 = vld [vmem:[#allocation2 + $0x60] sm:$0xff]
        %v307 = vld [vmem:[#allocation2 + $0x68] sm:$0xff]
        %v308 = vld [vmem:[#allocation2 + $0x70] sm:$0xff]
        %v309 = vld [vmem:[#allocation2 + $0x78] sm:$0xff]
        %v310 = vld [vmem:[#allocation2 + $0x80] sm:$0xff]
        %v311 = vld [vmem:[#allocation2 + $0x88] sm:$0xff]
        %v312 = vld [vmem:[#allocation2 + $0x90] sm:$0xff]
        %v313 = vld [vmem:[#allocation2 + $0x98] sm:$0xff]
        %v314 = vld [vmem:[#allocation2 + $0xa0] sm:$0xff]
        %v315 = vld [vmem:[#allocation2 + $0xa8] sm:$0xff]
        %v316 = vld [vmem:[#allocation2 + $0xb0] sm:$0xff]
        %v317 = vld [vmem:[#allocation2 + $0xb8] sm:$0xff]
        %v318 = vld [vmem:[#allocation2 + $0xc0] sm:$0xff]
        %v319 = vld [vmem:[#allocation2 + $0xc8] sm:$0xff]
        %v320 = vld [vmem:[#allocation2 + $0xd0] sm:$0xff]
        %v321 = vld [vmem:[#allocation2 + $0xd8] sm:$0xff]
        %v322 = vld [vmem:[#allocation2 + $0xe0] sm:$0xff]
        %v323 = vld [vmem:[#allocation2 + $0xe8] sm:$0xff]
        %v324 = vld [vmem:[#allocation2 + $0xf0] sm:$0xff]
        %v325 = vld [vmem:[#allocation2 + $0xf8] sm:$0xff]
        %v326 = vld [vmem:[%s243] sm:$0xf]
        %v327 = vld [vmem:[%s243 + $0x4] sm:$0xf]
        %v328 = vld [vmem:[%s243 + $0x8] sm:$0xf]
        %v329 = vld [vmem:[%s243 + $0xc] sm:$0xf]
        %v330 = vld [vmem:[%s243 + $0x10] sm:$0xf]
        %v331 = vld [vmem:[%s243 + $0x14] sm:$0xf]
        %v332 = vld [vmem:[%s243 + $0x18] sm:$0xf]
        %v333 = vld [vmem:[%s243 + $0x1c] sm:$0xf]
        %v334 = vld [vmem:[%s243 + $0x20] sm:$0xf]
        %v335 = vld [vmem:[%s243 + $0x24] sm:$0xf]
        %v336 = vld [vmem:[%s243 + $0x28] sm:$0xf]
        %v337 = vld [vmem:[%s243 + $0x2c] sm:$0xf]
        %v338 = vld [vmem:[%s243 + $0x30] sm:$0xf]
        %v339 = vld [vmem:[%s243 + $0x34] sm:$0xf]
        %v340 = vld [vmem:[%s243 + $0x38] sm:$0xf]
        %v341 = vld [vmem:[%s243 + $0x3c] sm:$0xf]
        %v342 = vld [vmem:[%s243 + $0x40] sm:$0xf]
        %v343 = vld [vmem:[%s243 + $0x44] sm:$0xf]
        %v344 = vld [vmem:[%s243 + $0x48] sm:$0xf]
        %v345 = vld [vmem:[%s243 + $0x4c] sm:$0xf]
        %v346 = vld [vmem:[%s243 + $0x50] sm:$0xf]
        %v347 = vld [vmem:[%s243 + $0x54] sm:$0xf]
        %v348 = vld [vmem:[%s243 + $0x58] sm:$0xf]
        %v349 = vld [vmem:[%s243 + $0x5c] sm:$0xf]
        %v350 = vld [vmem:[%s243 + $0x60] sm:$0xf]
        %v351 = vld [vmem:[%s243 + $0x64] sm:$0xf]
        %v352 = vld [vmem:[%s243 + $0x68] sm:$0xf]
        %v353 = vld [vmem:[%s243 + $0x6c] sm:$0xf]
        %v354 = vld [vmem:[%s243 + $0x70] sm:$0xf]
        %v355 = vld [vmem:[%s243 + $0x74] sm:$0xf]
        %v356 = vld [vmem:[%s243 + $0x78] sm:$0xf]
        %v357 = vld [vmem:[%s243 + $0x7c] sm:$0xf]
        %v358 = vld [vmem:[%s249] sm:$0xf]
        %v359 = vld [vmem:[%s249 + $0x4] sm:$0xf]
        %v360 = vld [vmem:[%s249 + $0x8] sm:$0xf]
        %v361 = vld [vmem:[%s249 + $0xc] sm:$0xf]
        %v362 = vld [vmem:[%s249 + $0x10] sm:$0x3]
        %v395 = vunpack.c.l.b16 %v326
        %v396 = vunpack.c.l.b16 %v327
        %v397 = vunpack.c.l.b16 %v328
        %v398 = vunpack.c.l.b16 %v329
        %v399 = vunpack.c.l.b16 %v330
        %v400 = vunpack.c.l.b16 %v331
        %v401 = vunpack.c.l.b16 %v332
        %v402 = vunpack.c.l.b16 %v333
        %v403 = vunpack.c.l.b16 %v334
        %v404 = vunpack.c.l.b16 %v335
        %v405 = vunpack.c.l.b16 %v336
        %v406 = vunpack.c.l.b16 %v337
        %v407 = vunpack.c.l.b16 %v338
        %v408 = vunpack.c.l.b16 %v339
        %v409 = vunpack.c.l.b16 %v340
        %v410 = vunpack.c.l.b16 %v341
        %v411 = vunpack.c.l.b16 %v342
        %v412 = vunpack.c.l.b16 %v343
        %v413 = vunpack.c.l.b16 %v344
        %v414 = vunpack.c.l.b16 %v345
        %v415 = vunpack.c.l.b16 %v346
        %v416 = vunpack.c.l.b16 %v347
        %v417 = vunpack.c.l.b16 %v348
        %v418 = vunpack.c.l.b16 %v349
        %v419 = vunpack.c.l.b16 %v350
        %v420 = vunpack.c.l.b16 %v351
        %v421 = vunpack.c.l.b16 %v352
        %v422 = vunpack.c.l.b16 %v353
        %v423 = vunpack.c.l.b16 %v354
        %v424 = vunpack.c.l.b16 %v355
        %v425 = vunpack.c.l.b16 %v356
        %v426 = vunpack.c.l.b16 %v357
        %v427 = vpack.c.b16 %v396, %v395
        %v428 = vpack.c.b16 %v398, %v397
        %v429 = vpack.c.b16 %v400, %v399
        %v430 = vpack.c.b16 %v402, %v401
        %v431 = vpack.c.b16 %v404, %v403
        %v432 = vpack.c.b16 %v406, %v405
        %v433 = vpack.c.b16 %v408, %v407
        %v434 = vpack.c.b16 %v410, %v409
        %v435 = vpack.c.b16 %v412, %v411
        %v436 = vpack.c.b16 %v414, %v413
        %v437 = vpack.c.b16 %v416, %v415
        %v438 = vpack.c.b16 %v418, %v417
        %v439 = vpack.c.b16 %v420, %v419
        %v440 = vpack.c.b16 %v422, %v421
        %v441 = vpack.c.b16 %v424, %v423
        %v442 = vpack.c.b16 %v426, %v425
        %v448 = vunpack.c.l.b16 %v358
        %v449 = vunpack.c.l.b16 %v359
        %v450 = vunpack.c.l.b16 %v360
        %v451 = vunpack.c.l.b16 %v361
        %v452 = vunpack.c.l.b16 %v362
        %v453 = vpack.c.b16 %v449, %v448
        %v454 = vpack.c.b16 %v451, %v450
        %v455 = vpack.c.b16 %v452, %v452
        %vm458 = vcmask 293888
        %v460 = vsel %vm458, %v427, 0
        %v463 = vsel %vm458, %v428, 0
        %v466 = vsel %vm458, %v429, 0
        %v469 = vsel %vm458, %v430, 0
        %v472 = vsel %vm458, %v431, 0
        %v475 = vsel %vm458, %v432, 0
        %v478 = vsel %vm458, %v433, 0
        %v481 = vsel %vm458, %v434, 0
        %v484 = vsel %vm458, %v435, 0
        %v487 = vsel %vm458, %v436, 0
        %v490 = vsel %vm458, %v437, 0
        %v493 = vsel %vm458, %v438, 0
        %v496 = vsel %vm458, %v439, 0
        %v499 = vsel %vm458, %v440, 0
        %v502 = vsel %vm458, %v441, 0
        %v505 = vsel %vm458, %v442, 0
        %vm507 = vcmask 1041408
        %v509 = vsel %vm507, %v455, 0
        %511 = vmatprep.subr.bf16.mxu0 0
        %512 = vmatpush1.bf16.msra.mxu0 %v453
        %513 = vmatprep.subr.bf16.mxu0 0
        %514 = vmatpush1.bf16.msra.mxu0 %v454
        %515 = vmatprep.subr.bf16.mxu0 0
        %516 = vmatpush1.bf16.msra.mxu0 %v509
        %517 = vmatprep.subr.bf16.mxu0 0
        %518 = vmatpush1.bf16.msra.mxu0 0
        %519 = vmatprep.subr.bf16.mxu0 0
        %520 = vmatpush1.bf16.msra.mxu0 0
        %521 = vmatprep.subr.bf16.mxu0 0
        %522 = vmatpush1.bf16.msra.mxu0 0
        %523 = vmatprep.subr.bf16.mxu0 0
        %524 = vmatpush1.bf16.msra.mxu0 0
        %525 = vmatprep.subr.bf16.mxu0 0
        %526 = vmatpush1.bf16.msra.mxu0 0
        %527 = vmatprep.subr.bf16.mxu0 0
        %528 = vmatpush1.bf16.msra.mxu0 0
        %529 = vmatprep.subr.bf16.mxu0 0
        %530 = vmatpush1.bf16.msra.mxu0 0
        %531 = vmatprep.subr.bf16.mxu0 0
        %532 = vmatpush1.bf16.msra.mxu0 0
        %533 = vmatprep.subr.bf16.mxu0 0
        %534 = vmatpush1.bf16.msra.mxu0 0
        %535 = vmatprep.subr.bf16.mxu0 0
        %536 = vmatpush1.bf16.msra.mxu0 0
        %537 = vmatprep.subr.bf16.mxu0 0
        %538 = vmatpush1.bf16.msra.mxu0 0
        %539 = vmatprep.subr.bf16.mxu0 0
        %540 = vmatpush1.bf16.msra.mxu0 0
        %541 = vmatprep.subr.bf16.mxu0 0
        %542 = vmatpush1.bf16.msra.mxu0 0
        %543 = vmatprep.mubr.bf16.mxu0 0
        %544 = vmatmul.mubr.bf16.gmra.mrb[0].mxu0 %v460
        %v545 = vpop.f32.mrb[0].mxu0
        %v546 = vadd.f32 0.0, %v545
        %v547 = vpop.f32.mrb[0].mxu0
        %v548 = vpop.f32.mrb[0].mxu0
        %v549 = vadd.f32 0.0, %v548
        %v550 = vpop.f32.mrb[0].mxu0
        %551 = vmatprep.mubr.bf16.mxu0 0
        %552 = vmatmul.mubr.bf16.gmra.mrb[0].mxu0 %v463
        %v553 = vpop.f32.mrb[0].mxu0
        %v554 = vadd.f32 0.0, %v553
        %v555 = vpop.f32.mrb[0].mxu0
        %v556 = vpop.f32.mrb[0].mxu0
        %v557 = vadd.f32 0.0, %v556
        %v558 = vpop.f32.mrb[0].mxu0
        %559 = vmatprep.mubr.bf16.mxu0 0
        %560 = vmatmul.mubr.bf16.gmra.mrb[0].mxu0 %v466
        %v561 = vpop.f32.mrb[0].mxu0
        %v562 = vadd.f32 0.0, %v561
        %v563 = vpop.f32.mrb[0].mxu0
        %v564 = vpop.f32.mrb[0].mxu0
        %v565 = vadd.f32 0.0, %v564
        %v566 = vpop.f32.mrb[0].mxu0
        %567 = vmatprep.mubr.bf16.mxu0 0
        %568 = vmatmul.mubr.bf16.gmra.mrb[0].mxu0 %v469
        %v569 = vpop.f32.mrb[0].mxu0
        %v570 = vadd.f32 0.0, %v569
        %v571 = vpop.f32.mrb[0].mxu0
        %v572 = vpop.f32.mrb[0].mxu0
        %v573 = vadd.f32 0.0, %v572
        %v574 = vpop.f32.mrb[0].mxu0
        %575 = vmatprep.mubr.bf16.mxu0 0
        %576 = vmatmul.mubr.bf16.gmra.mrb[0].mxu0 %v472
        %v577 = vpop.f32.mrb[0].mxu0
        %v578 = vadd.f32 0.0, %v577
        %v579 = vpop.f32.mrb[0].mxu0
        %v580 = vpop.f32.mrb[0].mxu0
        %v581 = vadd.f32 0.0, %v580
        %v582 = vpop.f32.mrb[0].mxu0
        %583 = vmatprep.mubr.bf16.mxu0 0
        %584 = vmatmul.mubr.bf16.gmra.mrb[0].mxu0 %v475
        %v585 = vpop.f32.mrb[0].mxu0
        %v586 = vadd.f32 0.0, %v585
        %v587 = vpop.f32.mrb[0].mxu0
        %v588 = vpop.f32.mrb[0].mxu0
        %v589 = vadd.f32 0.0, %v588
        %v590 = vpop.f32.mrb[0].mxu0
        %591 = vmatprep.mubr.bf16.mxu0 0
        %592 = vmatmul.mubr.bf16.gmra.mrb[0].mxu0 %v478
        %v593 = vpop.f32.mrb[0].mxu0
        %v594 = vadd.f32 0.0, %v593
        %v595 = vpop.f32.mrb[0].mxu0
        %v596 = vpop.f32.mrb[0].mxu0
        %v597 = vadd.f32 0.0, %v596
        %v598 = vpop.f32.mrb[0].mxu0
        %599 = vmatprep.mubr.bf16.mxu0 0
        %600 = vmatmul.mubr.bf16.gmra.mrb[0].mxu0 %v481
        %v601 = vpop.f32.mrb[0].mxu0
        %v602 = vadd.f32 0.0, %v601
        %v603 = vpop.f32.mrb[0].mxu0
        %v604 = vpop.f32.mrb[0].mxu0
        %v605 = vadd.f32 0.0, %v604
        %v606 = vpop.f32.mrb[0].mxu0
        %607 = vmatprep.mubr.bf16.mxu0 0
        %608 = vmatmul.mubr.bf16.gmra.mrb[0].mxu0 %v484
        %v609 = vpop.f32.mrb[0].mxu0
        %v610 = vadd.f32 0.0, %v609
        %v611 = vpop.f32.mrb[0].mxu0
        %v612 = vpop.f32.mrb[0].mxu0
        %v613 = vadd.f32 0.0, %v612
        %v614 = vpop.f32.mrb[0].mxu0
        %615 = vmatprep.mubr.bf16.mxu0 0
        %616 = vmatmul.mubr.bf16.gmra.mrb[0].mxu0 %v487
        %v617 = vpop.f32.mrb[0].mxu0
        %v618 = vadd.f32 0.0, %v617
        %v619 = vpop.f32.mrb[0].mxu0
        %v620 = vpop.f32.mrb[0].mxu0
        %v621 = vadd.f32 0.0, %v620
        %v622 = vpop.f32.mrb[0].mxu0
        %623 = vmatprep.mubr.bf16.mxu0 0
        %624 = vmatmul.mubr.bf16.gmra.mrb[0].mxu0 %v490
        %v625 = vpop.f32.mrb[0].mxu0
        %v626 = vadd.f32 0.0, %v625
        %v627 = vpop.f32.mrb[0].mxu0
        %v628 = vpop.f32.mrb[0].mxu0
        %v629 = vadd.f32 0.0, %v628
        %v630 = vpop.f32.mrb[0].mxu0
        %631 = vmatprep.mubr.bf16.mxu0 0
        %632 = vmatmul.mubr.bf16.gmra.mrb[0].mxu0 %v493
        %v633 = vpop.f32.mrb[0].mxu0
        %v634 = vadd.f32 0.0, %v633
        %v635 = vpop.f32.mrb[0].mxu0
        %v636 = vpop.f32.mrb[0].mxu0
        %v637 = vadd.f32 0.0, %v636
        %v638 = vpop.f32.mrb[0].mxu0
        %639 = vmatprep.mubr.bf16.mxu0 0
        %640 = vmatmul.mubr.bf16.gmra.mrb[0].mxu0 %v496
        %v641 = vpop.f32.mrb[0].mxu0
        %v642 = vadd.f32 0.0, %v641
        %v643 = vpop.f32.mrb[0].mxu0
        %v644 = vpop.f32.mrb[0].mxu0
        %v645 = vadd.f32 0.0, %v644
        %v646 = vpop.f32.mrb[0].mxu0
        %647 = vmatprep.mubr.bf16.mxu0 0
        %648 = vmatmul.mubr.bf16.gmra.mrb[0].mxu0 %v499
        %v649 = vpop.f32.mrb[0].mxu0
        %v650 = vadd.f32 0.0, %v649
        %v651 = vpop.f32.mrb[0].mxu0
        %v652 = vpop.f32.mrb[0].mxu0
        %v653 = vadd.f32 0.0, %v652
        %v654 = vpop.f32.mrb[0].mxu0
        %655 = vmatprep.mubr.bf16.mxu0 0
        %656 = vmatmul.mubr.bf16.gmra.mrb[0].mxu0 %v502
        %v657 = vpop.f32.mrb[0].mxu0
        %v658 = vadd.f32 0.0, %v657
        %v659 = vpop.f32.mrb[0].mxu0
        %v660 = vpop.f32.mrb[0].mxu0
        %v661 = vadd.f32 0.0, %v660
        %v662 = vpop.f32.mrb[0].mxu0
        %663 = vmatprep.mubr.bf16.mxu0 0
        %664 = vmatmul.mubr.bf16.gmra.mrb[0].mxu0 %v505
        %v665 = vpop.f32.mrb[0].mxu0
        %v666 = vadd.f32 0.0, %v665
        %v667 = vpop.f32.mrb[0].mxu0
        %v668 = vpop.f32.mrb[0].mxu0
        %v669 = vadd.f32 0.0, %v668
        %v670 = vpop.f32.mrb[0].mxu0
        %671 = vdwg.mxu0
        %v672 = vadd.f32 %v294, %v546
        %v673 = vadd.f32 %v295, %v549
        %v674 = vadd.f32 %v296, %v554
        %v675 = vadd.f32 %v297, %v557
        %v676 = vadd.f32 %v298, %v562
        %v677 = vadd.f32 %v299, %v565
        %v678 = vadd.f32 %v300, %v570
        %v679 = vadd.f32 %v301, %v573
        %v680 = vadd.f32 %v302, %v578
        %v681 = vadd.f32 %v303, %v581
        %v682 = vadd.f32 %v304, %v586
        %v683 = vadd.f32 %v305, %v589
        %v684 = vadd.f32 %v306, %v594
        %v685 = vadd.f32 %v307, %v597
        %v686 = vadd.f32 %v308, %v602
        %v687 = vadd.f32 %v309, %v605
        %v688 = vadd.f32 %v310, %v610
        %v689 = vadd.f32 %v311, %v613
        %v690 = vadd.f32 %v312, %v618
        %v691 = vadd.f32 %v313, %v621
        %v692 = vadd.f32 %v314, %v626
        %v693 = vadd.f32 %v315, %v629
        %v694 = vadd.f32 %v316, %v634
        %v695 = vadd.f32 %v317, %v637
        %v696 = vadd.f32 %v318, %v642
        %v697 = vadd.f32 %v319, %v645
        %v698 = vadd.f32 %v320, %v650
        %v699 = vadd.f32 %v321, %v653
        %v700 = vadd.f32 %v322, %v658
        %v701 = vadd.f32 %v323, %v661
        %v702 = vadd.f32 %v324, %v666
        %v703 = vadd.f32 %v325, %v669
        %704 = vst [vmem:[#allocation2] sm:$0xff] %v672
        %705 = vst [vmem:[#allocation2 + $0x8] sm:$0xff] %v673
        %706 = vst [vmem:[#allocation2 + $0x10] sm:$0xff] %v674
        %707 = vst [vmem:[#allocation2 + $0x18] sm:$0xff] %v675
        %708 = vst [vmem:[#allocation2 + $0x20] sm:$0xff] %v676
        %709 = vst [vmem:[#allocation2 + $0x28] sm:$0xff] %v677
        %710 = vst [vmem:[#allocation2 + $0x30] sm:$0xff] %v678
        %711 = vst [vmem:[#allocation2 + $0x38] sm:$0xff] %v679
        %712 = vst [vmem:[#allocation2 + $0x40] sm:$0xff] %v680
        %713 = vst [vmem:[#allocation2 + $0x48] sm:$0xff] %v681
        %714 = vst [vmem:[#allocation2 + $0x50] sm:$0xff] %v682
        %715 = vst [vmem:[#allocation2 + $0x58] sm:$0xff] %v683
        %716 = vst [vmem:[#allocation2 + $0x60] sm:$0xff] %v684
        %717 = vst [vmem:[#allocation2 + $0x68] sm:$0xff] %v685
        %718 = vst [vmem:[#allocation2 + $0x70] sm:$0xff] %v686
        %719 = vst [vmem:[#allocation2 + $0x78] sm:$0xff] %v687
        %720 = vst [vmem:[#allocation2 + $0x80] sm:$0xff] %v688
        %721 = vst [vmem:[#allocation2 + $0x88] sm:$0xff] %v689
        %722 = vst [vmem:[#allocation2 + $0x90] sm:$0xff] %v690
        %723 = vst [vmem:[#allocation2 + $0x98] sm:$0xff] %v691
        %724 = vst [vmem:[#allocation2 + $0xa0] sm:$0xff] %v692
        %725 = vst [vmem:[#allocation2 + $0xa8] sm:$0xff] %v693
        %726 = vst [vmem:[#allocation2 + $0xb0] sm:$0xff] %v694
        %727 = vst [vmem:[#allocation2 + $0xb8] sm:$0xff] %v695
        %728 = vst [vmem:[#allocation2 + $0xc0] sm:$0xff] %v696
        %729 = vst [vmem:[#allocation2 + $0xc8] sm:$0xff] %v697
        %730 = vst [vmem:[#allocation2 + $0xd0] sm:$0xff] %v698
        %731 = vst [vmem:[#allocation2 + $0xd8] sm:$0xff] %v699
        %732 = vst [vmem:[#allocation2 + $0xe0] sm:$0xff] %v700
        %733 = vst [vmem:[#allocation2 + $0xe8] sm:$0xff] %v701
        %734 = vst [vmem:[#allocation2 + $0xf0] sm:$0xff] %v702
        %735 = vst [vmem:[#allocation2 + $0xf8] sm:$0xff] %v703
        // Predicated region
        $region37: #{_forward.5} parent=31 // pred_check
          %p736 = pneg %p258
        $region38: #{_forward.5} parent=31 // pred_check_branch
          %738 = sbr.rel (%p736) target = $region40
        $region39: #{_forward.5} parent=31 // pred_region
          %v739 = vld [vmem:[#allocation2] sm:$0xff]
          %v740 = vld [vmem:[#allocation2 + $0x8] sm:$0xff]
          %v741 = vld [vmem:[#allocation2 + $0x10] sm:$0xff]
          %v742 = vld [vmem:[#allocation2 + $0x18] sm:$0xff]
          %v743 = vld [vmem:[#allocation2 + $0x20] sm:$0xff]
          %v744 = vld [vmem:[#allocation2 + $0x28] sm:$0xff]
          %v745 = vld [vmem:[#allocation2 + $0x30] sm:$0xff]
          %v746 = vld [vmem:[#allocation2 + $0x38] sm:$0xff]
          %v747 = vld [vmem:[#allocation2 + $0x40] sm:$0xff]
          %v748 = vld [vmem:[#allocation2 + $0x48] sm:$0xff]
          %v749 = vld [vmem:[#allocation2 + $0x50] sm:$0xff]
          %v750 = vld [vmem:[#allocation2 + $0x58] sm:$0xff]
          %v751 = vld [vmem:[#allocation2 + $0x60] sm:$0xff]
          %v752 = vld [vmem:[#allocation2 + $0x68] sm:$0xff]
          %v753 = vld [vmem:[#allocation2 + $0x70] sm:$0xff]
          %v754 = vld [vmem:[#allocation2 + $0x78] sm:$0xff]
          %v755 = vld [vmem:[#allocation2 + $0x80] sm:$0xff]
          %v756 = vld [vmem:[#allocation2 + $0x88] sm:$0xff]
          %v757 = vld [vmem:[#allocation2 + $0x90] sm:$0xff]
          %v758 = vld [vmem:[#allocation2 + $0x98] sm:$0xff]
          %v759 = vld [vmem:[#allocation2 + $0xa0] sm:$0xff]
          %v760 = vld [vmem:[#allocation2 + $0xa8] sm:$0xff]
          %v761 = vld [vmem:[#allocation2 + $0xb0] sm:$0xff]
          %v762 = vld [vmem:[#allocation2 + $0xb8] sm:$0xff]
          %v763 = vld [vmem:[#allocation2 + $0xc0] sm:$0xff]
          %v764 = vld [vmem:[#allocation2 + $0xc8] sm:$0xff]
          %v765 = vld [vmem:[#allocation2 + $0xd0] sm:$0xff]
          %v766 = vld [vmem:[#allocation2 + $0xd8] sm:$0xff]
          %v767 = vld [vmem:[#allocation2 + $0xe0] sm:$0xff]
          %v768 = vld [vmem:[#allocation2 + $0xe8] sm:$0xff]
          %v769 = vld [vmem:[#allocation2 + $0xf0] sm:$0xff]
          %v770 = vld [vmem:[#allocation2 + $0xf8] sm:$0xff]
          %v771 = vld [vmem:[%s2] sm:$0x1]
          %v773 = vlaneseq
          %v774 = vshrl.u32 %v773, 7
          %v775 = vsub.s32 0, %v774
          %v776 = vrot.slane %v771, %v775
          %v778 = vadd.f32 %v739, %v776
          %v779 = vadd.f32 %v740, %v776
          %v780 = vadd.f32 %v741, %v776
          %v781 = vadd.f32 %v742, %v776
          %v782 = vadd.f32 %v743, %v776
          %v783 = vadd.f32 %v744, %v776
          %v784 = vadd.f32 %v745, %v776
          %v785 = vadd.f32 %v746, %v776
          %v786 = vadd.f32 %v747, %v776
          %v787 = vadd.f32 %v748, %v776
          %v788 = vadd.f32 %v749, %v776
          %v789 = vadd.f32 %v750, %v776
          %v790 = vadd.f32 %v751, %v776
          %v791 = vadd.f32 %v752, %v776
          %v792 = vadd.f32 %v753, %v776
          %v793 = vadd.f32 %v754, %v776
          %v794 = vadd.f32 %v755, %v776
          %v795 = vadd.f32 %v756, %v776
          %v796 = vadd.f32 %v757, %v776
          %v797 = vadd.f32 %v758, %v776
          %v798 = vadd.f32 %v759, %v776
          %v799 = vadd.f32 %v760, %v776
          %v800 = vadd.f32 %v761, %v776
          %v801 = vadd.f32 %v762, %v776
          %v802 = vadd.f32 %v763, %v776
          %v803 = vadd.f32 %v764, %v776
          %v804 = vadd.f32 %v765, %v776
          %v805 = vadd.f32 %v766, %v776
          %v806 = vadd.f32 %v767, %v776
          %v807 = vadd.f32 %v768, %v776
          %v808 = vadd.f32 %v769, %v776
          %v809 = vadd.f32 %v770, %v776
          %810 = vst [vmem:[%s255] sm:$0xff] %v778
          %811 = vst [vmem:[%s255 + $0x8] sm:$0xff] %v779
          %812 = vst [vmem:[%s255 + $0x10] sm:$0xff] %v780
          %813 = vst [vmem:[%s255 + $0x18] sm:$0xff] %v781
          %814 = vst [vmem:[%s255 + $0x20] sm:$0xff] %v782
          %815 = vst [vmem:[%s255 + $0x28] sm:$0xff] %v783
          %816 = vst [vmem:[%s255 + $0x30] sm:$0xff] %v784
          %817 = vst [vmem:[%s255 + $0x38] sm:$0xff] %v785
          %818 = vst [vmem:[%s255 + $0x40] sm:$0xff] %v786
          %819 = vst [vmem:[%s255 + $0x48] sm:$0xff] %v787
          %820 = vst [vmem:[%s255 + $0x50] sm:$0xff] %v788
          %821 = vst [vmem:[%s255 + $0x58] sm:$0xff] %v789
          %822 = vst [vmem:[%s255 + $0x60] sm:$0xff] %v790
          %823 = vst [vmem:[%s255 + $0x68] sm:$0xff] %v791
          %824 = vst [vmem:[%s255 + $0x70] sm:$0xff] %v792
          %825 = vst [vmem:[%s255 + $0x78] sm:$0xff] %v793
          %826 = vst [vmem:[%s255 + $0x80] sm:$0xff] %v794
          %827 = vst [vmem:[%s255 + $0x88] sm:$0xff] %v795
          %828 = vst [vmem:[%s255 + $0x90] sm:$0xff] %v796
          %829 = vst [vmem:[%s255 + $0x98] sm:$0xff] %v797
          %830 = vst [vmem:[%s255 + $0xa0] sm:$0xff] %v798
          %831 = vst [vmem:[%s255 + $0xa8] sm:$0xff] %v799
          %832 = vst [vmem:[%s255 + $0xb0] sm:$0xff] %v800
          %833 = vst [vmem:[%s255 + $0xb8] sm:$0xff] %v801
          %834 = vst [vmem:[%s255 + $0xc0] sm:$0xff] %v802
          %835 = vst [vmem:[%s255 + $0xc8] sm:$0xff] %v803
          %836 = vst [vmem:[%s255 + $0xd0] sm:$0xff] %v804
          %837 = vst [vmem:[%s255 + $0xd8] sm:$0xff] %v805
          %838 = vst [vmem:[%s255 + $0xe0] sm:$0xff] %v806
          %839 = vst [vmem:[%s255 + $0xe8] sm:$0xff] %v807
          %840 = vst [vmem:[%s255 + $0xf0] sm:$0xff] %v808
          %841 = vst [vmem:[%s255 + $0xf8] sm:$0xff] %v809
          %v842 = vadd.f32 %v778, %v779
          %v843 = vadd.f32 %v842, %v780
          %v844 = vadd.f32 %v843, %v781
          %v845 = vadd.f32 %v844, %v782
          %v846 = vadd.f32 %v845, %v783
          %v847 = vadd.f32 %v846, %v784
          %v848 = vadd.f32 %v847, %v785
          %v849 = vadd.f32 %v848, %v786
          %v850 = vadd.f32 %v849, %v787
          %v851 = vadd.f32 %v850, %v788
          %v852 = vadd.f32 %v851, %v789
          %v853 = vadd.f32 %v852, %v790
          %v854 = vadd.f32 %v853, %v791
          %v855 = vadd.f32 %v854, %v792
          %v856 = vadd.f32 %v855, %v793
          %v857 = vadd.f32 %v856, %v794
          %v858 = vadd.f32 %v857, %v795
          %v859 = vadd.f32 %v858, %v796
          %v860 = vadd.f32 %v859, %v797
          %v861 = vadd.f32 %v860, %v798
          %v862 = vadd.f32 %v861, %v799
          %v863 = vadd.f32 %v862, %v800
          %v864 = vadd.f32 %v863, %v801
          %v865 = vadd.f32 %v864, %v802
          %v866 = vadd.f32 %v865, %v803
          %v867 = vadd.f32 %v866, %v804
          %v868 = vadd.f32 %v867, %v805
          %v869 = vadd.f32 %v868, %v806
          %v870 = vadd.f32 %v869, %v807
          %v871 = vadd.f32 %v870, %v808
          %v872 = vadd.f32 %v871, %v809
          %v873 = vrot.slane %v872, 4
          %v874 = vadd.f32 %v872, %v873
          %v875 = vrot.slane %v874, 2
          %v876 = vadd.f32 %v874, %v875
          %v877 = vrot.slane %v876, 1
          %v878 = vadd.f32 %v876, %v877
          %v879 = vmul.f32 %v778, %v778
          %v880 = vmul.f32 %v779, %v779
          %v881 = vmul.f32 %v780, %v780
          %v882 = vmul.f32 %v781, %v781
          %v883 = vmul.f32 %v782, %v782
          %v884 = vmul.f32 %v783, %v783
          %v885 = vmul.f32 %v784, %v784
          %v886 = vmul.f32 %v785, %v785
          %v887 = vmul.f32 %v786, %v786
          %v888 = vmul.f32 %v787, %v787
          %v889 = vmul.f32 %v788, %v788
          %v890 = vmul.f32 %v789, %v789
          %v891 = vmul.f32 %v790, %v790
          %v892 = vmul.f32 %v791, %v791
          %v893 = vmul.f32 %v792, %v792
          %v894 = vmul.f32 %v793, %v793
          %v895 = vmul.f32 %v794, %v794
          %v896 = vmul.f32 %v795, %v795
          %v897 = vmul.f32 %v796, %v796
          %v898 = vmul.f32 %v797, %v797
          %v899 = vmul.f32 %v798, %v798
          %v900 = vmul.f32 %v799, %v799
          %v901 = vmul.f32 %v800, %v800
          %v902 = vmul.f32 %v801, %v801
          %v903 = vmul.f32 %v802, %v802
          %v904 = vmul.f32 %v803, %v803
          %v905 = vmul.f32 %v804, %v804
          %v906 = vmul.f32 %v805, %v805
          %v907 = vmul.f32 %v806, %v806
          %v908 = vmul.f32 %v807, %v807
          %v909 = vmul.f32 %v808, %v808
          %v910 = vmul.f32 %v809, %v809
          %v911 = vadd.f32 %v879, %v880
          %v912 = vadd.f32 %v911, %v881
          %v913 = vadd.f32 %v912, %v882
          %v914 = vadd.f32 %v913, %v883
          %v915 = vadd.f32 %v914, %v884
          %v916 = vadd.f32 %v915, %v885
          %v917 = vadd.f32 %v916, %v886
          %v918 = vadd.f32 %v917, %v887
          %v919 = vadd.f32 %v918, %v888
          %v920 = vadd.f32 %v919, %v889
          %v921 = vadd.f32 %v920, %v890
          %v922 = vadd.f32 %v921, %v891
          %v923 = vadd.f32 %v922, %v892
          %v924 = vadd.f32 %v923, %v893
          %v925 = vadd.f32 %v924, %v894
          %v926 = vadd.f32 %v925, %v895
          %v927 = vadd.f32 %v926, %v896
          %v928 = vadd.f32 %v927, %v897
          %v929 = vadd.f32 %v928, %v898
          %v930 = vadd.f32 %v929, %v899
          %v931 = vadd.f32 %v930, %v900
          %v932 = vadd.f32 %v931, %v901
          %v933 = vadd.f32 %v932, %v902
          %v934 = vadd.f32 %v933, %v903
          %v935 = vadd.f32 %v934, %v904
          %v936 = vadd.f32 %v935, %v905
          %v937 = vadd.f32 %v936, %v906
          %v938 = vadd.f32 %v937, %v907
          %v939 = vadd.f32 %v938, %v908
          %v940 = vadd.f32 %v939, %v909
          %v941 = vadd.f32 %v940, %v910
          %v942 = vrot.slane %v941, 4
          %v943 = vadd.f32 %v941, %v942
          %v944 = vrot.slane %v943, 2
          %v945 = vadd.f32 %v943, %v944
          %v946 = vrot.slane %v945, 1
          %v947 = vadd.f32 %v945, %v946
          %v948 = vlaneseq
          %v949 = vshrl.u32 %v948, 7
          %vm950 = vcmp.eq.s32.totalorder %v949, 0
          %v951 = vsel %vm950, %v878, %v947
          %952 = vst [vmem:[%s235] sm:$0x3] %v951
        $region40: #{_forward.5} parent=31 // pred_fallthru
          _
        %s953 = smul.u32 32, %s23
        %p954 = scmp.lt.s32.totalorder %s953, 63
        %s955 = scalar_select %p954, %s953, 63
        %s956 = smul.addr %s955, 8
        %s957 = scalar_lea.vmem %s3, %s956
        %s958 = sand.u32 %s140, 1
        %s959 = scalar_lea.sflag [#allocation4], %s958
        %s960 = sand.u32 %s140, 1
        %s961 = smul.addr %s960, 2
        %s962 = scalar_lea.vmem [#allocation3], %s961
        // Predicated region
        $region41: #{_forward.5} parent=31 // pred_check
          %p963 = pneg %p124
        $region42: #{_forward.5} parent=31 // pred_check_branch
          %965 = sbr.rel (%p963) target = $region44
        $region43: #{_forward.5} parent=31 // pred_region
          %s966 = smul.u32 32, %s23
        $region44: #{_forward.5} parent=31 // pred_fallthru
          _
        // Predicated region
        $region45: #{_forward.5} parent=31 // pred_check
          %p967 = pneg %p150
        $region46: #{_forward.5} parent=31 // pred_check_branch
          %969 = sbr.rel (%p967) target = $region48
        $region47: #{_forward.5} parent=31 // pred_region
          %s971 = ssub.s32 32, 32
          %972 = vsyncadd %s959, %s971
          %s973 = smul.addr %s23, 32
          %s974 = scalar_lea.hbm %s4, %s973
          %s976 = sshll.u32 %s962, 4
          %s977 = int_to_ptr.vmem [resolvable:$true] %s976
          %979 = dma.vmem_to_hbm [thread:$0]  %s977, 32, %s974, %s959
        $region48: #{_forward.5} parent=31 // pred_fallthru
          _
      $region32: #{_forward.5} parent=5 // pred_fallthru
        _
      %p980 = scmp.le.s32.totalorder 2, %s14
      // Predicated region
      $region49: #{_forward.5} parent=5 // pred_check
        %p981 = pneg %p980
      $region50: #{_forward.5} parent=5 // pred_check_branch
        %983 = sbr.rel (%p981) target = $region52
      $region51: #{_forward.5} parent=5 // pred_region
        %s984 = ssub.s32 %s14, 2
        // Predicated region
        $region53: #{_forward.5} parent=51 // pred_check
          %p985 = pneg %p130
        $region54: #{_forward.5} parent=51 // pred_check_branch
          %987 = sbr.rel (%p985) target = $region56
        $region55: #{_forward.5} parent=51 // pred_region
          %s988 = smul.u32 32, %s25
          %p989 = scmp.lt.s32.totalorder %s988, 63
          %s990 = scalar_select %p989, %s988, 63
          %s991 = smul.addr %s990, 8
          %s992 = scalar_lea.vmem %s3, %s991
        $region56: #{_forward.5} parent=51 // pred_fallthru
          _
        // Predicated region
        $region57: #{_forward.5} parent=51 // pred_check
          %p993 = pneg %p156
        $region58: #{_forward.5} parent=51 // pred_check_branch
          %995 = sbr.rel (%p993) target = $region60
        $region59: #{_forward.5} parent=51 // pred_region
          %s996 = sand.u32 %s141, 1
          %s997 = scalar_lea.sflag [#allocation4], %s996
          %s998 = sand.u32 %s141, 1
          %s999 = smul.addr %s998, 2
          %s1000 = scalar_lea.vmem [#allocation3], %s999
          %1001 = dma.done %s997, 32
        $region60: #{_forward.5} parent=51 // pred_fallthru
          _
      $region52: #{_forward.5} parent=5 // pred_fallthru
        _
    $region6: #{_forward.5} parent=1 // loop_footer
      %s18 = sadd.s32 1, %s14
    $region7: #{_forward.5} parent=1 // loop_footer_branch
      %13 = sbr.rel target = $region3
    $region8: #{_forward.5} parent=1 // loop_exit
      _
    %1002 = vsyncpa [#allocation4], 1
    %s1003 = scalar_lea.sflag [#allocation4], 1
    %1004 = vsyncpa %s1003, 1

// kernel: mul.0
$region0: #{mul.0}
  #allocation0 [shape = 's32[1]{0}', space=sflag, size = 0x4, scoped, tag = 'scoped memory for mul.0']
  %s0 = inlined_call_operand.vmem [shape: f32[512,36], index: 0, kind: input, shape index: {}]
  %s1 = inlined_call_operand.vmem [shape: f32[512,36], index: 1, kind: input, shape index: {}]
  %s2 = inlined_call_operand.vmem [shape: f32[512,36], index: 2, kind: output, shape index: {}]
  %v3 = vld [vmem:[%s0] sm:$0xff]
  %v4 = vld [vmem:[%s1] sm:$0xff]
  %5 = xla_tuple %v3, %v4
  %6 = xla_tuple %5
  %v7 = vmul.f32 %v3, %v4
  %8 = xla_tuple %v7
  %9 = vst [vmem:[%s2] sm:$0xff] %v7
  %s10 = scalar_lea.vmem %s0, 32
  %v11 = vld [vmem:[%s10] sm:$0xff]
  %s12 = scalar_lea.vmem %s1, 32
  %v13 = vld [vmem:[%s12] sm:$0xff]
  %14 = xla_tuple %v11, %v13
  %15 = xla_tuple %14
  %v16 = vmul.f32 %v11, %v13
  %17 = xla_tuple %v16
  %s18 = scalar_lea.vmem %s2, 32
  %19 = vst [vmem:[%s18] sm:$0xff] %v16
  %s20 = scalar_lea.vmem %s0, 64
  %v21 = vld [vmem:[%s20] sm:$0xff]
  %s22 = scalar_lea.vmem %s1, 64
  %v23 = vld [vmem:[%s22] sm:$0xff]
  %24 = xla_tuple %v21, %v23
  %25 = xla_tuple %24
  %v26 = vmul.f32 %v21, %v23
  %27 = xla_tuple %v26
  %s28 = scalar_lea.vmem %s2, 64
  %29 = vst [vmem:[%s28] sm:$0xff] %v26
  %s30 = scalar_lea.vmem %s0, 96
  %v31 = vld [vmem:[%s30] sm:$0xff]
  %s32 = scalar_lea.vmem %s1, 96
  %v33 = vld [vmem:[%s32] sm:$0xff]
  %34 = xla_tuple %v31, %v33
  %35 = xla_tuple %34
  %v36 = vmul.f32 %v31, %v33
  %37 = xla_tuple %v36
  %s38 = scalar_lea.vmem %s2, 96
  %39 = vst [vmem:[%s38] sm:$0xff] %v36
  %s40 = scalar_lea.vmem %s0, 128
  %v41 = vld [vmem:[%s40] sm:$0xff]
  %s42 = scalar_lea.vmem %s1, 128
  %v43 = vld [vmem:[%s42] sm:$0xff]
  %44 = xla_tuple %v41, %v43
  %45 = xla_tuple %44
  %v46 = vmul.f32 %v41, %v43
  %47 = xla_tuple %v46
  %s48 = scalar_lea.vmem %s2, 128
  %49 = vst [vmem:[%s48] sm:$0xff] %v46
  %s50 = scalar_lea.vmem %s0, 8
  %v51 = vld [vmem:[%s50] sm:$0xff]
  %s52 = scalar_lea.vmem %s1, 8
  %v53 = vld [vmem:[%s52] sm:$0xff]
  %54 = xla_tuple %v51, %v53
  %55 = xla_tuple %54
  %v56 = vmul.f32 %v51, %v53
  %57 = xla_tuple %v56
  %s58 = scalar_lea.vmem %s2, 8
  %59 = vst [vmem:[%s58] sm:$0xff] %v56
  %s60 = scalar_lea.vmem %s0, 40
  %v61 = vld [vmem:[%s60] sm:$0xff]
  %s62 = scalar_lea.vmem %s1, 40
  %v63 = vld [vmem:[%s62] sm:$0xff]
  %64 = xla_tuple %v61, %v63
  %65 = xla_tuple %64
  %v66 = vmul.f32 %v61, %v63
  %67 = xla_tuple %v66
  %s68 = scalar_lea.vmem %s2, 40
  %69 = vst [vmem:[%s68] sm:$0xff] %v66
  %s70 = scalar_lea.vmem %s0, 72
  %v71 = vld [vmem:[%s70] sm:$0xff]
  %s72 = scalar_lea.vmem %s1, 72
  %v73 = vld [vmem:[%s72] sm:$0xff]
  %74 = xla_tuple %v71, %v73
  %75 = xla_tuple %74
  %v76 = vmul.f32 %v71, %v73
  %77 = xla_tuple %v76
  %s78 = scalar_lea.vmem %s2, 72
  %79 = vst [vmem:[%s78] sm:$0xff] %v76
  %s80 = scalar_lea.vmem %s0, 104
  %v81 = vld [vmem:[%s80] sm:$0xff]
  %s82 = scalar_lea.vmem %s1, 104
  %v83 = vld [vmem:[%s82] sm:$0xff]
  %84 = xla_tuple %v81, %v83
  %85 = xla_tuple %84
  %v86 = vmul.f32 %v81, %v83
  %87 = xla_tuple %v86
  %s88 = scalar_lea.vmem %s2, 104
  %89 = vst [vmem:[%s88] sm:$0xff] %v86
  %s90 = scalar_lea.vmem %s0, 136
  %v91 = vld [vmem:[%s90] sm:$0xff]
  %s92 = scalar_lea.vmem %s1, 136
  %v93 = vld [vmem:[%s92] sm:$0xff]
  %94 = xla_tuple %v91, %v93
  %95 = xla_tuple %94
  %v96 = vmul.f32 %v91, %v93
  %97 = xla_tuple %v96
  %s98 = scalar_lea.vmem %s2, 136
  %99 = vst [vmem:[%s98] sm:$0xff] %v96
  %s100 = scalar_lea.vmem %s0, 16
  %v101 = vld [vmem:[%s100] sm:$0xff]
  %s102 = scalar_lea.vmem %s1, 16
  %v103 = vld [vmem:[%s102] sm:$0xff]
  %104 = xla_tuple %v101, %v103
  %105 = xla_tuple %104
  %v106 = vmul.f32 %v101, %v103
  %107 = xla_tuple %v106
  %s108 = scalar_lea.vmem %s2, 16
  %109 = vst [vmem:[%s108] sm:$0xff] %v106
  %s110 = scalar_lea.vmem %s0, 48
  %v111 = vld [vmem:[%s110] sm:$0xff]
  %s112 = scalar_lea.vmem %s1, 48
  %v113 = vld [vmem:[%s112] sm:$0xff]
  %114 = xla_tuple %v111, %v113
  %115 = xla_tuple %114
  %v116 = vmul.f32 %v111, %v113
  %117 = xla_tuple %v116
  %s118 = scalar_lea.vmem %s2, 48
  %119 = vst [vmem:[%s118] sm:$0xff] %v116
  %s120 = scalar_lea.vmem %s0, 80
  %v121 = vld [vmem:[%s120] sm:$0xff]
  %s122 = scalar_lea.vmem %s1, 80
  %v123 = vld [vmem:[%s122] sm:$0xff]
  %124 = xla_tuple %v121, %v123
  %125 = xla_tuple %124
  %v126 = vmul.f32 %v121, %v123
  %127 = xla_tuple %v126
  %s128 = scalar_lea.vmem %s2, 80
  %129 = vst [vmem:[%s128] sm:$0xff] %v126
  %s130 = scalar_lea.vmem %s0, 112
  %v131 = vld [vmem:[%s130] sm:$0xff]
  %s132 = scalar_lea.vmem %s1, 112
  %v133 = vld [vmem:[%s132] sm:$0xff]
  %134 = xla_tuple %v131, %v133
  %135 = xla_tuple %134
  %v136 = vmul.f32 %v131, %v133
  %137 = xla_tuple %v136
  %s138 = scalar_lea.vmem %s2, 112
  %139 = vst [vmem:[%s138] sm:$0xff] %v136
  %s140 = scalar_lea.vmem %s0, 144
  %v141 = vld [vmem:[%s140] sm:$0xff]
  %s142 = scalar_lea.vmem %s1, 144
  %v143 = vld [vmem:[%s142] sm:$0xff]
  %144 = xla_tuple %v141, %v143
  %145 = xla_tuple %144
  %v146 = vmul.f32 %v141, %v143
  %147 = xla_tuple %v146
  %s148 = scalar_lea.vmem %s2, 144
  %149 = vst [vmem:[%s148] sm:$0xff] %v146
  %s150 = scalar_lea.vmem %s0, 24
  %v151 = vld [vmem:[%s150] sm:$0xff]
  %s152 = scalar_lea.vmem %s1, 24
  %v153 = vld [vmem:[%s152] sm:$0xff]
  %154 = xla_tuple %v151, %v153
  %155 = xla_tuple %154
  %v156 = vmul.f32 %v151, %v153
  %157 = xla_tuple %v156
  %s158 = scalar_lea.vmem %s2, 24
  %159 = vst [vmem:[%s158] sm:$0xff] %v156
  %s160 = scalar_lea.vmem %s0, 56
  %v161 = vld [vmem:[%s160] sm:$0xff]
  %s162 = scalar_lea.vmem %s1, 56
  %v163 = vld [vmem:[%s162] sm:$0xff]
  %164 = xla_tuple %v161, %v163
  %165 = xla_tuple %164
  %v166 = vmul.f32 %v161, %v163
  %167 = xla_tuple %v166
  %s168 = scalar_lea.vmem %s2, 56
  %169 = vst [vmem:[%s168] sm:$0xff] %v166
  %s170 = scalar_lea.vmem %s0, 88
  %v171 = vld [vmem:[%s170] sm:$0xff]
  %s172 = scalar_lea.vmem %s1, 88
  %v173 = vld [vmem:[%s172] sm:$0xff]
  %174 = xla_tuple %v171, %v173
  %175 = xla_tuple %174
  %v176 = vmul.f32 %v171, %v173
  %177 = xla_tuple %v176
  %s178 = scalar_lea.vmem %s2, 88
  %179 = vst [vmem:[%s178] sm:$0xff] %v176
  %s180 = scalar_lea.vmem %s0, 120
  %v181 = vld [vmem:[%s180] sm:$0xff]
  %s182 = scalar_lea.vmem %s1, 120
  %v183 = vld [vmem:[%s182] sm:$0xff]
  %184 = xla_tuple %v181, %v183
  %185 = xla_tuple %184
  %v186 = vmul.f32 %v181, %v183
  %187 = xla_tuple %v186
  %s188 = scalar_lea.vmem %s2, 120
  %189 = vst [vmem:[%s188] sm:$0xff] %v186
  %s190 = scalar_lea.vmem %s0, 152
  %v191 = vld [vmem:[%s190] sm:$0xff]
  %s192 = scalar_lea.vmem %s1, 152
  %v193 = vld [vmem:[%s192] sm:$0xff]
  %194 = xla_tuple %v191, %v193
  %195 = xla_tuple %194
  %v196 = vmul.f32 %v191, %v193
  %197 = xla_tuple %v196
  %s198 = scalar_lea.vmem %s2, 152
  %199 = vst [vmem:[%s198] sm:$0xff] %v196

// kernel: _forward.7
$region0: #{_forward.7}
  #allocation0 [shape = 'u32[]', space=smem, size = 0x4, offset = 0x4, fixed_abs, tag = 'smem constant byte address 0x4 - core index']
  #allocation1 [shape = 'u32[144,128]{1,0:T(1,128)}', space=vmem, size = 0x12000, scoped, tag = 'internal scratch']
  %s0 = inlined_call_operand.vmem [shape: f32[512,128], index: 0, kind: input, shape index: {}]
  %s1 = inlined_call_operand.vmem [shape: f32[1,128], index: 1, kind: input, shape index: {}]
  %s2 = inlined_call_operand.vmem [shape: f32[1,128], index: 2, kind: input, shape index: {}]
  %s3 = inlined_call_operand.vmem [shape: f32[512,128], index: 3, kind: output, shape index: {}]
  %s4 = sld [smem:[#allocation0]]
  $region45: #{_forward.7} parent=0
    _
  %s6 = ssub.s32 1, %s4
  %s7 = scalar_select 0, %s6, %s4
  loop: start=0, step=1, limit=4
  $region2: #{_forward.7} parent=0 // loop_pre_header
    _
  $region3: #{_forward.7} parent=0 // loop_header
    %s9 = sphi 0, %s13
    %p10 = scmp.ge.s32.totalorder %s9, 4
    %s19 = sphi 0, %s21
    %s22 = sphi 0, %s19
    %s23 = sphi 0, %s22
    %s39 = sphi 0, %s23
    %s43 = sphi 0, %s43
    %s45 = sphi 0, %s43
    %s46 = sphi 0, %s45
    %s60 = sphi 0, %s46
    %s64 = sphi 0, %s64
    %s66 = sphi 0, %s64
    %s67 = sphi 0, %s66
    %s81 = sphi 0, %s67
    %s87 = sphi 0, %s89
    %s90 = sphi 0, %s87
    %s91 = sphi 0, %s90
    %s107 = sphi 0, %s91
  $region4: #{_forward.7} parent=0 // loop_header_branch
    %12 = sbr.rel (%p10) target = $region8
  $region5: #{_forward.7} parent=0 // loop_body
    %s14 = ssub.s32 %s9, 1
    %s15 = ssub.s32 %s9, 2
    %s16 = sadd.s32 %s9, 1
    %s17 = ssub.s32 %s9, %s16
    %p18 = scmp.eq.s32.totalorder %s17, 0
    %s20 = sadd.s32 %s19, 1
    %s21 = scalar_select %p18, %s19, %s20
    %p24 = pneg %p18
    %p25 = scmp.eq.s32.totalorder %s9, 1
    %p26 = por %p24, %p25
    %p27 = scmp.ne.s32.totalorder %s19, %s22
    %p28 = scmp.eq.s32.totalorder %s9, 0
    %p29 = por %p27, %p28
    %p30 = scmp.ne.s32.totalorder %s19, %s22
    %p31 = scmp.eq.s32.totalorder %s14, 1
    %p32 = por %p30, %p31
    %p33 = scmp.ne.s32.totalorder %s22, %s23
    %p34 = scmp.eq.s32.totalorder %s14, 0
    %p35 = por %p33, %p34
    %p36 = scmp.ne.s32.totalorder %s22, %s23
    %p37 = scmp.eq.s32.totalorder %s15, 1
    %p38 = por %p36, %p37
    %p40 = scmp.ne.s32.totalorder %s23, %s39
    %p41 = scmp.eq.s32.totalorder %s15, 0
    %p42 = por %p40, %p41
    %s44 = sadd.s32 %s43, 1
    %p47 = scmp.eq.s32.totalorder %s9, 1
    %p48 = scmp.ne.s32.totalorder %s43, %s45
    %p49 = scmp.eq.s32.totalorder %s9, 0
    %p50 = por %p48, %p49
    %p51 = scmp.ne.s32.totalorder %s43, %s45
    %p52 = scmp.eq.s32.totalorder %s14, 1
    %p53 = por %p51, %p52
    %p54 = scmp.ne.s32.totalorder %s45, %s46
    %p55 = scmp.eq.s32.totalorder %s14, 0
    %p56 = por %p54, %p55
    %p57 = scmp.ne.s32.totalorder %s45, %s46
    %p58 = scmp.eq.s32.totalorder %s15, 1
    %p59 = por %p57, %p58
    %p61 = scmp.ne.s32.totalorder %s46, %s60
    %p62 = scmp.eq.s32.totalorder %s15, 0
    %p63 = por %p61, %p62
    %s65 = sadd.s32 %s64, 1
    %p68 = scmp.eq.s32.totalorder %s9, 1
    %p69 = scmp.ne.s32.totalorder %s64, %s66
    %p70 = scmp.eq.s32.totalorder %s9, 0
    %p71 = por %p69, %p70
    %p72 = scmp.ne.s32.totalorder %s64, %s66
    %p73 = scmp.eq.s32.totalorder %s14, 1
    %p74 = por %p72, %p73
    %p75 = scmp.ne.s32.totalorder %s66, %s67
    %p76 = scmp.eq.s32.totalorder %s14, 0
    %p77 = por %p75, %p76
    %p78 = scmp.ne.s32.totalorder %s66, %s67
    %p79 = scmp.eq.s32.totalorder %s15, 1
    %p80 = por %p78, %p79
    %p82 = scmp.ne.s32.totalorder %s67, %s81
    %p83 = scmp.eq.s32.totalorder %s15, 0
    %p84 = por %p82, %p83
    %s85 = ssub.s32 %s9, %s16
    %p86 = scmp.eq.s32.totalorder %s85, 0
    %s88 = sadd.s32 %s87, 1
    %s89 = scalar_select %p86, %s87, %s88
    %p92 = pneg %p86
    %p93 = scmp.eq.s32.totalorder %s9, 1
    %p94 = por %p92, %p93
    %p95 = scmp.ne.s32.totalorder %s87, %s90
    %p96 = scmp.eq.s32.totalorder %s9, 0
    %p97 = por %p95, %p96
    %p98 = scmp.ne.s32.totalorder %s87, %s90
    %p99 = scmp.eq.s32.totalorder %s14, 1
    %p100 = por %p98, %p99
    %p101 = scmp.ne.s32.totalorder %s90, %s91
    %p102 = scmp.eq.s32.totalorder %s14, 0
    %p103 = por %p101, %p102
    %p104 = scmp.ne.s32.totalorder %s90, %s91
    %p105 = scmp.eq.s32.totalorder %s15, 1
    %p106 = por %p104, %p105
    %p108 = scmp.ne.s32.totalorder %s91, %s107
    %p109 = scmp.eq.s32.totalorder %s15, 0
    %p110 = por %p108, %p109
    %p111 = scmp.le.s32.totalorder 1, %s9
    %p112 = scmp.lt.s32.totalorder %s9, 3
    %p113 = pnand %p111, %p112
    %p114 = pneg %p113
    // Predicated region
    $region9: #{_forward.7} parent=5 // pred_check
      _
    $region10: #{_forward.7} parent=5 // pred_check_branch
      %116 = sbr.rel (%p113) target = $region12
    $region11: #{_forward.7} parent=5 // pred_region
      %s117 = ssub.s32 %s9, 1
      // Predicated region
      $region13: #{_forward.7} parent=11 // pred_check
        %p118 = pneg %p56
      $region14: #{_forward.7} parent=11 // pred_check_branch
        %120 = sbr.rel (%p118) target = $region16
      $region15: #{_forward.7} parent=11 // pred_region
        _
      $region16: #{_forward.7} parent=11 // pred_fallthru
        _
      // Predicated region
      $region17: #{_forward.7} parent=11 // pred_check
        %p121 = pneg %p77
      $region18: #{_forward.7} parent=11 // pred_check_branch
        %123 = sbr.rel (%p121) target = $region20
      $region19: #{_forward.7} parent=11 // pred_region
        _
      $region20: #{_forward.7} parent=11 // pred_fallthru
        _
    $region12: #{_forward.7} parent=5 // pred_fallthru
      _
    %p124 = scmp.lt.s32.totalorder %s9, 2
    // Predicated region
    $region21: #{_forward.7} parent=5 // pred_check
      %p125 = pneg %p124
    $region22: #{_forward.7} parent=5 // pred_check_branch
      %127 = sbr.rel (%p125) target = $region24
    $region23: #{_forward.7} parent=5 // pred_region
      // Predicated region
      $region25: #{_forward.7} parent=23 // pred_check
        %p128 = pneg %p29
      $region26: #{_forward.7} parent=23 // pred_check_branch
        %130 = sbr.rel (%p128) target = $region28
      $region27: #{_forward.7} parent=23 // pred_region
        %s131 = smul.u32 32, %s9
        %p132 = scmp.lt.s32.totalorder %s131, 63
        %s133 = scalar_select %p132, %s131, 63
        %s134 = smul.addr %s133, 8
        %s135 = scalar_lea.vmem %s0, %s134
        %s136 = smul.u32 32, %s9
      $region28: #{_forward.7} parent=23 // pred_fallthru
        _
    $region24: #{_forward.7} parent=5 // pred_fallthru
      _
    %p137 = scmp.le.s32.totalorder 1, %s9
    %p138 = scmp.lt.s32.totalorder %s9, 3
    %p139 = pnand %p137, %p138
    %p140 = pneg %p139
    // Predicated region
    $region29: #{_forward.7} parent=5 // pred_check
      _
    $region30: #{_forward.7} parent=5 // pred_check_branch
      %142 = sbr.rel (%p139) target = $region32
    $region31: #{_forward.7} parent=5 // pred_region
      %s143 = ssub.s32 %s9, 1
      %s144 = smul.u32 32, %s14
      %p145 = scmp.lt.s32.totalorder %s144, 63
      %s146 = scalar_select %p145, %s144, 63
      %s147 = smul.addr %s146, 8
      %s148 = scalar_lea.vmem %s0, %s147
      %p149 = pneg %p35
      %p150 = pneg %p32
      %p151 = pneg %p56
      %p152 = pneg %p53
      %p153 = pneg %p77
      %p154 = pneg %p74
      %p155 = pneg %p103
      %p156 = pneg %p100
      %s157 = smul.u32 32, %s14
      %p158 = scmp.lt.s32.totalorder %s157, 63
      %s159 = scalar_select %p158, %s157, 63
      %s160 = smul.addr %s159, 8
      %s161 = scalar_lea.vmem %s3, %s160
      %s162 = smul.u32 32, %s14
      %p163 = scmp.lt.s32.totalorder %s162, 63
      %s164 = scalar_select %p163, %s162, 63
      %s165 = smul.addr %s164, 8
      %s166 = scalar_lea.vmem %s0, %s165
      %s167 = smul.u32 32, %s14
      %s168 = smul.u32 32, %s14
      %p169 = scmp.lt.s32.totalorder %s168, 63
      %s170 = scalar_select %p169, %s168, 63
      %s171 = smul.addr %s170, 8
      %s172 = scalar_lea.vmem %s3, %s171
      %s173 = smul.u32 32, %s14
      %v174 = vld [vmem:[%s166] sm:$0xff]
      %v175 = vld [vmem:[%s166 + $0x8] sm:$0xff]
      %v176 = vld [vmem:[%s166 + $0x10] sm:$0xff]
      %v177 = vld [vmem:[%s166 + $0x18] sm:$0xff]
      %v178 = vld [vmem:[%s166 + $0x20] sm:$0xff]
      %v179 = vld [vmem:[%s166 + $0x28] sm:$0xff]
      %v180 = vld [vmem:[%s166 + $0x30] sm:$0xff]
      %v181 = vld [vmem:[%s166 + $0x38] sm:$0xff]
      %v182 = vld [vmem:[%s166 + $0x40] sm:$0xff]
      %v183 = vld [vmem:[%s166 + $0x48] sm:$0xff]
      %v184 = vld [vmem:[%s166 + $0x50] sm:$0xff]
      %v185 = vld [vmem:[%s166 + $0x58] sm:$0xff]
      %v186 = vld [vmem:[%s166 + $0x60] sm:$0xff]
      %v187 = vld [vmem:[%s166 + $0x68] sm:$0xff]
      %v188 = vld [vmem:[%s166 + $0x70] sm:$0xff]
      %v189 = vld [vmem:[%s166 + $0x78] sm:$0xff]
      %v190 = vld [vmem:[%s166 + $0x80] sm:$0xff]
      %v191 = vld [vmem:[%s166 + $0x88] sm:$0xff]
      %v192 = vld [vmem:[%s166 + $0x90] sm:$0xff]
      %v193 = vld [vmem:[%s166 + $0x98] sm:$0xff]
      %v194 = vld [vmem:[%s166 + $0xa0] sm:$0xff]
      %v195 = vld [vmem:[%s166 + $0xa8] sm:$0xff]
      %v196 = vld [vmem:[%s166 + $0xb0] sm:$0xff]
      %v197 = vld [vmem:[%s166 + $0xb8] sm:$0xff]
      %v198 = vld [vmem:[%s166 + $0xc0] sm:$0xff]
      %v199 = vld [vmem:[%s166 + $0xc8] sm:$0xff]
      %v200 = vld [vmem:[%s166 + $0xd0] sm:$0xff]
      %v201 = vld [vmem:[%s166 + $0xd8] sm:$0xff]
      %v202 = vld [vmem:[%s166 + $0xe0] sm:$0xff]
      %v203 = vld [vmem:[%s166 + $0xe8] sm:$0xff]
      %v204 = vld [vmem:[%s166 + $0xf0] sm:$0xff]
      %v205 = vld [vmem:[%s166 + $0xf8] sm:$0xff]
      %v206 = vld [vmem:[%s1] sm:$0x1]
      %v208 = vlaneseq
      %v209 = vshrl.u32 %v208, 7
      %v210 = vsub.s32 0, %v209
      %v211 = vrot.slane %v206, %v210
      %v213 = vmul.f32 %v174, %v211
      %v214 = vmul.f32 %v175, %v211
      %v215 = vmul.f32 %v176, %v211
      %v216 = vmul.f32 %v177, %v211
      %v217 = vmul.f32 %v178, %v211
      %v218 = vmul.f32 %v179, %v211
      %v219 = vmul.f32 %v180, %v211
      %v220 = vmul.f32 %v181, %v211
      %v221 = vmul.f32 %v182, %v211
      %v222 = vmul.f32 %v183, %v211
      %v223 = vmul.f32 %v184, %v211
      %v224 = vmul.f32 %v185, %v211
      %v225 = vmul.f32 %v186, %v211
      %v226 = vmul.f32 %v187, %v211
      %v227 = vmul.f32 %v188, %v211
      %v228 = vmul.f32 %v189, %v211
      %v229 = vmul.f32 %v190, %v211
      %v230 = vmul.f32 %v191, %v211
      %v231 = vmul.f32 %v192, %v211
      %v232 = vmul.f32 %v193, %v211
      %v233 = vmul.f32 %v194, %v211
      %v234 = vmul.f32 %v195, %v211
      %v235 = vmul.f32 %v196, %v211
      %v236 = vmul.f32 %v197, %v211
      %v237 = vmul.f32 %v198, %v211
      %v238 = vmul.f32 %v199, %v211
      %v239 = vmul.f32 %v200, %v211
      %v240 = vmul.f32 %v201, %v211
      %v241 = vmul.f32 %v202, %v211
      %v242 = vmul.f32 %v203, %v211
      %v243 = vmul.f32 %v204, %v211
      %v244 = vmul.f32 %v205, %v211
      %v245 = vld [vmem:[%s2] sm:$0x1]
      %v247 = vlaneseq
      %v248 = vshrl.u32 %v247, 7
      %v249 = vsub.s32 0, %v248
      %v250 = vrot.slane %v245, %v249
      %v252 = vadd.f32 %v213, %v250
      %v253 = vadd.f32 %v214, %v250
      %v254 = vadd.f32 %v215, %v250
      %v255 = vadd.f32 %v216, %v250
      %v256 = vadd.f32 %v217, %v250
      %v257 = vadd.f32 %v218, %v250
      %v258 = vadd.f32 %v219, %v250
      %v259 = vadd.f32 %v220, %v250
      %v260 = vadd.f32 %v221, %v250
      %v261 = vadd.f32 %v222, %v250
      %v262 = vadd.f32 %v223, %v250
      %v263 = vadd.f32 %v224, %v250
      %v264 = vadd.f32 %v225, %v250
      %v265 = vadd.f32 %v226, %v250
      %v266 = vadd.f32 %v227, %v250
      %v267 = vadd.f32 %v228, %v250
      %v268 = vadd.f32 %v229, %v250
      %v269 = vadd.f32 %v230, %v250
      %v270 = vadd.f32 %v231, %v250
      %v271 = vadd.f32 %v232, %v250
      %v272 = vadd.f32 %v233, %v250
      %v273 = vadd.f32 %v234, %v250
      %v274 = vadd.f32 %v235, %v250
      %v275 = vadd.f32 %v236, %v250
      %v276 = vadd.f32 %v237, %v250
      %v277 = vadd.f32 %v238, %v250
      %v278 = vadd.f32 %v239, %v250
      %v279 = vadd.f32 %v240, %v250
      %v280 = vadd.f32 %v241, %v250
      %v281 = vadd.f32 %v242, %v250
      %v282 = vadd.f32 %v243, %v250
      %v283 = vadd.f32 %v244, %v250
      %v284 = vmax.f32 %v252, 0.0
      %v285 = vmax.f32 %v253, 0.0
      %v286 = vmax.f32 %v254, 0.0
      %v287 = vmax.f32 %v255, 0.0
      %v288 = vmax.f32 %v256, 0.0
      %v289 = vmax.f32 %v257, 0.0
      %v290 = vmax.f32 %v258, 0.0
      %v291 = vmax.f32 %v259, 0.0
      %v292 = vmax.f32 %v260, 0.0
      %v293 = vmax.f32 %v261, 0.0
      %v294 = vmax.f32 %v262, 0.0
      %v295 = vmax.f32 %v263, 0.0
      %v296 = vmax.f32 %v264, 0.0
      %v297 = vmax.f32 %v265, 0.0
      %v298 = vmax.f32 %v266, 0.0
      %v299 = vmax.f32 %v267, 0.0
      %v300 = vmax.f32 %v268, 0.0
      %v301 = vmax.f32 %v269, 0.0
      %v302 = vmax.f32 %v270, 0.0
      %v303 = vmax.f32 %v271, 0.0
      %v304 = vmax.f32 %v272, 0.0
      %v305 = vmax.f32 %v273, 0.0
      %v306 = vmax.f32 %v274, 0.0
      %v307 = vmax.f32 %v275, 0.0
      %v308 = vmax.f32 %v276, 0.0
      %v309 = vmax.f32 %v277, 0.0
      %v310 = vmax.f32 %v278, 0.0
      %v311 = vmax.f32 %v279, 0.0
      %v312 = vmax.f32 %v280, 0.0
      %v313 = vmax.f32 %v281, 0.0
      %v314 = vmax.f32 %v282, 0.0
      %v315 = vmax.f32 %v283, 0.0
      %316 = vst [vmem:[%s172] sm:$0xff] %v284
      %317 = vst [vmem:[%s172 + $0x8] sm:$0xff] %v285
      %318 = vst [vmem:[%s172 + $0x10] sm:$0xff] %v286
      %319 = vst [vmem:[%s172 + $0x18] sm:$0xff] %v287
      %320 = vst [vmem:[%s172 + $0x20] sm:$0xff] %v288
      %321 = vst [vmem:[%s172 + $0x28] sm:$0xff] %v289
      %322 = vst [vmem:[%s172 + $0x30] sm:$0xff] %v290
      %323 = vst [vmem:[%s172 + $0x38] sm:$0xff] %v291
      %324 = vst [vmem:[%s172 + $0x40] sm:$0xff] %v292
      %325 = vst [vmem:[%s172 + $0x48] sm:$0xff] %v293
      %326 = vst [vmem:[%s172 + $0x50] sm:$0xff] %v294
      %327 = vst [vmem:[%s172 + $0x58] sm:$0xff] %v295
      %328 = vst [vmem:[%s172 + $0x60] sm:$0xff] %v296
      %329 = vst [vmem:[%s172 + $0x68] sm:$0xff] %v297
      %330 = vst [vmem:[%s172 + $0x70] sm:$0xff] %v298
      %331 = vst [vmem:[%s172 + $0x78] sm:$0xff] %v299
      %332 = vst [vmem:[%s172 + $0x80] sm:$0xff] %v300
      %333 = vst [vmem:[%s172 + $0x88] sm:$0xff] %v301
      %334 = vst [vmem:[%s172 + $0x90] sm:$0xff] %v302
      %335 = vst [vmem:[%s172 + $0x98] sm:$0xff] %v303
      %336 = vst [vmem:[%s172 + $0xa0] sm:$0xff] %v304
      %337 = vst [vmem:[%s172 + $0xa8] sm:$0xff] %v305
      %338 = vst [vmem:[%s172 + $0xb0] sm:$0xff] %v306
      %339 = vst [vmem:[%s172 + $0xb8] sm:$0xff] %v307
      %340 = vst [vmem:[%s172 + $0xc0] sm:$0xff] %v308
      %341 = vst [vmem:[%s172 + $0xc8] sm:$0xff] %v309
      %342 = vst [vmem:[%s172 + $0xd0] sm:$0xff] %v310
      %343 = vst [vmem:[%s172 + $0xd8] sm:$0xff] %v311
      %344 = vst [vmem:[%s172 + $0xe0] sm:$0xff] %v312
      %345 = vst [vmem:[%s172 + $0xe8] sm:$0xff] %v313
      %346 = vst [vmem:[%s172 + $0xf0] sm:$0xff] %v314
      %347 = vst [vmem:[%s172 + $0xf8] sm:$0xff] %v315
      %s348 = smul.u32 32, %s14
      %p349 = scmp.lt.s32.totalorder %s348, 63
      %s350 = scalar_select %p349, %s348, 63
      %s351 = smul.addr %s350, 8
      %s352 = scalar_lea.vmem %s3, %s351
      // Predicated region
      $region33: #{_forward.7} parent=31 // pred_check
        %p353 = pneg %p100
      $region34: #{_forward.7} parent=31 // pred_check_branch
        %355 = sbr.rel (%p353) target = $region36
      $region35: #{_forward.7} parent=31 // pred_region
        %s356 = smul.u32 32, %s14
      $region36: #{_forward.7} parent=31 // pred_fallthru
        _
    $region32: #{_forward.7} parent=5 // pred_fallthru
      _
    %p357 = scmp.le.s32.totalorder 2, %s9
    // Predicated region
    $region37: #{_forward.7} parent=5 // pred_check
      %p358 = pneg %p357
    $region38: #{_forward.7} parent=5 // pred_check_branch
      %360 = sbr.rel (%p358) target = $region40
    $region39: #{_forward.7} parent=5 // pred_region
      %s361 = ssub.s32 %s9, 2
      // Predicated region
      $region41: #{_forward.7} parent=39 // pred_check
        %p362 = pneg %p106
      $region42: #{_forward.7} parent=39 // pred_check_branch
        %364 = sbr.rel (%p362) target = $region44
      $region43: #{_forward.7} parent=39 // pred_region
        %s365 = smul.u32 32, %s15
        %p366 = scmp.lt.s32.totalorder %s365, 63
        %s367 = scalar_select %p366, %s365, 63
        %s368 = smul.addr %s367, 8
        %s369 = scalar_lea.vmem %s3, %s368
      $region44: #{_forward.7} parent=39 // pred_fallthru
        _
    $region40: #{_forward.7} parent=5 // pred_fallthru
      _
  $region6: #{_forward.7} parent=0 // loop_footer
    %s13 = sadd.s32 1, %s9
  $region7: #{_forward.7} parent=0 // loop_footer_branch
    %8 = sbr.rel target = $region3
  $region8: #{_forward.7} parent=0 // loop_exit
    _

// kernel: _forward.6
$region0: #{_forward.6}
  #allocation0 [shape = 'u32[]', space=smem, size = 0x4, offset = 0x4, fixed_abs, tag = 'smem constant byte address 0x4 - core index']
  #allocation1 [shape = 'u32[144,128]{1,0:T(1,128)}', space=vmem, size = 0x12000, scoped, tag = 'internal scratch']
  #allocation2 [shape = 'f32[256,128]{1,0:T(8,128)}', space=vmem, size = 0x20000, scoped, tag = 'scratch operand']
  %s0 = inlined_call_operand.vmem [shape: bf16[512,36], index: 0, kind: input, shape index: {}]
  %s1 = inlined_call_operand.vmem [shape: bf16[36,128], index: 1, kind: input, shape index: {}]
  %s2 = inlined_call_operand.vmem [shape: f32[1,128], index: 2, kind: input, shape index: {}]
  %s3 = inlined_call_operand.vmem [shape: f32[512,128], index: 3, kind: output, shape index: {0}]
  %s4 = inlined_call_operand.vmem [shape: f32[2,2,128], index: 4, kind: output, shape index: {1}]
  %5 = xla_tuple %s3, %s4
  %s6 = sld [smem:[#allocation0]]
  $region61: #{_forward.6} parent=0
    _
  %s8 = ssub.s32 1, %s6
  %s9 = scalar_select 0, %s8, %s6
  loop: start=0, step=1, limit=4
  $region2: #{_forward.6} parent=0 // loop_pre_header
    _
  $region3: #{_forward.6} parent=0 // loop_header
    %s11 = sphi 0, %s15
    %p12 = scmp.ge.s32.totalorder %s11, 4
    %s18 = sphi 0, %s30
    %s19 = sphi 0, %s26
    %s20 = sphi 0, %s18
    %s21 = sphi 0, %s19
    %s22 = sphi 0, %s20
    %s23 = sphi 0, %s21
    %s35 = sphi 0, %s37
    %s38 = sphi 0, %s35
    %s39 = sphi 0, %s38
    %s55 = sphi 0, %s39
    %s61 = sphi 0, %s63
    %s64 = sphi 0, %s61
    %s65 = sphi 0, %s64
    %s81 = sphi 0, %s65
    %s85 = sphi 0, %s85
    %s87 = sphi 0, %s85
    %s88 = sphi 0, %s87
    %s102 = sphi 0, %s88
    %s108 = sphi 0, %s110
    %s111 = sphi 0, %s108
    %s112 = sphi 0, %s111
    %s128 = sphi 0, %s112
    %s134 = sphi 0, %s136
    %s137 = sphi 0, %s134
    %s138 = sphi 0, %s137
    %s154 = sphi 0, %s138
  $region4: #{_forward.6} parent=0 // loop_header_branch
    %14 = sbr.rel (%p12) target = $region8
  $region5: #{_forward.6} parent=0 // loop_body
    %s16 = ssub.s32 %s11, 1
    %s17 = ssub.s32 %s11, 2
    %s24 = sadd.s32 1, %s19
    %p25 = scmp.ge.s32.totalorder %s24, 1
    %s26 = scalar_select %p25, 0, %s24
    %s27 = sadd.s32 1, %s18
    %s28 = scalar_select %p25, %s27, %s18
    %p29 = scmp.ge.s32.totalorder %s28, 2
    %s30 = scalar_select %p29, 0, %s28
    %s31 = ssub.s32 %s18, %s30
    %s32 = ssub.s32 %s19, %s26
    %s33 = sor.u32 %s31, %s32
    %p34 = scmp.eq.s32.totalorder %s33, 0
    %s36 = sadd.s32 %s35, 1
    %s37 = scalar_select %p34, %s35, %s36
    %p40 = pneg %p34
    %p41 = scmp.eq.s32.totalorder %s11, 1
    %p42 = por %p40, %p41
    %p43 = scmp.ne.s32.totalorder %s35, %s38
    %p44 = scmp.eq.s32.totalorder %s11, 0
    %p45 = por %p43, %p44
    %p46 = scmp.ne.s32.totalorder %s35, %s38
    %p47 = scmp.eq.s32.totalorder %s16, 1
    %p48 = por %p46, %p47
    %p49 = scmp.ne.s32.totalorder %s38, %s39
    %p50 = scmp.eq.s32.totalorder %s16, 0
    %p51 = por %p49, %p50
    %p52 = scmp.ne.s32.totalorder %s38, %s39
    %p53 = scmp.eq.s32.totalorder %s17, 1
    %p54 = por %p52, %p53
    %p56 = scmp.ne.s32.totalorder %s39, %s55
    %p57 = scmp.eq.s32.totalorder %s17, 0
    %p58 = por %p56, %p57
    %s59 = ssub.s32 %s19, %s26
    %p60 = scmp.eq.s32.totalorder %s59, 0
    %s62 = sadd.s32 %s61, 1
    %s63 = scalar_select %p60, %s61, %s62
    %p66 = pneg %p60
    %p67 = scmp.eq.s32.totalorder %s11, 1
    %p68 = por %p66, %p67
    %p69 = scmp.ne.s32.totalorder %s61, %s64
    %p70 = scmp.eq.s32.totalorder %s11, 0
    %p71 = por %p69, %p70
    %p72 = scmp.ne.s32.totalorder %s61, %s64
    %p73 = scmp.eq.s32.totalorder %s16, 1
    %p74 = por %p72, %p73
    %p75 = scmp.ne.s32.totalorder %s64, %s65
    %p76 = scmp.eq.s32.totalorder %s16, 0
    %p77 = por %p75, %p76
    %p78 = scmp.ne.s32.totalorder %s64, %s65
    %p79 = scmp.eq.s32.totalorder %s17, 1
    %p80 = por %p78, %p79
    %p82 = scmp.ne.s32.totalorder %s65, %s81
    %p83 = scmp.eq.s32.totalorder %s17, 0
    %p84 = por %p82, %p83
    %s86 = sadd.s32 %s85, 1
    %p89 = scmp.eq.s32.totalorder %s11, 1
    %p90 = scmp.ne.s32.totalorder %s85, %s87
    %p91 = scmp.eq.s32.totalorder %s11, 0
    %p92 = por %p90, %p91
    %p93 = scmp.ne.s32.totalorder %s85, %s87
    %p94 = scmp.eq.s32.totalorder %s16, 1
    %p95 = por %p93, %p94
    %p96 = scmp.ne.s32.totalorder %s87, %s88
    %p97 = scmp.eq.s32.totalorder %s16, 0
    %p98 = por %p96, %p97
    %p99 = scmp.ne.s32.totalorder %s87, %s88
    %p100 = scmp.eq.s32.totalorder %s17, 1
    %p101 = por %p99, %p100
    %p103 = scmp.ne.s32.totalorder %s88, %s102
    %p104 = scmp.eq.s32.totalorder %s17, 0
    %p105 = por %p103, %p104
    %s106 = ssub.s32 %s18, %s30
    %p107 = scmp.eq.s32.totalorder %s106, 0
    %s109 = sadd.s32 %s108, 1
    %s110 = scalar_select %p107, %s108, %s109
    %p113 = pneg %p107
    %p114 = scmp.eq.s32.totalorder %s11, 1
    %p115 = por %p113, %p114
    %p116 = scmp.ne.s32.totalorder %s108, %s111
    %p117 = scmp.eq.s32.totalorder %s11, 0
    %p118 = por %p116, %p117
    %p119 = scmp.ne.s32.totalorder %s108, %s111
    %p120 = scmp.eq.s32.totalorder %s16, 1
    %p121 = por %p119, %p120
    %p122 = scmp.ne.s32.totalorder %s111, %s112
    %p123 = scmp.eq.s32.totalorder %s16, 0
    %p124 = por %p122, %p123
    %p125 = scmp.ne.s32.totalorder %s111, %s112
    %p126 = scmp.eq.s32.totalorder %s17, 1
    %p127 = por %p125, %p126
    %p129 = scmp.ne.s32.totalorder %s112, %s128
    %p130 = scmp.eq.s32.totalorder %s17, 0
    %p131 = por %p129, %p130
    %s132 = ssub.s32 %s18, %s30
    %p133 = scmp.eq.s32.totalorder %s132, 0
    %s135 = sadd.s32 %s134, 1
    %s136 = scalar_select %p133, %s134, %s135
    %p139 = pneg %p133
    %p140 = scmp.eq.s32.totalorder %s11, 1
    %p141 = por %p139, %p140
    %p142 = scmp.ne.s32.totalorder %s134, %s137
    %p143 = scmp.eq.s32.totalorder %s11, 0
    %p144 = por %p142, %p143
    %p145 = scmp.ne.s32.totalorder %s134, %s137
    %p146 = scmp.eq.s32.totalorder %s16, 1
    %p147 = por %p145, %p146
    %p148 = scmp.ne.s32.totalorder %s137, %s138
    %p149 = scmp.eq.s32.totalorder %s16, 0
    %p150 = por %p148, %p149
    %p151 = scmp.ne.s32.totalorder %s137, %s138
    %p152 = scmp.eq.s32.totalorder %s17, 1
    %p153 = por %p151, %p152
    %p155 = scmp.ne.s32.totalorder %s138, %s154
    %p156 = scmp.eq.s32.totalorder %s17, 0
    %p157 = por %p155, %p156
    %p158 = scmp.le.s32.totalorder 1, %s11
    %p159 = scmp.lt.s32.totalorder %s11, 3
    %p160 = pnand %p158, %p159
    %p161 = pneg %p160
    // Predicated region
    $region9: #{_forward.6} parent=5 // pred_check
      _
    $region10: #{_forward.6} parent=5 // pred_check_branch
      %163 = sbr.rel (%p160) target = $region12
    $region11: #{_forward.6} parent=5 // pred_region
      %s164 = ssub.s32 %s11, 1
      // Predicated region
      $region13: #{_forward.6} parent=11 // pred_check
        %p165 = pneg %p77
      $region14: #{_forward.6} parent=11 // pred_check_branch
        %167 = sbr.rel (%p165) target = $region16
      $region15: #{_forward.6} parent=11 // pred_region
        %s168 = smul.u32 5, %s21
        %p169 = scmp.lt.s32.totalorder %s168, 4
        %s170 = scalar_select %p169, %s168, 4
        %s171 = smul.addr %s170, 4
        %s172 = scalar_lea.vmem %s1, %s171
        %s173 = smul.u32 5, %s21
      $region16: #{_forward.6} parent=11 // pred_fallthru
        _
      // Predicated region
      $region17: #{_forward.6} parent=11 // pred_check
        %p174 = pneg %p98
      $region18: #{_forward.6} parent=11 // pred_check_branch
        %176 = sbr.rel (%p174) target = $region20
      $region19: #{_forward.6} parent=11 // pred_region
        _
      $region20: #{_forward.6} parent=11 // pred_fallthru
        _
    $region12: #{_forward.6} parent=5 // pred_fallthru
      _
    %p177 = scmp.lt.s32.totalorder %s11, 2
    // Predicated region
    $region21: #{_forward.6} parent=5 // pred_check
      %p178 = pneg %p177
    $region22: #{_forward.6} parent=5 // pred_check_branch
      %180 = sbr.rel (%p178) target = $region24
    $region23: #{_forward.6} parent=5 // pred_region
      // Predicated region
      $region25: #{_forward.6} parent=23 // pred_check
        %p181 = pneg %p45
      $region26: #{_forward.6} parent=23 // pred_check_branch
        %183 = sbr.rel (%p181) target = $region28
      $region27: #{_forward.6} parent=23 // pred_region
        %s184 = smul.u32 32, %s18
        %p185 = scmp.lt.s32.totalorder %s184, 63
        %s186 = scalar_select %p185, %s184, 63
        %p187 = scmp.lt.s32.totalorder %s19, 0
        %s188 = scalar_select %p187, %s19, 0
        %s189 = sadd.s32 %s188, %s186
        %s190 = smul.addr %s189, 4
        %s191 = scalar_lea.vmem %s0, %s190
        %s192 = smul.u32 32, %s18
      $region28: #{_forward.6} parent=23 // pred_fallthru
        _
    $region24: #{_forward.6} parent=5 // pred_fallthru
      _
    %p193 = scmp.le.s32.totalorder 1, %s11
    %p194 = scmp.lt.s32.totalorder %s11, 3
    %p195 = pnand %p193, %p194
    %p196 = pneg %p195
    // Predicated region
    $region29: #{_forward.6} parent=5 // pred_check
      _
    $region30: #{_forward.6} parent=5 // pred_check_branch
      %198 = sbr.rel (%p195) target = $region32
    $region31: #{_forward.6} parent=5 // pred_region
      %s199 = ssub.s32 %s11, 1
      %s200 = smul.u32 32, %s20
      %p201 = scmp.lt.s32.totalorder %s200, 63
      %s202 = scalar_select %p201, %s200, 63
      %p203 = scmp.lt.s32.totalorder %s21, 0
      %s204 = scalar_select %p203, %s21, 0
      %s205 = sadd.s32 %s204, %s202
      %s206 = smul.addr %s205, 4
      %s207 = scalar_lea.vmem %s0, %s206
      %p208 = pneg %p51
      %p209 = pneg %p48
      %s210 = smul.u32 5, %s21
      %p211 = scmp.lt.s32.totalorder %s210, 4
      %s212 = scalar_select %p211, %s210, 4
      %s213 = smul.addr %s212, 4
      %s214 = scalar_lea.vmem %s1, %s213
      %p215 = pneg %p77
      %p216 = pneg %p74
      %p217 = pneg %p98
      %p218 = pneg %p95
      %p219 = pneg %p124
      %p220 = pneg %p121
      %s221 = smul.u32 32, %s20
      %p222 = scmp.lt.s32.totalorder %s221, 63
      %s223 = scalar_select %p222, %s221, 63
      %s224 = smul.addr %s223, 8
      %s225 = scalar_lea.vmem %s3, %s224
      %p226 = pneg %p150
      %p227 = pneg %p147
      %p228 = scmp.lt.s32.totalorder %s20, 1
      %s229 = scalar_select %p228, %s20, 1
      %s230 = smul.addr %s229, 2
      %s231 = scalar_lea.vmem %s4, %s230
      %s232 = smul.u32 32, %s20
      %p233 = scmp.lt.s32.totalorder %s232, 63
      %s234 = scalar_select %p233, %s232, 63
      %p235 = scmp.lt.s32.totalorder %s21, 0
      %s236 = scalar_select %p235, %s21, 0
      %s237 = sadd.s32 %s236, %s234
      %s238 = smul.addr %s237, 4
      %s239 = scalar_lea.vmem %s0, %s238
      %s240 = smul.u32 32, %s20
      %s241 = smul.u32 5, %s21
      %p242 = scmp.lt.s32.totalorder %s241, 4
      %s243 = scalar_select %p242, %s241, 4
      %s244 = smul.addr %s243, 4
      %s245 = scalar_lea.vmem %s1, %s244
      %s246 = smul.u32 5, %s21
      %s247 = smul.u32 32, %s20
      %p248 = scmp.lt.s32.totalorder %s247, 63
      %s249 = scalar_select %p248, %s247, 63
      %s250 = smul.addr %s249, 8
      %s251 = scalar_lea.vmem %s3, %s250
      %s252 = smul.u32 32, %s20
      %p253 = scmp.lt.s32.totalorder %s20, 1
      %s254 = scalar_select %p253, %s20, 1
      %s255 = smul.addr %s254, 2
      %s256 = scalar_lea.vmem %s4, %s255
      %p258 = scmp.eq.s32.totalorder %s21, 0
      // Predicated region
      $region33: #{_forward.6} parent=31 // pred_check
        %p259 = pneg %p258
      $region34: #{_forward.6} parent=31 // pred_check_branch
        %261 = sbr.rel (%p259) target = $region36
      $region35: #{_forward.6} parent=31 // pred_region
        %262 = vst [vmem:[#allocation2] sm:$0xff] 0.0
        %263 = vst [vmem:[#allocation2 + $0x8] sm:$0xff] 0.0
        %264 = vst [vmem:[#allocation2 + $0x10] sm:$0xff] 0.0
        %265 = vst [vmem:[#allocation2 + $0x18] sm:$0xff] 0.0
        %266 = vst [vmem:[#allocation2 + $0x20] sm:$0xff] 0.0
        %267 = vst [vmem:[#allocation2 + $0x28] sm:$0xff] 0.0
        %268 = vst [vmem:[#allocation2 + $0x30] sm:$0xff] 0.0
        %269 = vst [vmem:[#allocation2 + $0x38] sm:$0xff] 0.0
        %270 = vst [vmem:[#allocation2 + $0x40] sm:$0xff] 0.0
        %271 = vst [vmem:[#allocation2 + $0x48] sm:$0xff] 0.0
        %272 = vst [vmem:[#allocation2 + $0x50] sm:$0xff] 0.0
        %273 = vst [vmem:[#allocation2 + $0x58] sm:$0xff] 0.0
        %274 = vst [vmem:[#allocation2 + $0x60] sm:$0xff] 0.0
        %275 = vst [vmem:[#allocation2 + $0x68] sm:$0xff] 0.0
        %276 = vst [vmem:[#allocation2 + $0x70] sm:$0xff] 0.0
        %277 = vst [vmem:[#allocation2 + $0x78] sm:$0xff] 0.0
        %278 = vst [vmem:[#allocation2 + $0x80] sm:$0xff] 0.0
        %279 = vst [vmem:[#allocation2 + $0x88] sm:$0xff] 0.0
        %280 = vst [vmem:[#allocation2 + $0x90] sm:$0xff] 0.0
        %281 = vst [vmem:[#allocation2 + $0x98] sm:$0xff] 0.0
        %282 = vst [vmem:[#allocation2 + $0xa0] sm:$0xff] 0.0
        %283 = vst [vmem:[#allocation2 + $0xa8] sm:$0xff] 0.0
        %284 = vst [vmem:[#allocation2 + $0xb0] sm:$0xff] 0.0
        %285 = vst [vmem:[#allocation2 + $0xb8] sm:$0xff] 0.0
        %286 = vst [vmem:[#allocation2 + $0xc0] sm:$0xff] 0.0
        %287 = vst [vmem:[#allocation2 + $0xc8] sm:$0xff] 0.0
        %288 = vst [vmem:[#allocation2 + $0xd0] sm:$0xff] 0.0
        %289 = vst [vmem:[#allocation2 + $0xd8] sm:$0xff] 0.0
        %290 = vst [vmem:[#allocation2 + $0xe0] sm:$0xff] 0.0
        %291 = vst [vmem:[#allocation2 + $0xe8] sm:$0xff] 0.0
        %292 = vst [vmem:[#allocation2 + $0xf0] sm:$0xff] 0.0
        %293 = vst [vmem:[#allocation2 + $0xf8] sm:$0xff] 0.0
      $region36: #{_forward.6} parent=31 // pred_fallthru
        _
      %v294 = vld [vmem:[#allocation2] sm:$0xff]
      %v295 = vld [vmem:[#allocation2 + $0x8] sm:$0xff]
      %v296 = vld [vmem:[#allocation2 + $0x10] sm:$0xff]
      %v297 = vld [vmem:[#allocation2 + $0x18] sm:$0xff]
      %v298 = vld [vmem:[#allocation2 + $0x20] sm:$0xff]
      %v299 = vld [vmem:[#allocation2 + $0x28] sm:$0xff]
      %v300 = vld [vmem:[#allocation2 + $0x30] sm:$0xff]
      %v301 = vld [vmem:[#allocation2 + $0x38] sm:$0xff]
      %v302 = vld [vmem:[#allocation2 + $0x40] sm:$0xff]
      %v303 = vld [vmem:[#allocation2 + $0x48] sm:$0xff]
      %v304 = vld [vmem:[#allocation2 + $0x50] sm:$0xff]
      %v305 = vld [vmem:[#allocation2 + $0x58] sm:$0xff]
      %v306 = vld [vmem:[#allocation2 + $0x60] sm:$0xff]
      %v307 = vld [vmem:[#allocation2 + $0x68] sm:$0xff]
      %v308 = vld [vmem:[#allocation2 + $0x70] sm:$0xff]
      %v309 = vld [vmem:[#allocation2 + $0x78] sm:$0xff]
      %v310 = vld [vmem:[#allocation2 + $0x80] sm:$0xff]
      %v311 = vld [vmem:[#allocation2 + $0x88] sm:$0xff]
      %v312 = vld [vmem:[#allocation2 + $0x90] sm:$0xff]
      %v313 = vld [vmem:[#allocation2 + $0x98] sm:$0xff]
      %v314 = vld [vmem:[#allocation2 + $0xa0] sm:$0xff]
      %v315 = vld [vmem:[#allocation2 + $0xa8] sm:$0xff]
      %v316 = vld [vmem:[#allocation2 + $0xb0] sm:$0xff]
      %v317 = vld [vmem:[#allocation2 + $0xb8] sm:$0xff]
      %v318 = vld [vmem:[#allocation2 + $0xc0] sm:$0xff]
      %v319 = vld [vmem:[#allocation2 + $0xc8] sm:$0xff]
      %v320 = vld [vmem:[#allocation2 + $0xd0] sm:$0xff]
      %v321 = vld [vmem:[#allocation2 + $0xd8] sm:$0xff]
      %v322 = vld [vmem:[#allocation2 + $0xe0] sm:$0xff]
      %v323 = vld [vmem:[#allocation2 + $0xe8] sm:$0xff]
      %v324 = vld [vmem:[#allocation2 + $0xf0] sm:$0xff]
      %v325 = vld [vmem:[#allocation2 + $0xf8] sm:$0xff]
      %v326 = vld [vmem:[%s239] sm:$0xf]
      %v327 = vld [vmem:[%s239 + $0x4] sm:$0xf]
      %v328 = vld [vmem:[%s239 + $0x8] sm:$0xf]
      %v329 = vld [vmem:[%s239 + $0xc] sm:$0xf]
      %v330 = vld [vmem:[%s239 + $0x10] sm:$0xf]
      %v331 = vld [vmem:[%s239 + $0x14] sm:$0xf]
      %v332 = vld [vmem:[%s239 + $0x18] sm:$0xf]
      %v333 = vld [vmem:[%s239 + $0x1c] sm:$0xf]
      %v334 = vld [vmem:[%s239 + $0x20] sm:$0xf]
      %v335 = vld [vmem:[%s239 + $0x24] sm:$0xf]
      %v336 = vld [vmem:[%s239 + $0x28] sm:$0xf]
      %v337 = vld [vmem:[%s239 + $0x2c] sm:$0xf]
      %v338 = vld [vmem:[%s239 + $0x30] sm:$0xf]
      %v339 = vld [vmem:[%s239 + $0x34] sm:$0xf]
      %v340 = vld [vmem:[%s239 + $0x38] sm:$0xf]
      %v341 = vld [vmem:[%s239 + $0x3c] sm:$0xf]
      %v342 = vld [vmem:[%s239 + $0x40] sm:$0xf]
      %v343 = vld [vmem:[%s239 + $0x44] sm:$0xf]
      %v344 = vld [vmem:[%s239 + $0x48] sm:$0xf]
      %v345 = vld [vmem:[%s239 + $0x4c] sm:$0xf]
      %v346 = vld [vmem:[%s239 + $0x50] sm:$0xf]
      %v347 = vld [vmem:[%s239 + $0x54] sm:$0xf]
      %v348 = vld [vmem:[%s239 + $0x58] sm:$0xf]
      %v349 = vld [vmem:[%s239 + $0x5c] sm:$0xf]
      %v350 = vld [vmem:[%s239 + $0x60] sm:$0xf]
      %v351 = vld [vmem:[%s239 + $0x64] sm:$0xf]
      %v352 = vld [vmem:[%s239 + $0x68] sm:$0xf]
      %v353 = vld [vmem:[%s239 + $0x6c] sm:$0xf]
      %v354 = vld [vmem:[%s239 + $0x70] sm:$0xf]
      %v355 = vld [vmem:[%s239 + $0x74] sm:$0xf]
      %v356 = vld [vmem:[%s239 + $0x78] sm:$0xf]
      %v357 = vld [vmem:[%s239 + $0x7c] sm:$0xf]
      %v358 = vld [vmem:[%s245] sm:$0xf]
      %v359 = vld [vmem:[%s245 + $0x4] sm:$0xf]
      %v360 = vld [vmem:[%s245 + $0x8] sm:$0xf]
      %v361 = vld [vmem:[%s245 + $0xc] sm:$0xf]
      %v362 = vld [vmem:[%s245 + $0x10] sm:$0x3]
      %v395 = vunpack.c.l.b16 %v326
      %v396 = vunpack.c.l.b16 %v327
      %v397 = vunpack.c.l.b16 %v328
      %v398 = vunpack.c.l.b16 %v329
      %v399 = vunpack.c.l.b16 %v330
      %v400 = vunpack.c.l.b16 %v331
      %v401 = vunpack.c.l.b16 %v332
      %v402 = vunpack.c.l.b16 %v333
      %v403 = vunpack.c.l.b16 %v334
      %v404 = vunpack.c.l.b16 %v335
      %v405 = vunpack.c.l.b16 %v336
      %v406 = vunpack.c.l.b16 %v337
      %v407 = vunpack.c.l.b16 %v338
      %v408 = vunpack.c.l.b16 %v339
      %v409 = vunpack.c.l.b16 %v340
      %v410 = vunpack.c.l.b16 %v341
      %v411 = vunpack.c.l.b16 %v342
      %v412 = vunpack.c.l.b16 %v343
      %v413 = vunpack.c.l.b16 %v344
      %v414 = vunpack.c.l.b16 %v345
      %v415 = vunpack.c.l.b16 %v346
      %v416 = vunpack.c.l.b16 %v347
      %v417 = vunpack.c.l.b16 %v348
      %v418 = vunpack.c.l.b16 %v349
      %v419 = vunpack.c.l.b16 %v350
      %v420 = vunpack.c.l.b16 %v351
      %v421 = vunpack.c.l.b16 %v352
      %v422 = vunpack.c.l.b16 %v353
      %v423 = vunpack.c.l.b16 %v354
      %v424 = vunpack.c.l.b16 %v355
      %v425 = vunpack.c.l.b16 %v356
      %v426 = vunpack.c.l.b16 %v357
      %v427 = vpack.c.b16 %v396, %v395
      %v428 = vpack.c.b16 %v398, %v397
      %v429 = vpack.c.b16 %v400, %v399
      %v430 = vpack.c.b16 %v402, %v401
      %v431 = vpack.c.b16 %v404, %v403
      %v432 = vpack.c.b16 %v406, %v405
      %v433 = vpack.c.b16 %v408, %v407
      %v434 = vpack.c.b16 %v410, %v409
      %v435 = vpack.c.b16 %v412, %v411
      %v436 = vpack.c.b16 %v414, %v413
      %v437 = vpack.c.b16 %v416, %v415
      %v438 = vpack.c.b16 %v418, %v417
      %v439 = vpack.c.b16 %v420, %v419
      %v440 = vpack.c.b16 %v422, %v421
      %v441 = vpack.c.b16 %v424, %v423
      %v442 = vpack.c.b16 %v426, %v425
      %v448 = vunpack.c.l.b16 %v358
      %v449 = vunpack.c.l.b16 %v359
      %v450 = vunpack.c.l.b16 %v360
      %v451 = vunpack.c.l.b16 %v361
      %v452 = vunpack.c.l.b16 %v362
      %v453 = vpack.c.b16 %v449, %v448
      %v454 = vpack.c.b16 %v451, %v450
      %v455 = vpack.c.b16 %v452, %v452
      %vm458 = vcmask 293888
      %v460 = vsel %vm458, %v427, 0
      %v463 = vsel %vm458, %v428, 0
      %v466 = vsel %vm458, %v429, 0
      %v469 = vsel %vm458, %v430, 0
      %v472 = vsel %vm458, %v431, 0
      %v475 = vsel %vm458, %v432, 0
      %v478 = vsel %vm458, %v433, 0
      %v481 = vsel %vm458, %v434, 0
      %v484 = vsel %vm458, %v435, 0
      %v487 = vsel %vm458, %v436, 0
      %v490 = vsel %vm458, %v437, 0
      %v493 = vsel %vm458, %v438, 0
      %v496 = vsel %vm458, %v439, 0
      %v499 = vsel %vm458, %v440, 0
      %v502 = vsel %vm458, %v441, 0
      %v505 = vsel %vm458, %v442, 0
      %vm507 = vcmask 1041408
      %v509 = vsel %vm507, %v455, 0
      %511 = vmatprep.subr.bf16.mxu0 0
      %512 = vmatpush1.bf16.msra.mxu0 %v453
      %513 = vmatprep.subr.bf16.mxu0 0
      %514 = vmatpush1.bf16.msra.mxu0 %v454
      %515 = vmatprep.subr.bf16.mxu0 0
      %516 = vmatpush1.bf16.msra.mxu0 %v509
      %517 = vmatprep.subr.bf16.mxu0 0
      %518 = vmatpush1.bf16.msra.mxu0 0
      %519 = vmatprep.subr.bf16.mxu0 0
      %520 = vmatpush1.bf16.msra.mxu0 0
      %521 = vmatprep.subr.bf16.mxu0 0
      %522 = vmatpush1.bf16.msra.mxu0 0
      %523 = vmatprep.subr.bf16.mxu0 0
      %524 = vmatpush1.bf16.msra.mxu0 0
      %525 = vmatprep.subr.bf16.mxu0 0
      %526 = vmatpush1.bf16.msra.mxu0 0
      %527 = vmatprep.subr.bf16.mxu0 0
      %528 = vmatpush1.bf16.msra.mxu0 0
      %529 = vmatprep.subr.bf16.mxu0 0
      %530 = vmatpush1.bf16.msra.mxu0 0
      %531 = vmatprep.subr.bf16.mxu0 0
      %532 = vmatpush1.bf16.msra.mxu0 0
      %533 = vmatprep.subr.bf16.mxu0 0
      %534 = vmatpush1.bf16.msra.mxu0 0
      %535 = vmatprep.subr.bf16.mxu0 0
      %536 = vmatpush1.bf16.msra.mxu0 0
      %537 = vmatprep.subr.bf16.mxu0 0
      %538 = vmatpush1.bf16.msra.mxu0 0
      %539 = vmatprep.subr.bf16.mxu0 0
      %540 = vmatpush1.bf16.msra.mxu0 0
      %541 = vmatprep.subr.bf16.mxu0 0
      %542 = vmatpush1.bf16.msra.mxu0 0
      %543 = vmatprep.mubr.bf16.mxu0 0
      %544 = vmatmul.mubr.bf16.gmra.mrb[0].mxu0 %v460
      %v545 = vpop.f32.mrb[0].mxu0
      %v546 = vadd.f32 0.0, %v545
      %v547 = vpop.f32.mrb[0].mxu0
      %v548 = vpop.f32.mrb[0].mxu0
      %v549 = vadd.f32 0.0, %v548
      %v550 = vpop.f32.mrb[0].mxu0
      %551 = vmatprep.mubr.bf16.mxu0 0
      %552 = vmatmul.mubr.bf16.gmra.mrb[0].mxu0 %v463
      %v553 = vpop.f32.mrb[0].mxu0
      %v554 = vadd.f32 0.0, %v553
      %v555 = vpop.f32.mrb[0].mxu0
      %v556 = vpop.f32.mrb[0].mxu0
      %v557 = vadd.f32 0.0, %v556
      %v558 = vpop.f32.mrb[0].mxu0
      %559 = vmatprep.mubr.bf16.mxu0 0
      %560 = vmatmul.mubr.bf16.gmra.mrb[0].mxu0 %v466
      %v561 = vpop.f32.mrb[0].mxu0
      %v562 = vadd.f32 0.0, %v561
      %v563 = vpop.f32.mrb[0].mxu0
      %v564 = vpop.f32.mrb[0].mxu0
      %v565 = vadd.f32 0.0, %v564
      %v566 = vpop.f32.mrb[0].mxu0
      %567 = vmatprep.mubr.bf16.mxu0 0
      %568 = vmatmul.mubr.bf16.gmra.mrb[0].mxu0 %v469
      %v569 = vpop.f32.mrb[0].mxu0
      %v570 = vadd.f32 0.0, %v569
      %v571 = vpop.f32.mrb[0].mxu0
      %v572 = vpop.f32.mrb[0].mxu0
      %v573 = vadd.f32 0.0, %v572
      %v574 = vpop.f32.mrb[0].mxu0
      %575 = vmatprep.mubr.bf16.mxu0 0
      %576 = vmatmul.mubr.bf16.gmra.mrb[0].mxu0 %v472
      %v577 = vpop.f32.mrb[0].mxu0
      %v578 = vadd.f32 0.0, %v577
      %v579 = vpop.f32.mrb[0].mxu0
      %v580 = vpop.f32.mrb[0].mxu0
      %v581 = vadd.f32 0.0, %v580
      %v582 = vpop.f32.mrb[0].mxu0
      %583 = vmatprep.mubr.bf16.mxu0 0
      %584 = vmatmul.mubr.bf16.gmra.mrb[0].mxu0 %v475
      %v585 = vpop.f32.mrb[0].mxu0
      %v586 = vadd.f32 0.0, %v585
      %v587 = vpop.f32.mrb[0].mxu0
      %v588 = vpop.f32.mrb[0].mxu0
      %v589 = vadd.f32 0.0, %v588
      %v590 = vpop.f32.mrb[0].mxu0
      %591 = vmatprep.mubr.bf16.mxu0 0
      %592 = vmatmul.mubr.bf16.gmra.mrb[0].mxu0 %v478
      %v593 = vpop.f32.mrb[0].mxu0
      %v594 = vadd.f32 0.0, %v593
      %v595 = vpop.f32.mrb[0].mxu0
      %v596 = vpop.f32.mrb[0].mxu0
      %v597 = vadd.f32 0.0, %v596
      %v598 = vpop.f32.mrb[0].mxu0
      %599 = vmatprep.mubr.bf16.mxu0 0
      %600 = vmatmul.mubr.bf16.gmra.mrb[0].mxu0 %v481
      %v601 = vpop.f32.mrb[0].mxu0
      %v602 = vadd.f32 0.0, %v601
      %v603 = vpop.f32.mrb[0].mxu0
      %v604 = vpop.f32.mrb[0].mxu0
      %v605 = vadd.f32 0.0, %v604
      %v606 = vpop.f32.mrb[0].mxu0
      %607 = vmatprep.mubr.bf16.mxu0 0
      %608 = vmatmul.mubr.bf16.gmra.mrb[0].mxu0 %v484
      %v609 = vpop.f32.mrb[0].mxu0
      %v610 = vadd.f32 0.0, %v609
      %v611 = vpop.f32.mrb[0].mxu0
      %v612 = vpop.f32.mrb[0].mxu0
      %v613 = vadd.f32 0.0, %v612
      %v614 = vpop.f32.mrb[0].mxu0
      %615 = vmatprep.mubr.bf16.mxu0 0
      %616 = vmatmul.mubr.bf16.gmra.mrb[0].mxu0 %v487
      %v617 = vpop.f32.mrb[0].mxu0
      %v618 = vadd.f32 0.0, %v617
      %v619 = vpop.f32.mrb[0].mxu0
      %v620 = vpop.f32.mrb[0].mxu0
      %v621 = vadd.f32 0.0, %v620
      %v622 = vpop.f32.mrb[0].mxu0
      %623 = vmatprep.mubr.bf16.mxu0 0
      %624 = vmatmul.mubr.bf16.gmra.mrb[0].mxu0 %v490
      %v625 = vpop.f32.mrb[0].mxu0
      %v626 = vadd.f32 0.0, %v625
      %v627 = vpop.f32.mrb[0].mxu0
      %v628 = vpop.f32.mrb[0].mxu0
      %v629 = vadd.f32 0.0, %v628
      %v630 = vpop.f32.mrb[0].mxu0
      %631 = vmatprep.mubr.bf16.mxu0 0
      %632 = vmatmul.mubr.bf16.gmra.mrb[0].mxu0 %v493
      %v633 = vpop.f32.mrb[0].mxu0
      %v634 = vadd.f32 0.0, %v633
      %v635 = vpop.f32.mrb[0].mxu0
      %v636 = vpop.f32.mrb[0].mxu0
      %v637 = vadd.f32 0.0, %v636
      %v638 = vpop.f32.mrb[0].mxu0
      %639 = vmatprep.mubr.bf16.mxu0 0
      %640 = vmatmul.mubr.bf16.gmra.mrb[0].mxu0 %v496
      %v641 = vpop.f32.mrb[0].mxu0
      %v642 = vadd.f32 0.0, %v641
      %v643 = vpop.f32.mrb[0].mxu0
      %v644 = vpop.f32.mrb[0].mxu0
      %v645 = vadd.f32 0.0, %v644
      %v646 = vpop.f32.mrb[0].mxu0
      %647 = vmatprep.mubr.bf16.mxu0 0
      %648 = vmatmul.mubr.bf16.gmra.mrb[0].mxu0 %v499
      %v649 = vpop.f32.mrb[0].mxu0
      %v650 = vadd.f32 0.0, %v649
      %v651 = vpop.f32.mrb[0].mxu0
      %v652 = vpop.f32.mrb[0].mxu0
      %v653 = vadd.f32 0.0, %v652
      %v654 = vpop.f32.mrb[0].mxu0
      %655 = vmatprep.mubr.bf16.mxu0 0
      %656 = vmatmul.mubr.bf16.gmra.mrb[0].mxu0 %v502
      %v657 = vpop.f32.mrb[0].mxu0
      %v658 = vadd.f32 0.0, %v657
      %v659 = vpop.f32.mrb[0].mxu0
      %v660 = vpop.f32.mrb[0].mxu0
      %v661 = vadd.f32 0.0, %v660
      %v662 = vpop.f32.mrb[0].mxu0
      %663 = vmatprep.mubr.bf16.mxu0 0
      %664 = vmatmul.mubr.bf16.gmra.mrb[0].mxu0 %v505
      %v665 = vpop.f32.mrb[0].mxu0
      %v666 = vadd.f32 0.0, %v665
      %v667 = vpop.f32.mrb[0].mxu0
      %v668 = vpop.f32.mrb[0].mxu0
      %v669 = vadd.f32 0.0, %v668
      %v670 = vpop.f32.mrb[0].mxu0
      %671 = vdwg.mxu0
      %v672 = vadd.f32 %v294, %v546
      %v673 = vadd.f32 %v295, %v549
      %v674 = vadd.f32 %v296, %v554
      %v675 = vadd.f32 %v297, %v557
      %v676 = vadd.f32 %v298, %v562
      %v677 = vadd.f32 %v299, %v565
      %v678 = vadd.f32 %v300, %v570
      %v679 = vadd.f32 %v301, %v573
      %v680 = vadd.f32 %v302, %v578
      %v681 = vadd.f32 %v303, %v581
      %v682 = vadd.f32 %v304, %v586
      %v683 = vadd.f32 %v305, %v589
      %v684 = vadd.f32 %v306, %v594
      %v685 = vadd.f32 %v307, %v597
      %v686 = vadd.f32 %v308, %v602
      %v687 = vadd.f32 %v309, %v605
      %v688 = vadd.f32 %v310, %v610
      %v689 = vadd.f32 %v311, %v613
      %v690 = vadd.f32 %v312, %v618
      %v691 = vadd.f32 %v313, %v621
      %v692 = vadd.f32 %v314, %v626
      %v693 = vadd.f32 %v315, %v629
      %v694 = vadd.f32 %v316, %v634
      %v695 = vadd.f32 %v317, %v637
      %v696 = vadd.f32 %v318, %v642
      %v697 = vadd.f32 %v319, %v645
      %v698 = vadd.f32 %v320, %v650
      %v699 = vadd.f32 %v321, %v653
      %v700 = vadd.f32 %v322, %v658
      %v701 = vadd.f32 %v323, %v661
      %v702 = vadd.f32 %v324, %v666
      %v703 = vadd.f32 %v325, %v669
      %704 = vst [vmem:[#allocation2] sm:$0xff] %v672
      %705 = vst [vmem:[#allocation2 + $0x8] sm:$0xff] %v673
      %706 = vst [vmem:[#allocation2 + $0x10] sm:$0xff] %v674
      %707 = vst [vmem:[#allocation2 + $0x18] sm:$0xff] %v675
      %708 = vst [vmem:[#allocation2 + $0x20] sm:$0xff] %v676
      %709 = vst [vmem:[#allocation2 + $0x28] sm:$0xff] %v677
      %710 = vst [vmem:[#allocation2 + $0x30] sm:$0xff] %v678
      %711 = vst [vmem:[#allocation2 + $0x38] sm:$0xff] %v679
      %712 = vst [vmem:[#allocation2 + $0x40] sm:$0xff] %v680
      %713 = vst [vmem:[#allocation2 + $0x48] sm:$0xff] %v681
      %714 = vst [vmem:[#allocation2 + $0x50] sm:$0xff] %v682
      %715 = vst [vmem:[#allocation2 + $0x58] sm:$0xff] %v683
      %716 = vst [vmem:[#allocation2 + $0x60] sm:$0xff] %v684
      %717 = vst [vmem:[#allocation2 + $0x68] sm:$0xff] %v685
      %718 = vst [vmem:[#allocation2 + $0x70] sm:$0xff] %v686
      %719 = vst [vmem:[#allocation2 + $0x78] sm:$0xff] %v687
      %720 = vst [vmem:[#allocation2 + $0x80] sm:$0xff] %v688
      %721 = vst [vmem:[#allocation2 + $0x88] sm:$0xff] %v689
      %722 = vst [vmem:[#allocation2 + $0x90] sm:$0xff] %v690
      %723 = vst [vmem:[#allocation2 + $0x98] sm:$0xff] %v691
      %724 = vst [vmem:[#allocation2 + $0xa0] sm:$0xff] %v692
      %725 = vst [vmem:[#allocation2 + $0xa8] sm:$0xff] %v693
      %726 = vst [vmem:[#allocation2 + $0xb0] sm:$0xff] %v694
      %727 = vst [vmem:[#allocation2 + $0xb8] sm:$0xff] %v695
      %728 = vst [vmem:[#allocation2 + $0xc0] sm:$0xff] %v696
      %729 = vst [vmem:[#allocation2 + $0xc8] sm:$0xff] %v697
      %730 = vst [vmem:[#allocation2 + $0xd0] sm:$0xff] %v698
      %731 = vst [vmem:[#allocation2 + $0xd8] sm:$0xff] %v699
      %732 = vst [vmem:[#allocation2 + $0xe0] sm:$0xff] %v700
      %733 = vst [vmem:[#allocation2 + $0xe8] sm:$0xff] %v701
      %734 = vst [vmem:[#allocation2 + $0xf0] sm:$0xff] %v702
      %735 = vst [vmem:[#allocation2 + $0xf8] sm:$0xff] %v703
      // Predicated region
      $region37: #{_forward.6} parent=31 // pred_check
        %p736 = pneg %p258
      $region38: #{_forward.6} parent=31 // pred_check_branch
        %738 = sbr.rel (%p736) target = $region40
      $region39: #{_forward.6} parent=31 // pred_region
        %v739 = vld [vmem:[#allocation2] sm:$0xff]
        %v740 = vld [vmem:[#allocation2 + $0x8] sm:$0xff]
        %v741 = vld [vmem:[#allocation2 + $0x10] sm:$0xff]
        %v742 = vld [vmem:[#allocation2 + $0x18] sm:$0xff]
        %v743 = vld [vmem:[#allocation2 + $0x20] sm:$0xff]
        %v744 = vld [vmem:[#allocation2 + $0x28] sm:$0xff]
        %v745 = vld [vmem:[#allocation2 + $0x30] sm:$0xff]
        %v746 = vld [vmem:[#allocation2 + $0x38] sm:$0xff]
        %v747 = vld [vmem:[#allocation2 + $0x40] sm:$0xff]
        %v748 = vld [vmem:[#allocation2 + $0x48] sm:$0xff]
        %v749 = vld [vmem:[#allocation2 + $0x50] sm:$0xff]
        %v750 = vld [vmem:[#allocation2 + $0x58] sm:$0xff]
        %v751 = vld [vmem:[#allocation2 + $0x60] sm:$0xff]
        %v752 = vld [vmem:[#allocation2 + $0x68] sm:$0xff]
        %v753 = vld [vmem:[#allocation2 + $0x70] sm:$0xff]
        %v754 = vld [vmem:[#allocation2 + $0x78] sm:$0xff]
        %v755 = vld [vmem:[#allocation2 + $0x80] sm:$0xff]
        %v756 = vld [vmem:[#allocation2 + $0x88] sm:$0xff]
        %v757 = vld [vmem:[#allocation2 + $0x90] sm:$0xff]
        %v758 = vld [vmem:[#allocation2 + $0x98] sm:$0xff]
        %v759 = vld [vmem:[#allocation2 + $0xa0] sm:$0xff]
        %v760 = vld [vmem:[#allocation2 + $0xa8] sm:$0xff]
        %v761 = vld [vmem:[#allocation2 + $0xb0] sm:$0xff]
        %v762 = vld [vmem:[#allocation2 + $0xb8] sm:$0xff]
        %v763 = vld [vmem:[#allocation2 + $0xc0] sm:$0xff]
        %v764 = vld [vmem:[#allocation2 + $0xc8] sm:$0xff]
        %v765 = vld [vmem:[#allocation2 + $0xd0] sm:$0xff]
        %v766 = vld [vmem:[#allocation2 + $0xd8] sm:$0xff]
        %v767 = vld [vmem:[#allocation2 + $0xe0] sm:$0xff]
        %v768 = vld [vmem:[#allocation2 + $0xe8] sm:$0xff]
        %v769 = vld [vmem:[#allocation2 + $0xf0] sm:$0xff]
        %v770 = vld [vmem:[#allocation2 + $0xf8] sm:$0xff]
        %v771 = vld [vmem:[%s2] sm:$0x1]
        %v773 = vlaneseq
        %v774 = vshrl.u32 %v773, 7
        %v775 = vsub.s32 0, %v774
        %v776 = vrot.slane %v771, %v775
        %v778 = vadd.f32 %v739, %v776
        %v779 = vadd.f32 %v740, %v776
        %v780 = vadd.f32 %v741, %v776
        %v781 = vadd.f32 %v742, %v776
        %v782 = vadd.f32 %v743, %v776
        %v783 = vadd.f32 %v744, %v776
        %v784 = vadd.f32 %v745, %v776
        %v785 = vadd.f32 %v746, %v776
        %v786 = vadd.f32 %v747, %v776
        %v787 = vadd.f32 %v748, %v776
        %v788 = vadd.f32 %v749, %v776
        %v789 = vadd.f32 %v750, %v776
        %v790 = vadd.f32 %v751, %v776
        %v791 = vadd.f32 %v752, %v776
        %v792 = vadd.f32 %v753, %v776
        %v793 = vadd.f32 %v754, %v776
        %v794 = vadd.f32 %v755, %v776
        %v795 = vadd.f32 %v756, %v776
        %v796 = vadd.f32 %v757, %v776
        %v797 = vadd.f32 %v758, %v776
        %v798 = vadd.f32 %v759, %v776
        %v799 = vadd.f32 %v760, %v776
        %v800 = vadd.f32 %v761, %v776
        %v801 = vadd.f32 %v762, %v776
        %v802 = vadd.f32 %v763, %v776
        %v803 = vadd.f32 %v764, %v776
        %v804 = vadd.f32 %v765, %v776
        %v805 = vadd.f32 %v766, %v776
        %v806 = vadd.f32 %v767, %v776
        %v807 = vadd.f32 %v768, %v776
        %v808 = vadd.f32 %v769, %v776
        %v809 = vadd.f32 %v770, %v776
        %810 = vst [vmem:[%s251] sm:$0xff] %v778
        %811 = vst [vmem:[%s251 + $0x8] sm:$0xff] %v779
        %812 = vst [vmem:[%s251 + $0x10] sm:$0xff] %v780
        %813 = vst [vmem:[%s251 + $0x18] sm:$0xff] %v781
        %814 = vst [vmem:[%s251 + $0x20] sm:$0xff] %v782
        %815 = vst [vmem:[%s251 + $0x28] sm:$0xff] %v783
        %816 = vst [vmem:[%s251 + $0x30] sm:$0xff] %v784
        %817 = vst [vmem:[%s251 + $0x38] sm:$0xff] %v785
        %818 = vst [vmem:[%s251 + $0x40] sm:$0xff] %v786
        %819 = vst [vmem:[%s251 + $0x48] sm:$0xff] %v787
        %820 = vst [vmem:[%s251 + $0x50] sm:$0xff] %v788
        %821 = vst [vmem:[%s251 + $0x58] sm:$0xff] %v789
        %822 = vst [vmem:[%s251 + $0x60] sm:$0xff] %v790
        %823 = vst [vmem:[%s251 + $0x68] sm:$0xff] %v791
        %824 = vst [vmem:[%s251 + $0x70] sm:$0xff] %v792
        %825 = vst [vmem:[%s251 + $0x78] sm:$0xff] %v793
        %826 = vst [vmem:[%s251 + $0x80] sm:$0xff] %v794
        %827 = vst [vmem:[%s251 + $0x88] sm:$0xff] %v795
        %828 = vst [vmem:[%s251 + $0x90] sm:$0xff] %v796
        %829 = vst [vmem:[%s251 + $0x98] sm:$0xff] %v797
        %830 = vst [vmem:[%s251 + $0xa0] sm:$0xff] %v798
        %831 = vst [vmem:[%s251 + $0xa8] sm:$0xff] %v799
        %832 = vst [vmem:[%s251 + $0xb0] sm:$0xff] %v800
        %833 = vst [vmem:[%s251 + $0xb8] sm:$0xff] %v801
        %834 = vst [vmem:[%s251 + $0xc0] sm:$0xff] %v802
        %835 = vst [vmem:[%s251 + $0xc8] sm:$0xff] %v803
        %836 = vst [vmem:[%s251 + $0xd0] sm:$0xff] %v804
        %837 = vst [vmem:[%s251 + $0xd8] sm:$0xff] %v805
        %838 = vst [vmem:[%s251 + $0xe0] sm:$0xff] %v806
        %839 = vst [vmem:[%s251 + $0xe8] sm:$0xff] %v807
        %840 = vst [vmem:[%s251 + $0xf0] sm:$0xff] %v808
        %841 = vst [vmem:[%s251 + $0xf8] sm:$0xff] %v809
        %v842 = vadd.f32 %v778, %v779
        %v843 = vadd.f32 %v842, %v780
        %v844 = vadd.f32 %v843, %v781
        %v845 = vadd.f32 %v844, %v782
        %v846 = vadd.f32 %v845, %v783
        %v847 = vadd.f32 %v846, %v784
        %v848 = vadd.f32 %v847, %v785
        %v849 = vadd.f32 %v848, %v786
        %v850 = vadd.f32 %v849, %v787
        %v851 = vadd.f32 %v850, %v788
        %v852 = vadd.f32 %v851, %v789
        %v853 = vadd.f32 %v852, %v790
        %v854 = vadd.f32 %v853, %v791
        %v855 = vadd.f32 %v854, %v792
        %v856 = vadd.f32 %v855, %v793
        %v857 = vadd.f32 %v856, %v794
        %v858 = vadd.f32 %v857, %v795
        %v859 = vadd.f32 %v858, %v796
        %v860 = vadd.f32 %v859, %v797
        %v861 = vadd.f32 %v860, %v798
        %v862 = vadd.f32 %v861, %v799
        %v863 = vadd.f32 %v862, %v800
        %v864 = vadd.f32 %v863, %v801
        %v865 = vadd.f32 %v864, %v802
        %v866 = vadd.f32 %v865, %v803
        %v867 = vadd.f32 %v866, %v804
        %v868 = vadd.f32 %v867, %v805
        %v869 = vadd.f32 %v868, %v806
        %v870 = vadd.f32 %v869, %v807
        %v871 = vadd.f32 %v870, %v808
        %v872 = vadd.f32 %v871, %v809
        %v873 = vrot.slane %v872, 4
        %v874 = vadd.f32 %v872, %v873
        %v875 = vrot.slane %v874, 2
        %v876 = vadd.f32 %v874, %v875
        %v877 = vrot.slane %v876, 1
        %v878 = vadd.f32 %v876, %v877
        %v879 = vmul.f32 %v778, %v778
        %v880 = vmul.f32 %v779, %v779
        %v881 = vmul.f32 %v780, %v780
        %v882 = vmul.f32 %v781, %v781
        %v883 = vmul.f32 %v782, %v782
        %v884 = vmul.f32 %v783, %v783
        %v885 = vmul.f32 %v784, %v784
        %v886 = vmul.f32 %v785, %v785
        %v887 = vmul.f32 %v786, %v786
        %v888 = vmul.f32 %v787, %v787
        %v889 = vmul.f32 %v788, %v788
        %v890 = vmul.f32 %v789, %v789
        %v891 = vmul.f32 %v790, %v790
        %v892 = vmul.f32 %v791, %v791
        %v893 = vmul.f32 %v792, %v792
        %v894 = vmul.f32 %v793, %v793
        %v895 = vmul.f32 %v794, %v794
        %v896 = vmul.f32 %v795, %v795
        %v897 = vmul.f32 %v796, %v796
        %v898 = vmul.f32 %v797, %v797
        %v899 = vmul.f32 %v798, %v798
        %v900 = vmul.f32 %v799, %v799
        %v901 = vmul.f32 %v800, %v800
        %v902 = vmul.f32 %v801, %v801
        %v903 = vmul.f32 %v802, %v802
        %v904 = vmul.f32 %v803, %v803
        %v905 = vmul.f32 %v804, %v804
        %v906 = vmul.f32 %v805, %v805
        %v907 = vmul.f32 %v806, %v806
        %v908 = vmul.f32 %v807, %v807
        %v909 = vmul.f32 %v808, %v808
        %v910 = vmul.f32 %v809, %v809
        %v911 = vadd.f32 %v879, %v880
        %v912 = vadd.f32 %v911, %v881
        %v913 = vadd.f32 %v912, %v882
        %v914 = vadd.f32 %v913, %v883
        %v915 = vadd.f32 %v914, %v884
        %v916 = vadd.f32 %v915, %v885
        %v917 = vadd.f32 %v916, %v886
        %v918 = vadd.f32 %v917, %v887
        %v919 = vadd.f32 %v918, %v888
        %v920 = vadd.f32 %v919, %v889
        %v921 = vadd.f32 %v920, %v890
        %v922 = vadd.f32 %v921, %v891
        %v923 = vadd.f32 %v922, %v892
        %v924 = vadd.f32 %v923, %v893
        %v925 = vadd.f32 %v924, %v894
        %v926 = vadd.f32 %v925, %v895
        %v927 = vadd.f32 %v926, %v896
        %v928 = vadd.f32 %v927, %v897
        %v929 = vadd.f32 %v928, %v898
        %v930 = vadd.f32 %v929, %v899
        %v931 = vadd.f32 %v930, %v900
        %v932 = vadd.f32 %v931, %v901
        %v933 = vadd.f32 %v932, %v902
        %v934 = vadd.f32 %v933, %v903
        %v935 = vadd.f32 %v934, %v904
        %v936 = vadd.f32 %v935, %v905
        %v937 = vadd.f32 %v936, %v906
        %v938 = vadd.f32 %v937, %v907
        %v939 = vadd.f32 %v938, %v908
        %v940 = vadd.f32 %v939, %v909
        %v941 = vadd.f32 %v940, %v910
        %v942 = vrot.slane %v941, 4
        %v943 = vadd.f32 %v941, %v942
        %v944 = vrot.slane %v943, 2
        %v945 = vadd.f32 %v943, %v944
        %v946 = vrot.slane %v945, 1
        %v947 = vadd.f32 %v945, %v946
        %v948 = vlaneseq
        %v949 = vshrl.u32 %v948, 7
        %vm950 = vcmp.eq.s32.totalorder %v949, 0
        %v951 = vsel %vm950, %v878, %v947
        %952 = vst [vmem:[%s256] sm:$0x3] %v951
      $region40: #{_forward.6} parent=31 // pred_fallthru
        _
      %s953 = smul.u32 32, %s20
      %p954 = scmp.lt.s32.totalorder %s953, 63
      %s955 = scalar_select %p954, %s953, 63
      %s956 = smul.addr %s955, 8
      %s957 = scalar_lea.vmem %s3, %s956
      %p958 = scmp.lt.s32.totalorder %s20, 1
      %s959 = scalar_select %p958, %s20, 1
      %s960 = smul.addr %s959, 2
      %s961 = scalar_lea.vmem %s4, %s960
      // Predicated region
      $region41: #{_forward.6} parent=31 // pred_check
        %p962 = pneg %p121
      $region42: #{_forward.6} parent=31 // pred_check_branch
        %964 = sbr.rel (%p962) target = $region44
      $region43: #{_forward.6} parent=31 // pred_region
        %s965 = smul.u32 32, %s20
      $region44: #{_forward.6} parent=31 // pred_fallthru
        _
      // Predicated region
      $region45: #{_forward.6} parent=31 // pred_check
        %p966 = pneg %p147
      $region46: #{_forward.6} parent=31 // pred_check_branch
        %968 = sbr.rel (%p966) target = $region48
      $region47: #{_forward.6} parent=31 // pred_region
        _
      $region48: #{_forward.6} parent=31 // pred_fallthru
        _
    $region32: #{_forward.6} parent=5 // pred_fallthru
      _
    %p969 = scmp.le.s32.totalorder 2, %s11
    // Predicated region
    $region49: #{_forward.6} parent=5 // pred_check
      %p970 = pneg %p969
    $region50: #{_forward.6} parent=5 // pred_check_branch
      %972 = sbr.rel (%p970) target = $region52
    $region51: #{_forward.6} parent=5 // pred_region
      %s973 = ssub.s32 %s11, 2
      // Predicated region
      $region53: #{_forward.6} parent=51 // pred_check
        %p974 = pneg %p127
      $region54: #{_forward.6} parent=51 // pred_check_branch
        %976 = sbr.rel (%p974) target = $region56
      $region55: #{_forward.6} parent=51 // pred_region
        %s977 = smul.u32 32, %s22
        %p978 = scmp.lt.s32.totalorder %s977, 63
        %s979 = scalar_select %p978, %s977, 63
        %s980 = smul.addr %s979, 8
        %s981 = scalar_lea.vmem %s3, %s980
      $region56: #{_forward.6} parent=51 // pred_fallthru
        _
      // Predicated region
      $region57: #{_forward.6} parent=51 // pred_check
        %p982 = pneg %p153
      $region58: #{_forward.6} parent=51 // pred_check_branch
        %984 = sbr.rel (%p982) target = $region60
      $region59: #{_forward.6} parent=51 // pred_region
        %p985 = scmp.lt.s32.totalorder %s22, 1
        %s986 = scalar_select %p985, %s22, 1
        %s987 = smul.addr %s986, 2
        %s988 = scalar_lea.vmem %s4, %s987
      $region60: #{_forward.6} parent=51 // pred_fallthru
        _
    $region52: #{_forward.6} parent=5 // pred_fallthru
      _
  $region6: #{_forward.6} parent=0 // loop_footer
    %s15 = sadd.s32 1, %s11
  $region7: #{_forward.6} parent=0 // loop_footer_branch
    %10 = sbr.rel target = $region3
  $region8: #{_forward.6} parent=0 // loop_exit
    _

// kernel: _forward.8
$region0: #{_forward.8}
  #allocation0 [shape = 'u32[]', space=smem, size = 0x4, offset = 0x4, fixed_abs, tag = 'smem constant byte address 0x4 - core index']
  #allocation1 [shape = 'u32[144,128]{1,0:T(1,128)}', space=vmem, size = 0x12000, scoped, tag = 'internal scratch']
  #allocation2 [shape = 'f32[512,128]{1,0:T(8,128)}', space=vmem, size = 0x40000, scoped, tag = 'scratch operand']
  %s0 = inlined_call_operand.vmem [shape: bf16[2048,128], index: 0, kind: input, shape index: {}]
  %s1 = inlined_call_operand.vmem [shape: bf16[128,128], index: 1, kind: input, shape index: {}]
  %s2 = inlined_call_operand.vmem [shape: f32[1,128], index: 2, kind: input, shape index: {}]
  %s3 = inlined_call_operand.vmem [shape: f32[2048,128], index: 3, kind: output, shape index: {0}]
  %s4 = inlined_call_operand.vmem [shape: f32[4,2,128], index: 4, kind: output, shape index: {1}]
  %5 = xla_tuple %s3, %s4
  %s6 = sld [smem:[#allocation0]]
  $region61: #{_forward.8} parent=0
    _
  %s8 = ssub.s32 1, %s6
  %s9 = scalar_select 0, %s8, %s6
  loop: start=0, step=1, limit=6
  $region2: #{_forward.8} parent=0 // loop_pre_header
    _
  $region3: #{_forward.8} parent=0 // loop_header
    %s11 = sphi 0, %s15
    %p12 = scmp.ge.s32.totalorder %s11, 6
    %s18 = sphi 0, %s30
    %s19 = sphi 0, %s26
    %s20 = sphi 0, %s18
    %s21 = sphi 0, %s19
    %s22 = sphi 0, %s20
    %s23 = sphi 0, %s21
    %s35 = sphi 0, %s37
    %s38 = sphi 0, %s35
    %s39 = sphi 0, %s38
    %s55 = sphi 0, %s39
    %s61 = sphi 0, %s63
    %s64 = sphi 0, %s61
    %s65 = sphi 0, %s64
    %s81 = sphi 0, %s65
    %s85 = sphi 0, %s85
    %s87 = sphi 0, %s85
    %s88 = sphi 0, %s87
    %s102 = sphi 0, %s88
    %s108 = sphi 0, %s110
    %s111 = sphi 0, %s108
    %s112 = sphi 0, %s111
    %s128 = sphi 0, %s112
    %s134 = sphi 0, %s136
    %s137 = sphi 0, %s134
    %s138 = sphi 0, %s137
    %s154 = sphi 0, %s138
  $region4: #{_forward.8} parent=0 // loop_header_branch
    %14 = sbr.rel (%p12) target = $region8
  $region5: #{_forward.8} parent=0 // loop_body
    %s16 = ssub.s32 %s11, 1
    %s17 = ssub.s32 %s11, 2
    %s24 = sadd.s32 1, %s19
    %p25 = scmp.ge.s32.totalorder %s24, 1
    %s26 = scalar_select %p25, 0, %s24
    %s27 = sadd.s32 1, %s18
    %s28 = scalar_select %p25, %s27, %s18
    %p29 = scmp.ge.s32.totalorder %s28, 4
    %s30 = scalar_select %p29, 0, %s28
    %s31 = ssub.s32 %s18, %s30
    %s32 = ssub.s32 %s19, %s26
    %s33 = sor.u32 %s31, %s32
    %p34 = scmp.eq.s32.totalorder %s33, 0
    %s36 = sadd.s32 %s35, 1
    %s37 = scalar_select %p34, %s35, %s36
    %p40 = pneg %p34
    %p41 = scmp.eq.s32.totalorder %s11, 3
    %p42 = por %p40, %p41
    %p43 = scmp.ne.s32.totalorder %s35, %s38
    %p44 = scmp.eq.s32.totalorder %s11, 0
    %p45 = por %p43, %p44
    %p46 = scmp.ne.s32.totalorder %s35, %s38
    %p47 = scmp.eq.s32.totalorder %s16, 3
    %p48 = por %p46, %p47
    %p49 = scmp.ne.s32.totalorder %s38, %s39
    %p50 = scmp.eq.s32.totalorder %s16, 0
    %p51 = por %p49, %p50
    %p52 = scmp.ne.s32.totalorder %s38, %s39
    %p53 = scmp.eq.s32.totalorder %s17, 3
    %p54 = por %p52, %p53
    %p56 = scmp.ne.s32.totalorder %s39, %s55
    %p57 = scmp.eq.s32.totalorder %s17, 0
    %p58 = por %p56, %p57
    %s59 = ssub.s32 %s19, %s26
    %p60 = scmp.eq.s32.totalorder %s59, 0
    %s62 = sadd.s32 %s61, 1
    %s63 = scalar_select %p60, %s61, %s62
    %p66 = pneg %p60
    %p67 = scmp.eq.s32.totalorder %s11, 3
    %p68 = por %p66, %p67
    %p69 = scmp.ne.s32.totalorder %s61, %s64
    %p70 = scmp.eq.s32.totalorder %s11, 0
    %p71 = por %p69, %p70
    %p72 = scmp.ne.s32.totalorder %s61, %s64
    %p73 = scmp.eq.s32.totalorder %s16, 3
    %p74 = por %p72, %p73
    %p75 = scmp.ne.s32.totalorder %s64, %s65
    %p76 = scmp.eq.s32.totalorder %s16, 0
    %p77 = por %p75, %p76
    %p78 = scmp.ne.s32.totalorder %s64, %s65
    %p79 = scmp.eq.s32.totalorder %s17, 3
    %p80 = por %p78, %p79
    %p82 = scmp.ne.s32.totalorder %s65, %s81
    %p83 = scmp.eq.s32.totalorder %s17, 0
    %p84 = por %p82, %p83
    %s86 = sadd.s32 %s85, 1
    %p89 = scmp.eq.s32.totalorder %s11, 3
    %p90 = scmp.ne.s32.totalorder %s85, %s87
    %p91 = scmp.eq.s32.totalorder %s11, 0
    %p92 = por %p90, %p91
    %p93 = scmp.ne.s32.totalorder %s85, %s87
    %p94 = scmp.eq.s32.totalorder %s16, 3
    %p95 = por %p93, %p94
    %p96 = scmp.ne.s32.totalorder %s87, %s88
    %p97 = scmp.eq.s32.totalorder %s16, 0
    %p98 = por %p96, %p97
    %p99 = scmp.ne.s32.totalorder %s87, %s88
    %p100 = scmp.eq.s32.totalorder %s17, 3
    %p101 = por %p99, %p100
    %p103 = scmp.ne.s32.totalorder %s88, %s102
    %p104 = scmp.eq.s32.totalorder %s17, 0
    %p105 = por %p103, %p104
    %s106 = ssub.s32 %s18, %s30
    %p107 = scmp.eq.s32.totalorder %s106, 0
    %s109 = sadd.s32 %s108, 1
    %s110 = scalar_select %p107, %s108, %s109
    %p113 = pneg %p107
    %p114 = scmp.eq.s32.totalorder %s11, 3
    %p115 = por %p113, %p114
    %p116 = scmp.ne.s32.totalorder %s108, %s111
    %p117 = scmp.eq.s32.totalorder %s11, 0
    %p118 = por %p116, %p117
    %p119 = scmp.ne.s32.totalorder %s108, %s111
    %p120 = scmp.eq.s32.totalorder %s16, 3
    %p121 = por %p119, %p120
    %p122 = scmp.ne.s32.totalorder %s111, %s112
    %p123 = scmp.eq.s32.totalorder %s16, 0
    %p124 = por %p122, %p123
    %p125 = scmp.ne.s32.totalorder %s111, %s112
    %p126 = scmp.eq.s32.totalorder %s17, 3
    %p127 = por %p125, %p126
    %p129 = scmp.ne.s32.totalorder %s112, %s128
    %p130 = scmp.eq.s32.totalorder %s17, 0
    %p131 = por %p129, %p130
    %s132 = ssub.s32 %s18, %s30
    %p133 = scmp.eq.s32.totalorder %s132, 0
    %s135 = sadd.s32 %s134, 1
    %s136 = scalar_select %p133, %s134, %s135
    %p139 = pneg %p133
    %p140 = scmp.eq.s32.totalorder %s11, 3
    %p141 = por %p139, %p140
    %p142 = scmp.ne.s32.totalorder %s134, %s137
    %p143 = scmp.eq.s32.totalorder %s11, 0
    %p144 = por %p142, %p143
    %p145 = scmp.ne.s32.totalorder %s134, %s137
    %p146 = scmp.eq.s32.totalorder %s16, 3
    %p147 = por %p145, %p146
    %p148 = scmp.ne.s32.totalorder %s137, %s138
    %p149 = scmp.eq.s32.totalorder %s16, 0
    %p150 = por %p148, %p149
    %p151 = scmp.ne.s32.totalorder %s137, %s138
    %p152 = scmp.eq.s32.totalorder %s17, 3
    %p153 = por %p151, %p152
    %p155 = scmp.ne.s32.totalorder %s138, %s154
    %p156 = scmp.eq.s32.totalorder %s17, 0
    %p157 = por %p155, %p156
    %p158 = scmp.le.s32.totalorder 1, %s11
    %p159 = scmp.lt.s32.totalorder %s11, 5
    %p160 = pnand %p158, %p159
    %p161 = pneg %p160
    // Predicated region
    $region9: #{_forward.8} parent=5 // pred_check
      _
    $region10: #{_forward.8} parent=5 // pred_check_branch
      %163 = sbr.rel (%p160) target = $region12
    $region11: #{_forward.8} parent=5 // pred_region
      %s164 = ssub.s32 %s11, 1
      // Predicated region
      $region13: #{_forward.8} parent=11 // pred_check
        %p165 = pneg %p77
      $region14: #{_forward.8} parent=11 // pred_check_branch
        %167 = sbr.rel (%p165) target = $region16
      $region15: #{_forward.8} parent=11 // pred_region
        %s168 = smul.u32 16, %s21
        %p169 = scmp.lt.s32.totalorder %s168, 15
        %s170 = scalar_select %p169, %s168, 15
        %s171 = smul.addr %s170, 4
        %s172 = scalar_lea.vmem %s1, %s171
        %s173 = smul.u32 16, %s21
      $region16: #{_forward.8} parent=11 // pred_fallthru
        _
      // Predicated region
      $region17: #{_forward.8} parent=11 // pred_check
        %p174 = pneg %p98
      $region18: #{_forward.8} parent=11 // pred_check_branch
        %176 = sbr.rel (%p174) target = $region20
      $region19: #{_forward.8} parent=11 // pred_region
        _
      $region20: #{_forward.8} parent=11 // pred_fallthru
        _
    $region12: #{_forward.8} parent=5 // pred_fallthru
      _
    %p177 = scmp.lt.s32.totalorder %s11, 4
    // Predicated region
    $region21: #{_forward.8} parent=5 // pred_check
      %p178 = pneg %p177
    $region22: #{_forward.8} parent=5 // pred_check_branch
      %180 = sbr.rel (%p178) target = $region24
    $region23: #{_forward.8} parent=5 // pred_region
      // Predicated region
      $region25: #{_forward.8} parent=23 // pred_check
        %p181 = pneg %p45
      $region26: #{_forward.8} parent=23 // pred_check_branch
        %183 = sbr.rel (%p181) target = $region28
      $region27: #{_forward.8} parent=23 // pred_region
        %s184 = smul.u32 64, %s18
        %p185 = scmp.lt.s32.totalorder %s184, 255
        %s186 = scalar_select %p185, %s184, 255
        %p187 = scmp.lt.s32.totalorder %s19, 0
        %s188 = scalar_select %p187, %s19, 0
        %s189 = sadd.s32 %s188, %s186
        %s190 = smul.addr %s189, 4
        %s191 = scalar_lea.vmem %s0, %s190
        %s192 = smul.u32 64, %s18
      $region28: #{_forward.8} parent=23 // pred_fallthru
        _
    $region24: #{_forward.8} parent=5 // pred_fallthru
      _
    %p193 = scmp.le.s32.totalorder 1, %s11
    %p194 = scmp.lt.s32.totalorder %s11, 5
    %p195 = pnand %p193, %p194
    %p196 = pneg %p195
    // Predicated region
    $region29: #{_forward.8} parent=5 // pred_check
      _
    $region30: #{_forward.8} parent=5 // pred_check_branch
      %198 = sbr.rel (%p195) target = $region32
    $region31: #{_forward.8} parent=5 // pred_region
      %s199 = ssub.s32 %s11, 1
      %s200 = smul.u32 64, %s20
      %p201 = scmp.lt.s32.totalorder %s200, 255
      %s202 = scalar_select %p201, %s200, 255
      %p203 = scmp.lt.s32.totalorder %s21, 0
      %s204 = scalar_select %p203, %s21, 0
      %s205 = sadd.s32 %s204, %s202
      %s206 = smul.addr %s205, 4
      %s207 = scalar_lea.vmem %s0, %s206
      %p208 = pneg %p51
      %p209 = pneg %p48
      %s210 = smul.u32 16, %s21
      %p211 = scmp.lt.s32.totalorder %s210, 15
      %s212 = scalar_select %p211, %s210, 15
      %s213 = smul.addr %s212, 4
      %s214 = scalar_lea.vmem %s1, %s213
      %p215 = pneg %p77
      %p216 = pneg %p74
      %p217 = pneg %p98
      %p218 = pneg %p95
      %p219 = pneg %p124
      %p220 = pneg %p121
      %s221 = smul.u32 64, %s20
      %p222 = scmp.lt.s32.totalorder %s221, 255
      %s223 = scalar_select %p222, %s221, 255
      %s224 = smul.addr %s223, 8
      %s225 = scalar_lea.vmem %s3, %s224
      %p226 = pneg %p150
      %p227 = pneg %p147
      %p228 = scmp.lt.s32.totalorder %s20, 3
      %s229 = scalar_select %p228, %s20, 3
      %s230 = smul.addr %s229, 2
      %s231 = scalar_lea.vmem %s4, %s230
      %s232 = smul.u32 64, %s20
      %p233 = scmp.lt.s32.totalorder %s232, 255
      %s234 = scalar_select %p233, %s232, 255
      %p235 = scmp.lt.s32.totalorder %s21, 0
      %s236 = scalar_select %p235, %s21, 0
      %s237 = sadd.s32 %s236, %s234
      %s238 = smul.addr %s237, 4
      %s239 = scalar_lea.vmem %s0, %s238
      %s240 = smul.u32 64, %s20
      %s241 = smul.u32 16, %s21
      %p242 = scmp.lt.s32.totalorder %s241, 15
      %s243 = scalar_select %p242, %s241, 15
      %s244 = smul.addr %s243, 4
      %s245 = scalar_lea.vmem %s1, %s244
      %s246 = smul.u32 16, %s21
      %s247 = smul.u32 64, %s20
      %p248 = scmp.lt.s32.totalorder %s247, 255
      %s249 = scalar_select %p248, %s247, 255
      %s250 = smul.addr %s249, 8
      %s251 = scalar_lea.vmem %s3, %s250
      %s252 = smul.u32 64, %s20
      %p253 = scmp.lt.s32.totalorder %s20, 3
      %s254 = scalar_select %p253, %s20, 3
      %s255 = smul.addr %s254, 2
      %s256 = scalar_lea.vmem %s4, %s255
      %p258 = scmp.eq.s32.totalorder %s21, 0
      // Predicated region
      $region33: #{_forward.8} parent=31 // pred_check
        %p259 = pneg %p258
      $region34: #{_forward.8} parent=31 // pred_check_branch
        %261 = sbr.rel (%p259) target = $region36
      $region35: #{_forward.8} parent=31 // pred_region
        %262 = vst [vmem:[#allocation2] sm:$0xff] 0.0
        %263 = vst [vmem:[#allocation2 + $0x8] sm:$0xff] 0.0
        %264 = vst [vmem:[#allocation2 + $0x10] sm:$0xff] 0.0
        %265 = vst [vmem:[#allocation2 + $0x18] sm:$0xff] 0.0
        %266 = vst [vmem:[#allocation2 + $0x20] sm:$0xff] 0.0
        %267 = vst [vmem:[#allocation2 + $0x28] sm:$0xff] 0.0
        %268 = vst [vmem:[#allocation2 + $0x30] sm:$0xff] 0.0
        %269 = vst [vmem:[#allocation2 + $0x38] sm:$0xff] 0.0
        %270 = vst [vmem:[#allocation2 + $0x40] sm:$0xff] 0.0
        %271 = vst [vmem:[#allocation2 + $0x48] sm:$0xff] 0.0
        %272 = vst [vmem:[#allocation2 + $0x50] sm:$0xff] 0.0
        %273 = vst [vmem:[#allocation2 + $0x58] sm:$0xff] 0.0
        %274 = vst [vmem:[#allocation2 + $0x60] sm:$0xff] 0.0
        %275 = vst [vmem:[#allocation2 + $0x68] sm:$0xff] 0.0
        %276 = vst [vmem:[#allocation2 + $0x70] sm:$0xff] 0.0
        %277 = vst [vmem:[#allocation2 + $0x78] sm:$0xff] 0.0
        %278 = vst [vmem:[#allocation2 + $0x80] sm:$0xff] 0.0
        %279 = vst [vmem:[#allocation2 + $0x88] sm:$0xff] 0.0
        %280 = vst [vmem:[#allocation2 + $0x90] sm:$0xff] 0.0
        %281 = vst [vmem:[#allocation2 + $0x98] sm:$0xff] 0.0
        %282 = vst [vmem:[#allocation2 + $0xa0] sm:$0xff] 0.0
        %283 = vst [vmem:[#allocation2 + $0xa8] sm:$0xff] 0.0
        %284 = vst [vmem:[#allocation2 + $0xb0] sm:$0xff] 0.0
        %285 = vst [vmem:[#allocation2 + $0xb8] sm:$0xff] 0.0
        %286 = vst [vmem:[#allocation2 + $0xc0] sm:$0xff] 0.0
        %287 = vst [vmem:[#allocation2 + $0xc8] sm:$0xff] 0.0
        %288 = vst [vmem:[#allocation2 + $0xd0] sm:$0xff] 0.0
        %289 = vst [vmem:[#allocation2 + $0xd8] sm:$0xff] 0.0
        %290 = vst [vmem:[#allocation2 + $0xe0] sm:$0xff] 0.0
        %291 = vst [vmem:[#allocation2 + $0xe8] sm:$0xff] 0.0
        %292 = vst [vmem:[#allocation2 + $0xf0] sm:$0xff] 0.0
        %293 = vst [vmem:[#allocation2 + $0xf8] sm:$0xff] 0.0
        %294 = vst [vmem:[#allocation2 + $0x100] sm:$0xff] 0.0
        %295 = vst [vmem:[#allocation2 + $0x108] sm:$0xff] 0.0
        %296 = vst [vmem:[#allocation2 + $0x110] sm:$0xff] 0.0
        %297 = vst [vmem:[#allocation2 + $0x118] sm:$0xff] 0.0
        %298 = vst [vmem:[#allocation2 + $0x120] sm:$0xff] 0.0
        %299 = vst [vmem:[#allocation2 + $0x128] sm:$0xff] 0.0
        %300 = vst [vmem:[#allocation2 + $0x130] sm:$0xff] 0.0
        %301 = vst [vmem:[#allocation2 + $0x138] sm:$0xff] 0.0
        %302 = vst [vmem:[#allocation2 + $0x140] sm:$0xff] 0.0
        %303 = vst [vmem:[#allocation2 + $0x148] sm:$0xff] 0.0
        %304 = vst [vmem:[#allocation2 + $0x150] sm:$0xff] 0.0
        %305 = vst [vmem:[#allocation2 + $0x158] sm:$0xff] 0.0
        %306 = vst [vmem:[#allocation2 + $0x160] sm:$0xff] 0.0
        %307 = vst [vmem:[#allocation2 + $0x168] sm:$0xff] 0.0
        %308 = vst [vmem:[#allocation2 + $0x170] sm:$0xff] 0.0
        %309 = vst [vmem:[#allocation2 + $0x178] sm:$0xff] 0.0
        %310 = vst [vmem:[#allocation2 + $0x180] sm:$0xff] 0.0
        %311 = vst [vmem:[#allocation2 + $0x188] sm:$0xff] 0.0
        %312 = vst [vmem:[#allocation2 + $0x190] sm:$0xff] 0.0
        %313 = vst [vmem:[#allocation2 + $0x198] sm:$0xff] 0.0
        %314 = vst [vmem:[#allocation2 + $0x1a0] sm:$0xff] 0.0
        %315 = vst [vmem:[#allocation2 + $0x1a8] sm:$0xff] 0.0
        %316 = vst [vmem:[#allocation2 + $0x1b0] sm:$0xff] 0.0
        %317 = vst [vmem:[#allocation2 + $0x1b8] sm:$0xff] 0.0
        %318 = vst [vmem:[#allocation2 + $0x1c0] sm:$0xff] 0.0
        %319 = vst [vmem:[#allocation2 + $0x1c8] sm:$0xff] 0.0
        %320 = vst [vmem:[#allocation2 + $0x1d0] sm:$0xff] 0.0
        %321 = vst [vmem:[#allocation2 + $0x1d8] sm:$0xff] 0.0
        %322 = vst [vmem:[#allocation2 + $0x1e0] sm:$0xff] 0.0
        %323 = vst [vmem:[#allocation2 + $0x1e8] sm:$0xff] 0.0
        %324 = vst [vmem:[#allocation2 + $0x1f0] sm:$0xff] 0.0
        %325 = vst [vmem:[#allocation2 + $0x1f8] sm:$0xff] 0.0
      $region36: #{_forward.8} parent=31 // pred_fallthru
        _
      %v326 = vld [vmem:[#allocation2] sm:$0xff]
      %v327 = vld [vmem:[#allocation2 + $0x8] sm:$0xff]
      %v328 = vld [vmem:[#allocation2 + $0x10] sm:$0xff]
      %v329 = vld [vmem:[#allocation2 + $0x18] sm:$0xff]
      %v330 = vld [vmem:[#allocation2 + $0x20] sm:$0xff]
      %v331 = vld [vmem:[#allocation2 + $0x28] sm:$0xff]
      %v332 = vld [vmem:[#allocation2 + $0x30] sm:$0xff]
      %v333 = vld [vmem:[#allocation2 + $0x38] sm:$0xff]
      %v334 = vld [vmem:[#allocation2 + $0x40] sm:$0xff]
      %v335 = vld [vmem:[#allocation2 + $0x48] sm:$0xff]
      %v336 = vld [vmem:[#allocation2 + $0x50] sm:$0xff]
      %v337 = vld [vmem:[#allocation2 + $0x58] sm:$0xff]
      %v338 = vld [vmem:[#allocation2 + $0x60] sm:$0xff]
      %v339 = vld [vmem:[#allocation2 + $0x68] sm:$0xff]
      %v340 = vld [vmem:[#allocation2 + $0x70] sm:$0xff]
      %v341 = vld [vmem:[#allocation2 + $0x78] sm:$0xff]
      %v342 = vld [vmem:[#allocation2 + $0x80] sm:$0xff]
      %v343 = vld [vmem:[#allocation2 + $0x88] sm:$0xff]
      %v344 = vld [vmem:[#allocation2 + $0x90] sm:$0xff]
      %v345 = vld [vmem:[#allocation2 + $0x98] sm:$0xff]
      %v346 = vld [vmem:[#allocation2 + $0xa0] sm:$0xff]
      %v347 = vld [vmem:[#allocation2 + $0xa8] sm:$0xff]
      %v348 = vld [vmem:[#allocation2 + $0xb0] sm:$0xff]
      %v349 = vld [vmem:[#allocation2 + $0xb8] sm:$0xff]
      %v350 = vld [vmem:[#allocation2 + $0xc0] sm:$0xff]
      %v351 = vld [vmem:[#allocation2 + $0xc8] sm:$0xff]
      %v352 = vld [vmem:[#allocation2 + $0xd0] sm:$0xff]
      %v353 = vld [vmem:[#allocation2 + $0xd8] sm:$0xff]
      %v354 = vld [vmem:[#allocation2 + $0xe0] sm:$0xff]
      %v355 = vld [vmem:[#allocation2 + $0xe8] sm:$0xff]
      %v356 = vld [vmem:[#allocation2 + $0xf0] sm:$0xff]
      %v357 = vld [vmem:[#allocation2 + $0xf8] sm:$0xff]
      %v358 = vld [vmem:[#allocation2 + $0x100] sm:$0xff]
      %v359 = vld [vmem:[#allocation2 + $0x108] sm:$0xff]
      %v360 = vld [vmem:[#allocation2 + $0x110] sm:$0xff]
      %v361 = vld [vmem:[#allocation2 + $0x118] sm:$0xff]
      %v362 = vld [vmem:[#allocation2 + $0x120] sm:$0xff]
      %v363 = vld [vmem:[#allocation2 + $0x128] sm:$0xff]
      %v364 = vld [vmem:[#allocation2 + $0x130] sm:$0xff]
      %v365 = vld [vmem:[#allocation2 + $0x138] sm:$0xff]
      %v366 = vld [vmem:[#allocation2 + $0x140] sm:$0xff]
      %v367 = vld [vmem:[#allocation2 + $0x148] sm:$0xff]
      %v368 = vld [vmem:[#allocation2 + $0x150] sm:$0xff]
      %v369 = vld [vmem:[#allocation2 + $0x158] sm:$0xff]
      %v370 = vld [vmem:[#allocation2 + $0x160] sm:$0xff]
      %v371 = vld [vmem:[#allocation2 + $0x168] sm:$0xff]
      %v372 = vld [vmem:[#allocation2 + $0x170] sm:$0xff]
      %v373 = vld [vmem:[#allocation2 + $0x178] sm:$0xff]
      %v374 = vld [vmem:[#allocation2 + $0x180] sm:$0xff]
      %v375 = vld [vmem:[#allocation2 + $0x188] sm:$0xff]
      %v376 = vld [vmem:[#allocation2 + $0x190] sm:$0xff]
      %v377 = vld [vmem:[#allocation2 + $0x198] sm:$0xff]
      %v378 = vld [vmem:[#allocation2 + $0x1a0] sm:$0xff]
      %v379 = vld [vmem:[#allocation2 + $0x1a8] sm:$0xff]
      %v380 = vld [vmem:[#allocation2 + $0x1b0] sm:$0xff]
      %v381 = vld [vmem:[#allocation2 + $0x1b8] sm:$0xff]
      %v382 = vld [vmem:[#allocation2 + $0x1c0] sm:$0xff]
      %v383 = vld [vmem:[#allocation2 + $0x1c8] sm:$0xff]
      %v384 = vld [vmem:[#allocation2 + $0x1d0] sm:$0xff]
      %v385 = vld [vmem:[#allocation2 + $0x1d8] sm:$0xff]
      %v386 = vld [vmem:[#allocation2 + $0x1e0] sm:$0xff]
      %v387 = vld [vmem:[#allocation2 + $0x1e8] sm:$0xff]
      %v388 = vld [vmem:[#allocation2 + $0x1f0] sm:$0xff]
      %v389 = vld [vmem:[#allocation2 + $0x1f8] sm:$0xff]
      %v390 = vld [vmem:[%s239] sm:$0xf]
      %v391 = vld [vmem:[%s239 + $0x4] sm:$0xf]
      %v392 = vld [vmem:[%s239 + $0x8] sm:$0xf]
      %v393 = vld [vmem:[%s239 + $0xc] sm:$0xf]
      %v394 = vld [vmem:[%s239 + $0x10] sm:$0xf]
      %v395 = vld [vmem:[%s239 + $0x14] sm:$0xf]
      %v396 = vld [vmem:[%s239 + $0x18] sm:$0xf]
      %v397 = vld [vmem:[%s239 + $0x1c] sm:$0xf]
      %v398 = vld [vmem:[%s239 + $0x20] sm:$0xf]
      %v399 = vld [vmem:[%s239 + $0x24] sm:$0xf]
      %v400 = vld [vmem:[%s239 + $0x28] sm:$0xf]
      %v401 = vld [vmem:[%s239 + $0x2c] sm:$0xf]
      %v402 = vld [vmem:[%s239 + $0x30] sm:$0xf]
      %v403 = vld [vmem:[%s239 + $0x34] sm:$0xf]
      %v404 = vld [vmem:[%s239 + $0x38] sm:$0xf]
      %v405 = vld [vmem:[%s239 + $0x3c] sm:$0xf]
      %v406 = vld [vmem:[%s239 + $0x40] sm:$0xf]
      %v407 = vld [vmem:[%s239 + $0x44] sm:$0xf]
      %v408 = vld [vmem:[%s239 + $0x48] sm:$0xf]
      %v409 = vld [vmem:[%s239 + $0x4c] sm:$0xf]
      %v410 = vld [vmem:[%s239 + $0x50] sm:$0xf]
      %v411 = vld [vmem:[%s239 + $0x54] sm:$0xf]
      %v412 = vld [vmem:[%s239 + $0x58] sm:$0xf]
      %v413 = vld [vmem:[%s239 + $0x5c] sm:$0xf]
      %v414 = vld [vmem:[%s239 + $0x60] sm:$0xf]
      %v415 = vld [vmem:[%s239 + $0x64] sm:$0xf]
      %v416 = vld [vmem:[%s239 + $0x68] sm:$0xf]
      %v417 = vld [vmem:[%s239 + $0x6c] sm:$0xf]
      %v418 = vld [vmem:[%s239 + $0x70] sm:$0xf]
      %v419 = vld [vmem:[%s239 + $0x74] sm:$0xf]
      %v420 = vld [vmem:[%s239 + $0x78] sm:$0xf]
      %v421 = vld [vmem:[%s239 + $0x7c] sm:$0xf]
      %v422 = vld [vmem:[%s239 + $0x80] sm:$0xf]
      %v423 = vld [vmem:[%s239 + $0x84] sm:$0xf]
      %v424 = vld [vmem:[%s239 + $0x88] sm:$0xf]
      %v425 = vld [vmem:[%s239 + $0x8c] sm:$0xf]
      %v426 = vld [vmem:[%s239 + $0x90] sm:$0xf]
      %v427 = vld [vmem:[%s239 + $0x94] sm:$0xf]
      %v428 = vld [vmem:[%s239 + $0x98] sm:$0xf]
      %v429 = vld [vmem:[%s239 + $0x9c] sm:$0xf]
      %v430 = vld [vmem:[%s239 + $0xa0] sm:$0xf]
      %v431 = vld [vmem:[%s239 + $0xa4] sm:$0xf]
      %v432 = vld [vmem:[%s239 + $0xa8] sm:$0xf]
      %v433 = vld [vmem:[%s239 + $0xac] sm:$0xf]
      %v434 = vld [vmem:[%s239 + $0xb0] sm:$0xf]
      %v435 = vld [vmem:[%s239 + $0xb4] sm:$0xf]
      %v436 = vld [vmem:[%s239 + $0xb8] sm:$0xf]
      %v437 = vld [vmem:[%s239 + $0xbc] sm:$0xf]
      %v438 = vld [vmem:[%s239 + $0xc0] sm:$0xf]
      %v439 = vld [vmem:[%s239 + $0xc4] sm:$0xf]
      %v440 = vld [vmem:[%s239 + $0xc8] sm:$0xf]
      %v441 = vld [vmem:[%s239 + $0xcc] sm:$0xf]
      %v442 = vld [vmem:[%s239 + $0xd0] sm:$0xf]
      %v443 = vld [vmem:[%s239 + $0xd4] sm:$0xf]
      %v444 = vld [vmem:[%s239 + $0xd8] sm:$0xf]
      %v445 = vld [vmem:[%s239 + $0xdc] sm:$0xf]
      %v446 = vld [vmem:[%s239 + $0xe0] sm:$0xf]
      %v447 = vld [vmem:[%s239 + $0xe4] sm:$0xf]
      %v448 = vld [vmem:[%s239 + $0xe8] sm:$0xf]
      %v449 = vld [vmem:[%s239 + $0xec] sm:$0xf]
      %v450 = vld [vmem:[%s239 + $0xf0] sm:$0xf]
      %v451 = vld [vmem:[%s239 + $0xf4] sm:$0xf]
      %v452 = vld [vmem:[%s239 + $0xf8] sm:$0xf]
      %v453 = vld [vmem:[%s239 + $0xfc] sm:$0xf]
      %v454 = vld [vmem:[%s245] sm:$0xf]
      %v455 = vld [vmem:[%s245 + $0x4] sm:$0xf]
      %v456 = vld [vmem:[%s245 + $0x8] sm:$0xf]
      %v457 = vld [vmem:[%s245 + $0xc] sm:$0xf]
      %v458 = vld [vmem:[%s245 + $0x10] sm:$0xf]
      %v459 = vld [vmem:[%s245 + $0x14] sm:$0xf]
      %v460 = vld [vmem:[%s245 + $0x18] sm:$0xf]
      %v461 = vld [vmem:[%s245 + $0x1c] sm:$0xf]
      %v462 = vld [vmem:[%s245 + $0x20] sm:$0xf]
      %v463 = vld [vmem:[%s245 + $0x24] sm:$0xf]
      %v464 = vld [vmem:[%s245 + $0x28] sm:$0xf]
      %v465 = vld [vmem:[%s245 + $0x2c] sm:$0xf]
      %v466 = vld [vmem:[%s245 + $0x30] sm:$0xf]
      %v467 = vld [vmem:[%s245 + $0x34] sm:$0xf]
      %v468 = vld [vmem:[%s245 + $0x38] sm:$0xf]
      %v469 = vld [vmem:[%s245 + $0x3c] sm:$0xf]
      %v534 = vunpack.c.l.b16 %v390
      %v535 = vunpack.c.l.b16 %v391
      %v536 = vunpack.c.l.b16 %v392
      %v537 = vunpack.c.l.b16 %v393
      %v538 = vunpack.c.l.b16 %v394
      %v539 = vunpack.c.l.b16 %v395
      %v540 = vunpack.c.l.b16 %v396
      %v541 = vunpack.c.l.b16 %v397
      %v542 = vunpack.c.l.b16 %v398
      %v543 = vunpack.c.l.b16 %v399
      %v544 = vunpack.c.l.b16 %v400
      %v545 = vunpack.c.l.b16 %v401
      %v546 = vunpack.c.l.b16 %v402
      %v547 = vunpack.c.l.b16 %v403
      %v548 = vunpack.c.l.b16 %v404
      %v549 = vunpack.c.l.b16 %v405
      %v550 = vunpack.c.l.b16 %v406
      %v551 = vunpack.c.l.b16 %v407
      %v552 = vunpack.c.l.b16 %v408
      %v553 = vunpack.c.l.b16 %v409
      %v554 = vunpack.c.l.b16 %v410
      %v555 = vunpack.c.l.b16 %v411
      %v556 = vunpack.c.l.b16 %v412
      %v557 = vunpack.c.l.b16 %v413
      %v558 = vunpack.c.l.b16 %v414
      %v559 = vunpack.c.l.b16 %v415
      %v560 = vunpack.c.l.b16 %v416
      %v561 = vunpack.c.l.b16 %v417
      %v562 = vunpack.c.l.b16 %v418
      %v563 = vunpack.c.l.b16 %v419
      %v564 = vunpack.c.l.b16 %v420
      %v565 = vunpack.c.l.b16 %v421
      %v566 = vunpack.c.l.b16 %v422
      %v567 = vunpack.c.l.b16 %v423
      %v568 = vunpack.c.l.b16 %v424
      %v569 = vunpack.c.l.b16 %v425
      %v570 = vunpack.c.l.b16 %v426
      %v571 = vunpack.c.l.b16 %v427
      %v572 = vunpack.c.l.b16 %v428
      %v573 = vunpack.c.l.b16 %v429
      %v574 = vunpack.c.l.b16 %v430
      %v575 = vunpack.c.l.b16 %v431
      %v576 = vunpack.c.l.b16 %v432
      %v577 = vunpack.c.l.b16 %v433
      %v578 = vunpack.c.l.b16 %v434
      %v579 = vunpack.c.l.b16 %v435
      %v580 = vunpack.c.l.b16 %v436
      %v581 = vunpack.c.l.b16 %v437
      %v582 = vunpack.c.l.b16 %v438
      %v583 = vunpack.c.l.b16 %v439
      %v584 = vunpack.c.l.b16 %v440
      %v585 = vunpack.c.l.b16 %v441
      %v586 = vunpack.c.l.b16 %v442
      %v587 = vunpack.c.l.b16 %v443
      %v588 = vunpack.c.l.b16 %v444
      %v589 = vunpack.c.l.b16 %v445
      %v590 = vunpack.c.l.b16 %v446
      %v591 = vunpack.c.l.b16 %v447
      %v592 = vunpack.c.l.b16 %v448
      %v593 = vunpack.c.l.b16 %v449
      %v594 = vunpack.c.l.b16 %v450
      %v595 = vunpack.c.l.b16 %v451
      %v596 = vunpack.c.l.b16 %v452
      %v597 = vunpack.c.l.b16 %v453
      %v598 = vpack.c.b16 %v535, %v534
      %v599 = vpack.c.b16 %v537, %v536
      %v600 = vpack.c.b16 %v539, %v538
      %v601 = vpack.c.b16 %v541, %v540
      %v602 = vpack.c.b16 %v543, %v542
      %v603 = vpack.c.b16 %v545, %v544
      %v604 = vpack.c.b16 %v547, %v546
      %v605 = vpack.c.b16 %v549, %v548
      %v606 = vpack.c.b16 %v551, %v550
      %v607 = vpack.c.b16 %v553, %v552
      %v608 = vpack.c.b16 %v555, %v554
      %v609 = vpack.c.b16 %v557, %v556
      %v610 = vpack.c.b16 %v559, %v558
      %v611 = vpack.c.b16 %v561, %v560
      %v612 = vpack.c.b16 %v563, %v562
      %v613 = vpack.c.b16 %v565, %v564
      %v614 = vpack.c.b16 %v567, %v566
      %v615 = vpack.c.b16 %v569, %v568
      %v616 = vpack.c.b16 %v571, %v570
      %v617 = vpack.c.b16 %v573, %v572
      %v618 = vpack.c.b16 %v575, %v574
      %v619 = vpack.c.b16 %v577, %v576
      %v620 = vpack.c.b16 %v579, %v578
      %v621 = vpack.c.b16 %v581, %v580
      %v622 = vpack.c.b16 %v583, %v582
      %v623 = vpack.c.b16 %v585, %v584
      %v624 = vpack.c.b16 %v587, %v586
      %v625 = vpack.c.b16 %v589, %v588
      %v626 = vpack.c.b16 %v591, %v590
      %v627 = vpack.c.b16 %v593, %v592
      %v628 = vpack.c.b16 %v595, %v594
      %v629 = vpack.c.b16 %v597, %v596
      %v678 = vunpack.c.l.b16 %v454
      %v679 = vunpack.c.l.b16 %v455
      %v680 = vunpack.c.l.b16 %v456
      %v681 = vunpack.c.l.b16 %v457
      %v682 = vunpack.c.l.b16 %v458
      %v683 = vunpack.c.l.b16 %v459
      %v684 = vunpack.c.l.b16 %v460
      %v685 = vunpack.c.l.b16 %v461
      %v686 = vunpack.c.l.b16 %v462
      %v687 = vunpack.c.l.b16 %v463
      %v688 = vunpack.c.l.b16 %v464
      %v689 = vunpack.c.l.b16 %v465
      %v690 = vunpack.c.l.b16 %v466
      %v691 = vunpack.c.l.b16 %v467
      %v692 = vunpack.c.l.b16 %v468
      %v693 = vunpack.c.l.b16 %v469
      %v694 = vpack.c.b16 %v679, %v678
      %v695 = vpack.c.b16 %v681, %v680
      %v696 = vpack.c.b16 %v683, %v682
      %v697 = vpack.c.b16 %v685, %v684
      %v698 = vpack.c.b16 %v687, %v686
      %v699 = vpack.c.b16 %v689, %v688
      %v700 = vpack.c.b16 %v691, %v690
      %v701 = vpack.c.b16 %v693, %v692
      %710 = vmatprep.subr.bf16.mxu0 0
      %711 = vmatpush1.bf16.msra.mxu0 %v694
      %712 = vmatprep.subr.bf16.mxu0 0
      %713 = vmatpush1.bf16.msra.mxu0 %v695
      %714 = vmatprep.subr.bf16.mxu0 0
      %715 = vmatpush1.bf16.msra.mxu0 %v696
      %716 = vmatprep.subr.bf16.mxu0 0
      %717 = vmatpush1.bf16.msra.mxu0 %v697
      %718 = vmatprep.subr.bf16.mxu0 0
      %719 = vmatpush1.bf16.msra.mxu0 %v698
      %720 = vmatprep.subr.bf16.mxu0 0
      %721 = vmatpush1.bf16.msra.mxu0 %v699
      %722 = vmatprep.subr.bf16.mxu0 0
      %723 = vmatpush1.bf16.msra.mxu0 %v700
      %724 = vmatprep.subr.bf16.mxu0 0
      %725 = vmatpush1.bf16.msra.mxu0 %v701
      %726 = vmatprep.subr.bf16.mxu0 0
      %727 = vmatpush1.bf16.msra.mxu0 0
      %728 = vmatprep.subr.bf16.mxu0 0
      %729 = vmatpush1.bf16.msra.mxu0 0
      %730 = vmatprep.subr.bf16.mxu0 0
      %731 = vmatpush1.bf16.msra.mxu0 0
      %732 = vmatprep.subr.bf16.mxu0 0
      %733 = vmatpush1.bf16.msra.mxu0 0
      %734 = vmatprep.subr.bf16.mxu0 0
      %735 = vmatpush1.bf16.msra.mxu0 0
      %736 = vmatprep.subr.bf16.mxu0 0
      %737 = vmatpush1.bf16.msra.mxu0 0
      %738 = vmatprep.subr.bf16.mxu0 0
      %739 = vmatpush1.bf16.msra.mxu0 0
      %740 = vmatprep.subr.bf16.mxu0 0
      %741 = vmatpush1.bf16.msra.mxu0 0
      %742 = vmatprep.mubr.bf16.mxu0 0
      %743 = vmatmul.mubr.bf16.gmra.mrb[0].mxu0 %v598
      %v744 = vpop.f32.mrb[0].mxu0
      %v745 = vadd.f32 0.0, %v744
      %v746 = vpop.f32.mrb[0].mxu0
      %v747 = vpop.f32.mrb[0].mxu0
      %v748 = vadd.f32 0.0, %v747
      %v749 = vpop.f32.mrb[0].mxu0
      %750 = vmatprep.mubr.bf16.mxu0 0
      %751 = vmatmul.mubr.bf16.gmra.mrb[0].mxu0 %v599
      %v752 = vpop.f32.mrb[0].mxu0
      %v753 = vadd.f32 0.0, %v752
      %v754 = vpop.f32.mrb[0].mxu0
      %v755 = vpop.f32.mrb[0].mxu0
      %v756 = vadd.f32 0.0, %v755
      %v757 = vpop.f32.mrb[0].mxu0
      %758 = vmatprep.mubr.bf16.mxu0 0
      %759 = vmatmul.mubr.bf16.gmra.mrb[0].mxu0 %v600
      %v760 = vpop.f32.mrb[0].mxu0
      %v761 = vadd.f32 0.0, %v760
      %v762 = vpop.f32.mrb[0].mxu0
      %v763 = vpop.f32.mrb[0].mxu0
      %v764 = vadd.f32 0.0, %v763
      %v765 = vpop.f32.mrb[0].mxu0
      %766 = vmatprep.mubr.bf16.mxu0 0
      %767 = vmatmul.mubr.bf16.gmra.mrb[0].mxu0 %v601
      %v768 = vpop.f32.mrb[0].mxu0
      %v769 = vadd.f32 0.0, %v768
      %v770 = vpop.f32.mrb[0].mxu0
      %v771 = vpop.f32.mrb[0].mxu0
      %v772 = vadd.f32 0.0, %v771
      %v773 = vpop.f32.mrb[0].mxu0
      %774 = vmatprep.mubr.bf16.mxu0 0
      %775 = vmatmul.mubr.bf16.gmra.mrb[0].mxu0 %v602
      %v776 = vpop.f32.mrb[0].mxu0
      %v777 = vadd.f32 0.0, %v776
      %v778 = vpop.f32.mrb[0].mxu0
      %v779 = vpop.f32.mrb[0].mxu0
      %v780 = vadd.f32 0.0, %v779
      %v781 = vpop.f32.mrb[0].mxu0
      %782 = vmatprep.mubr.bf16.mxu0 0
      %783 = vmatmul.mubr.bf16.gmra.mrb[0].mxu0 %v603
      %v784 = vpop.f32.mrb[0].mxu0
      %v785 = vadd.f32 0.0, %v784
      %v786 = vpop.f32.mrb[0].mxu0
      %v787 = vpop.f32.mrb[0].mxu0
      %v788 = vadd.f32 0.0, %v787
      %v789 = vpop.f32.mrb[0].mxu0
      %790 = vmatprep.mubr.bf16.mxu0 0
      %791 = vmatmul.mubr.bf16.gmra.mrb[0].mxu0 %v604
      %v792 = vpop.f32.mrb[0].mxu0
      %v793 = vadd.f32 0.0, %v792
      %v794 = vpop.f32.mrb[0].mxu0
      %v795 = vpop.f32.mrb[0].mxu0
      %v796 = vadd.f32 0.0, %v795
      %v797 = vpop.f32.mrb[0].mxu0
      %798 = vmatprep.mubr.bf16.mxu0 0
      %799 = vmatmul.mubr.bf16.gmra.mrb[0].mxu0 %v605
      %v800 = vpop.f32.mrb[0].mxu0
      %v801 = vadd.f32 0.0, %v800
      %v802 = vpop.f32.mrb[0].mxu0
      %v803 = vpop.f32.mrb[0].mxu0
      %v804 = vadd.f32 0.0, %v803
      %v805 = vpop.f32.mrb[0].mxu0
      %806 = vmatprep.mubr.bf16.mxu0 0
      %807 = vmatmul.mubr.bf16.gmra.mrb[0].mxu0 %v606
      %v808 = vpop.f32.mrb[0].mxu0
      %v809 = vadd.f32 0.0, %v808
      %v810 = vpop.f32.mrb[0].mxu0
      %v811 = vpop.f32.mrb[0].mxu0
      %v812 = vadd.f32 0.0, %v811
      %v813 = vpop.f32.mrb[0].mxu0
      %814 = vmatprep.mubr.bf16.mxu0 0
      %815 = vmatmul.mubr.bf16.gmra.mrb[0].mxu0 %v607
      %v816 = vpop.f32.mrb[0].mxu0
      %v817 = vadd.f32 0.0, %v816
      %v818 = vpop.f32.mrb[0].mxu0
      %v819 = vpop.f32.mrb[0].mxu0
      %v820 = vadd.f32 0.0, %v819
      %v821 = vpop.f32.mrb[0].mxu0
      %822 = vmatprep.mubr.bf16.mxu0 0
      %823 = vmatmul.mubr.bf16.gmra.mrb[0].mxu0 %v608
      %v824 = vpop.f32.mrb[0].mxu0
      %v825 = vadd.f32 0.0, %v824
      %v826 = vpop.f32.mrb[0].mxu0
      %v827 = vpop.f32.mrb[0].mxu0
      %v828 = vadd.f32 0.0, %v827
      %v829 = vpop.f32.mrb[0].mxu0
      %830 = vmatprep.mubr.bf16.mxu0 0
      %831 = vmatmul.mubr.bf16.gmra.mrb[0].mxu0 %v609
      %v832 = vpop.f32.mrb[0].mxu0
      %v833 = vadd.f32 0.0, %v832
      %v834 = vpop.f32.mrb[0].mxu0
      %v835 = vpop.f32.mrb[0].mxu0
      %v836 = vadd.f32 0.0, %v835
      %v837 = vpop.f32.mrb[0].mxu0
      %838 = vmatprep.mubr.bf16.mxu0 0
      %839 = vmatmul.mubr.bf16.gmra.mrb[0].mxu0 %v610
      %v840 = vpop.f32.mrb[0].mxu0
      %v841 = vadd.f32 0.0, %v840
      %v842 = vpop.f32.mrb[0].mxu0
      %v843 = vpop.f32.mrb[0].mxu0
      %v844 = vadd.f32 0.0, %v843
      %v845 = vpop.f32.mrb[0].mxu0
      %846 = vmatprep.mubr.bf16.mxu0 0
      %847 = vmatmul.mubr.bf16.gmra.mrb[0].mxu0 %v611
      %v848 = vpop.f32.mrb[0].mxu0
      %v849 = vadd.f32 0.0, %v848
      %v850 = vpop.f32.mrb[0].mxu0
      %v851 = vpop.f32.mrb[0].mxu0
      %v852 = vadd.f32 0.0, %v851
      %v853 = vpop.f32.mrb[0].mxu0
      %854 = vmatprep.mubr.bf16.mxu0 0
      %855 = vmatmul.mubr.bf16.gmra.mrb[0].mxu0 %v612
      %v856 = vpop.f32.mrb[0].mxu0
      %v857 = vadd.f32 0.0, %v856
      %v858 = vpop.f32.mrb[0].mxu0
      %v859 = vpop.f32.mrb[0].mxu0
      %v860 = vadd.f32 0.0, %v859
      %v861 = vpop.f32.mrb[0].mxu0
      %862 = vmatprep.mubr.bf16.mxu0 0
      %863 = vmatmul.mubr.bf16.gmra.mrb[0].mxu0 %v613
      %v864 = vpop.f32.mrb[0].mxu0
      %v865 = vadd.f32 0.0, %v864
      %v866 = vpop.f32.mrb[0].mxu0
      %v867 = vpop.f32.mrb[0].mxu0
      %v868 = vadd.f32 0.0, %v867
      %v869 = vpop.f32.mrb[0].mxu0
      %870 = vmatprep.mubr.bf16.mxu0 0
      %871 = vmatmul.mubr.bf16.gmra.mrb[0].mxu0 %v614
      %v872 = vpop.f32.mrb[0].mxu0
      %v873 = vadd.f32 0.0, %v872
      %v874 = vpop.f32.mrb[0].mxu0
      %v875 = vpop.f32.mrb[0].mxu0
      %v876 = vadd.f32 0.0, %v875
      %v877 = vpop.f32.mrb[0].mxu0
      %878 = vmatprep.mubr.bf16.mxu0 0
      %879 = vmatmul.mubr.bf16.gmra.mrb[0].mxu0 %v615
      %v880 = vpop.f32.mrb[0].mxu0
      %v881 = vadd.f32 0.0, %v880
      %v882 = vpop.f32.mrb[0].mxu0
      %v883 = vpop.f32.mrb[0].mxu0
      %v884 = vadd.f32 0.0, %v883
      %v885 = vpop.f32.mrb[0].mxu0
      %886 = vmatprep.mubr.bf16.mxu0 0
      %887 = vmatmul.mubr.bf16.gmra.mrb[0].mxu0 %v616
      %v888 = vpop.f32.mrb[0].mxu0
      %v889 = vadd.f32 0.0, %v888
      %v890 = vpop.f32.mrb[0].mxu0
      %v891 = vpop.f32.mrb[0].mxu0
      %v892 = vadd.f32 0.0, %v891
      %v893 = vpop.f32.mrb[0].mxu0
      %894 = vmatprep.mubr.bf16.mxu0 0
      %895 = vmatmul.mubr.bf16.gmra.mrb[0].mxu0 %v617
      %v896 = vpop.f32.mrb[0].mxu0
      %v897 = vadd.f32 0.0, %v896
      %v898 = vpop.f32.mrb[0].mxu0
      %v899 = vpop.f32.mrb[0].mxu0
      %v900 = vadd.f32 0.0, %v899
      %v901 = vpop.f32.mrb[0].mxu0
      %902 = vmatprep.mubr.bf16.mxu0 0
      %903 = vmatmul.mubr.bf16.gmra.mrb[0].mxu0 %v618
      %v904 = vpop.f32.mrb[0].mxu0
      %v905 = vadd.f32 0.0, %v904
      %v906 = vpop.f32.mrb[0].mxu0
      %v907 = vpop.f32.mrb[0].mxu0
      %v908 = vadd.f32 0.0, %v907
      %v909 = vpop.f32.mrb[0].mxu0
      %910 = vmatprep.mubr.bf16.mxu0 0
      %911 = vmatmul.mubr.bf16.gmra.mrb[0].mxu0 %v619
      %v912 = vpop.f32.mrb[0].mxu0
      %v913 = vadd.f32 0.0, %v912
      %v914 = vpop.f32.mrb[0].mxu0
      %v915 = vpop.f32.mrb[0].mxu0
      %v916 = vadd.f32 0.0, %v915
      %v917 = vpop.f32.mrb[0].mxu0
      %918 = vmatprep.mubr.bf16.mxu0 0
      %919 = vmatmul.mubr.bf16.gmra.mrb[0].mxu0 %v620
      %v920 = vpop.f32.mrb[0].mxu0
      %v921 = vadd.f32 0.0, %v920
      %v922 = vpop.f32.mrb[0].mxu0
      %v923 = vpop.f32.mrb[0].mxu0
      %v924 = vadd.f32 0.0, %v923
      %v925 = vpop.f32.mrb[0].mxu0
      %926 = vmatprep.mubr.bf16.mxu0 0
      %927 = vmatmul.mubr.bf16.gmra.mrb[0].mxu0 %v621
      %v928 = vpop.f32.mrb[0].mxu0
      %v929 = vadd.f32 0.0, %v928
      %v930 = vpop.f32.mrb[0].mxu0
      %v931 = vpop.f32.mrb[0].mxu0
      %v932 = vadd.f32 0.0, %v931
      %v933 = vpop.f32.mrb[0].mxu0
      %934 = vmatprep.mubr.bf16.mxu0 0
      %935 = vmatmul.mubr.bf16.gmra.mrb[0].mxu0 %v622
      %v936 = vpop.f32.mrb[0].mxu0
      %v937 = vadd.f32 0.0, %v936
      %v938 = vpop.f32.mrb[0].mxu0
      %v939 = vpop.f32.mrb[0].mxu0
      %v940 = vadd.f32 0.0, %v939
      %v941 = vpop.f32.mrb[0].mxu0
      %942 = vmatprep.mubr.bf16.mxu0 0
      %943 = vmatmul.mubr.bf16.gmra.mrb[0].mxu0 %v623
      %v944 = vpop.f32.mrb[0].mxu0
      %v945 = vadd.f32 0.0, %v944
      %v946 = vpop.f32.mrb[0].mxu0
      %v947 = vpop.f32.mrb[0].mxu0
      %v948 = vadd.f32 0.0, %v947
      %v949 = vpop.f32.mrb[0].mxu0
      %950 = vmatprep.mubr.bf16.mxu0 0
      %951 = vmatmul.mubr.bf16.gmra.mrb[0].mxu0 %v624
      %v952 = vpop.f32.mrb[0].mxu0
      %v953 = vadd.f32 0.0, %v952
      %v954 = vpop.f32.mrb[0].mxu0
      %v955 = vpop.f32.mrb[0].mxu0
      %v956 = vadd.f32 0.0, %v955
      %v957 = vpop.f32.mrb[0].mxu0
      %958 = vmatprep.mubr.bf16.mxu0 0
      %959 = vmatmul.mubr.bf16.gmra.mrb[0].mxu0 %v625
      %v960 = vpop.f32.mrb[0].mxu0
      %v961 = vadd.f32 0.0, %v960
      %v962 = vpop.f32.mrb[0].mxu0
      %v963 = vpop.f32.mrb[0].mxu0
      %v964 = vadd.f32 0.0, %v963
      %v965 = vpop.f32.mrb[0].mxu0
      %966 = vmatprep.mubr.bf16.mxu0 0
      %967 = vmatmul.mubr.bf16.gmra.mrb[0].mxu0 %v626
      %v968 = vpop.f32.mrb[0].mxu0
      %v969 = vadd.f32 0.0, %v968
      %v970 = vpop.f32.mrb[0].mxu0
      %v971 = vpop.f32.mrb[0].mxu0
      %v972 = vadd.f32 0.0, %v971
      %v973 = vpop.f32.mrb[0].mxu0
      %974 = vmatprep.mubr.bf16.mxu0 0
      %975 = vmatmul.mubr.bf16.gmra.mrb[0].mxu0 %v627
      %v976 = vpop.f32.mrb[0].mxu0
      %v977 = vadd.f32 0.0, %v976
      %v978 = vpop.f32.mrb[0].mxu0
      %v979 = vpop.f32.mrb[0].mxu0
      %v980 = vadd.f32 0.0, %v979
      %v981 = vpop.f32.mrb[0].mxu0
      %982 = vmatprep.mubr.bf16.mxu0 0
      %983 = vmatmul.mubr.bf16.gmra.mrb[0].mxu0 %v628
      %v984 = vpop.f32.mrb[0].mxu0
      %v985 = vadd.f32 0.0, %v984
      %v986 = vpop.f32.mrb[0].mxu0
      %v987 = vpop.f32.mrb[0].mxu0
      %v988 = vadd.f32 0.0, %v987
      %v989 = vpop.f32.mrb[0].mxu0
      %990 = vmatprep.mubr.bf16.mxu0 0
      %991 = vmatmul.mubr.bf16.gmra.mrb[0].mxu0 %v629
      %v992 = vpop.f32.mrb[0].mxu0
      %v993 = vadd.f32 0.0, %v992
      %v994 = vpop.f32.mrb[0].mxu0
      %v995 = vpop.f32.mrb[0].mxu0
      %v996 = vadd.f32 0.0, %v995
      %v997 = vpop.f32.mrb[0].mxu0
      %998 = vdwg.mxu0
      %v999 = vadd.f32 %v326, %v745
      %v1000 = vadd.f32 %v327, %v748
      %v1001 = vadd.f32 %v328, %v753
      %v1002 = vadd.f32 %v329, %v756
      %v1003 = vadd.f32 %v330, %v761
      %v1004 = vadd.f32 %v331, %v764
      %v1005 = vadd.f32 %v332, %v769
      %v1006 = vadd.f32 %v333, %v772
      %v1007 = vadd.f32 %v334, %v777
      %v1008 = vadd.f32 %v335, %v780
      %v1009 = vadd.f32 %v336, %v785
      %v1010 = vadd.f32 %v337, %v788
      %v1011 = vadd.f32 %v338, %v793
      %v1012 = vadd.f32 %v339, %v796
      %v1013 = vadd.f32 %v340, %v801
      %v1014 = vadd.f32 %v341, %v804
      %v1015 = vadd.f32 %v342, %v809
      %v1016 = vadd.f32 %v343, %v812
      %v1017 = vadd.f32 %v344, %v817
      %v1018 = vadd.f32 %v345, %v820
      %v1019 = vadd.f32 %v346, %v825
      %v1020 = vadd.f32 %v347, %v828
      %v1021 = vadd.f32 %v348, %v833
      %v1022 = vadd.f32 %v349, %v836
      %v1023 = vadd.f32 %v350, %v841
      %v1024 = vadd.f32 %v351, %v844
      %v1025 = vadd.f32 %v352, %v849
      %v1026 = vadd.f32 %v353, %v852
      %v1027 = vadd.f32 %v354, %v857
      %v1028 = vadd.f32 %v355, %v860
      %v1029 = vadd.f32 %v356, %v865
      %v1030 = vadd.f32 %v357, %v868
      %v1031 = vadd.f32 %v358, %v873
      %v1032 = vadd.f32 %v359, %v876
      %v1033 = vadd.f32 %v360, %v881
      %v1034 = vadd.f32 %v361, %v884
      %v1035 = vadd.f32 %v362, %v889
      %v1036 = vadd.f32 %v363, %v892
      %v1037 = vadd.f32 %v364, %v897
      %v1038 = vadd.f32 %v365, %v900
      %v1039 = vadd.f32 %v366, %v905
      %v1040 = vadd.f32 %v367, %v908
      %v1041 = vadd.f32 %v368, %v913
      %v1042 = vadd.f32 %v369, %v916
      %v1043 = vadd.f32 %v370, %v921
      %v1044 = vadd.f32 %v371, %v924
      %v1045 = vadd.f32 %v372, %v929
      %v1046 = vadd.f32 %v373, %v932
      %v1047 = vadd.f32 %v374, %v937
      %v1048 = vadd.f32 %v375, %v940
      %v1049 = vadd.f32 %v376, %v945
      %v1050 = vadd.f32 %v377, %v948
      %v1051 = vadd.f32 %v378, %v953
      %v1052 = vadd.f32 %v379, %v956
      %v1053 = vadd.f32 %v380, %v961
      %v1054 = vadd.f32 %v381, %v964
      %v1055 = vadd.f32 %v382, %v969
      %v1056 = vadd.f32 %v383, %v972
      %v1057 = vadd.f32 %v384, %v977
      %v1058 = vadd.f32 %v385, %v980
      %v1059 = vadd.f32 %v386, %v985
      %v1060 = vadd.f32 %v387, %v988
      %v1061 = vadd.f32 %v388, %v993
      %v1062 = vadd.f32 %v389, %v996
      %1063 = vst [vmem:[#allocation2] sm:$0xff] %v999
      %1064 = vst [vmem:[#allocation2 + $0x8] sm:$0xff] %v1000
      %1065 = vst [vmem:[#allocation2 + $0x10] sm:$0xff] %v1001
      %1066 = vst [vmem:[#allocation2 + $0x18] sm:$0xff] %v1002
      %1067 = vst [vmem:[#allocation2 + $0x20] sm:$0xff] %v1003
      %1068 = vst [vmem:[#allocation2 + $0x28] sm:$0xff] %v1004
      %1069 = vst [vmem:[#allocation2 + $0x30] sm:$0xff] %v1005
      %1070 = vst [vmem:[#allocation2 + $0x38] sm:$0xff] %v1006
      %1071 = vst [vmem:[#allocation2 + $0x40] sm:$0xff] %v1007
      %1072 = vst [vmem:[#allocation2 + $0x48] sm:$0xff] %v1008
      %1073 = vst [vmem:[#allocation2 + $0x50] sm:$0xff] %v1009
      %1074 = vst [vmem:[#allocation2 + $0x58] sm:$0xff] %v1010
      %1075 = vst [vmem:[#allocation2 + $0x60] sm:$0xff] %v1011
      %1076 = vst [vmem:[#allocation2 + $0x68] sm:$0xff] %v1012
      %1077 = vst [vmem:[#allocation2 + $0x70] sm:$0xff] %v1013
      %1078 = vst [vmem:[#allocation2 + $0x78] sm:$0xff] %v1014
      %1079 = vst [vmem:[#allocation2 + $0x80] sm:$0xff] %v1015
      %1080 = vst [vmem:[#allocation2 + $0x88] sm:$0xff] %v1016
      %1081 = vst [vmem:[#allocation2 + $0x90] sm:$0xff] %v1017
      %1082 = vst [vmem:[#allocation2 + $0x98] sm:$0xff] %v1018
      %1083 = vst [vmem:[#allocation2 + $0xa0] sm:$0xff] %v1019
      %1084 = vst [vmem:[#allocation2 + $0xa8] sm:$0xff] %v1020
      %1085 = vst [vmem:[#allocation2 + $0xb0] sm:$0xff] %v1021
      %1086 = vst [vmem:[#allocation2 + $0xb8] sm:$0xff] %v1022
      %1087 = vst [vmem:[#allocation2 + $0xc0] sm:$0xff] %v1023
      %1088 = vst [vmem:[#allocation2 + $0xc8] sm:$0xff] %v1024
      %1089 = vst [vmem:[#allocation2 + $0xd0] sm:$0xff] %v1025
      %1090 = vst [vmem:[#allocation2 + $0xd8] sm:$0xff] %v1026
      %1091 = vst [vmem:[#allocation2 + $0xe0] sm:$0xff] %v1027
      %1092 = vst [vmem:[#allocation2 + $0xe8] sm:$0xff] %v1028
      %1093 = vst [vmem:[#allocation2 + $0xf0] sm:$0xff] %v1029
      %1094 = vst [vmem:[#allocation2 + $0xf8] sm:$0xff] %v1030
      %1095 = vst [vmem:[#allocation2 + $0x100] sm:$0xff] %v1031
      %1096 = vst [vmem:[#allocation2 + $0x108] sm:$0xff] %v1032
      %1097 = vst [vmem:[#allocation2 + $0x110] sm:$0xff] %v1033
      %1098 = vst [vmem:[#allocation2 + $0x118] sm:$0xff] %v1034
      %1099 = vst [vmem:[#allocation2 + $0x120] sm:$0xff] %v1035
      %1100 = vst [vmem:[#allocation2 + $0x128] sm:$0xff] %v1036
      %1101 = vst [vmem:[#allocation2 + $0x130] sm:$0xff] %v1037
      %1102 = vst [vmem:[#allocation2 + $0x138] sm:$0xff] %v1038
      %1103 = vst [vmem:[#allocation2 + $0x140] sm:$0xff] %v1039
      %1104 = vst [vmem:[#allocation2 + $0x148] sm:$0xff] %v1040
      %1105 = vst [vmem:[#allocation2 + $0x150] sm:$0xff] %v1041
      %1106 = vst [vmem:[#allocation2 + $0x158] sm:$0xff] %v1042
      %1107 = vst [vmem:[#allocation2 + $0x160] sm:$0xff] %v1043
      %1108 = vst [vmem:[#allocation2 + $0x168] sm:$0xff] %v1044
      %1109 = vst [vmem:[#allocation2 + $0x170] sm:$0xff] %v1045
      %1110 = vst [vmem:[#allocation2 + $0x178] sm:$0xff] %v1046
      %1111 = vst [vmem:[#allocation2 + $0x180] sm:$0xff] %v1047
      %1112 = vst [vmem:[#allocation2 + $0x188] sm:$0xff] %v1048
      %1113 = vst [vmem:[#allocation2 + $0x190] sm:$0xff] %v1049
      %1114 = vst [vmem:[#allocation2 + $0x198] sm:$0xff] %v1050
      %1115 = vst [vmem:[#allocation2 + $0x1a0] sm:$0xff] %v1051
      %1116 = vst [vmem:[#allocation2 + $0x1a8] sm:$0xff] %v1052
      %1117 = vst [vmem:[#allocation2 + $0x1b0] sm:$0xff] %v1053
      %1118 = vst [vmem:[#allocation2 + $0x1b8] sm:$0xff] %v1054
      %1119 = vst [vmem:[#allocation2 + $0x1c0] sm:$0xff] %v1055
      %1120 = vst [vmem:[#allocation2 + $0x1c8] sm:$0xff] %v1056
      %1121 = vst [vmem:[#allocation2 + $0x1d0] sm:$0xff] %v1057
      %1122 = vst [vmem:[#allocation2 + $0x1d8] sm:$0xff] %v1058
      %1123 = vst [vmem:[#allocation2 + $0x1e0] sm:$0xff] %v1059
      %1124 = vst [vmem:[#allocation2 + $0x1e8] sm:$0xff] %v1060
      %1125 = vst [vmem:[#allocation2 + $0x1f0] sm:$0xff] %v1061
      %1126 = vst [vmem:[#allocation2 + $0x1f8] sm:$0xff] %v1062
      // Predicated region
      $region37: #{_forward.8} parent=31 // pred_check
        %p1127 = pneg %p258
      $region38: #{_forward.8} parent=31 // pred_check_branch
        %1129 = sbr.rel (%p1127) target = $region40
      $region39: #{_forward.8} parent=31 // pred_region
        %v1130 = vld [vmem:[#allocation2] sm:$0xff]
        %v1131 = vld [vmem:[#allocation2 + $0x8] sm:$0xff]
        %v1132 = vld [vmem:[#allocation2 + $0x10] sm:$0xff]
        %v1133 = vld [vmem:[#allocation2 + $0x18] sm:$0xff]
        %v1134 = vld [vmem:[#allocation2 + $0x20] sm:$0xff]
        %v1135 = vld [vmem:[#allocation2 + $0x28] sm:$0xff]
        %v1136 = vld [vmem:[#allocation2 + $0x30] sm:$0xff]
        %v1137 = vld [vmem:[#allocation2 + $0x38] sm:$0xff]
        %v1138 = vld [vmem:[#allocation2 + $0x40] sm:$0xff]
        %v1139 = vld [vmem:[#allocation2 + $0x48] sm:$0xff]
        %v1140 = vld [vmem:[#allocation2 + $0x50] sm:$0xff]
        %v1141 = vld [vmem:[#allocation2 + $0x58] sm:$0xff]
        %v1142 = vld [vmem:[#allocation2 + $0x60] sm:$0xff]
        %v1143 = vld [vmem:[#allocation2 + $0x68] sm:$0xff]
        %v1144 = vld [vmem:[#allocation2 + $0x70] sm:$0xff]
        %v1145 = vld [vmem:[#allocation2 + $0x78] sm:$0xff]
        %v1146 = vld [vmem:[#allocation2 + $0x80] sm:$0xff]
        %v1147 = vld [vmem:[#allocation2 + $0x88] sm:$0xff]
        %v1148 = vld [vmem:[#allocation2 + $0x90] sm:$0xff]
        %v1149 = vld [vmem:[#allocation2 + $0x98] sm:$0xff]
        %v1150 = vld [vmem:[#allocation2 + $0xa0] sm:$0xff]
        %v1151 = vld [vmem:[#allocation2 + $0xa8] sm:$0xff]
        %v1152 = vld [vmem:[#allocation2 + $0xb0] sm:$0xff]
        %v1153 = vld [vmem:[#allocation2 + $0xb8] sm:$0xff]
        %v1154 = vld [vmem:[#allocation2 + $0xc0] sm:$0xff]
        %v1155 = vld [vmem:[#allocation2 + $0xc8] sm:$0xff]
        %v1156 = vld [vmem:[#allocation2 + $0xd0] sm:$0xff]
        %v1157 = vld [vmem:[#allocation2 + $0xd8] sm:$0xff]
        %v1158 = vld [vmem:[#allocation2 + $0xe0] sm:$0xff]
        %v1159 = vld [vmem:[#allocation2 + $0xe8] sm:$0xff]
        %v1160 = vld [vmem:[#allocation2 + $0xf0] sm:$0xff]
        %v1161 = vld [vmem:[#allocation2 + $0xf8] sm:$0xff]
        %v1162 = vld [vmem:[#allocation2 + $0x100] sm:$0xff]
        %v1163 = vld [vmem:[#allocation2 + $0x108] sm:$0xff]
        %v1164 = vld [vmem:[#allocation2 + $0x110] sm:$0xff]
        %v1165 = vld [vmem:[#allocation2 + $0x118] sm:$0xff]
        %v1166 = vld [vmem:[#allocation2 + $0x120] sm:$0xff]
        %v1167 = vld [vmem:[#allocation2 + $0x128] sm:$0xff]
        %v1168 = vld [vmem:[#allocation2 + $0x130] sm:$0xff]
        %v1169 = vld [vmem:[#allocation2 + $0x138] sm:$0xff]
        %v1170 = vld [vmem:[#allocation2 + $0x140] sm:$0xff]
        %v1171 = vld [vmem:[#allocation2 + $0x148] sm:$0xff]
        %v1172 = vld [vmem:[#allocation2 + $0x150] sm:$0xff]
        %v1173 = vld [vmem:[#allocation2 + $0x158] sm:$0xff]
        %v1174 = vld [vmem:[#allocation2 + $0x160] sm:$0xff]
        %v1175 = vld [vmem:[#allocation2 + $0x168] sm:$0xff]
        %v1176 = vld [vmem:[#allocation2 + $0x170] sm:$0xff]
        %v1177 = vld [vmem:[#allocation2 + $0x178] sm:$0xff]
        %v1178 = vld [vmem:[#allocation2 + $0x180] sm:$0xff]
        %v1179 = vld [vmem:[#allocation2 + $0x188] sm:$0xff]
        %v1180 = vld [vmem:[#allocation2 + $0x190] sm:$0xff]
        %v1181 = vld [vmem:[#allocation2 + $0x198] sm:$0xff]
        %v1182 = vld [vmem:[#allocation2 + $0x1a0] sm:$0xff]
        %v1183 = vld [vmem:[#allocation2 + $0x1a8] sm:$0xff]
        %v1184 = vld [vmem:[#allocation2 + $0x1b0] sm:$0xff]
        %v1185 = vld [vmem:[#allocation2 + $0x1b8] sm:$0xff]
        %v1186 = vld [vmem:[#allocation2 + $0x1c0] sm:$0xff]
        %v1187 = vld [vmem:[#allocation2 + $0x1c8] sm:$0xff]
        %v1188 = vld [vmem:[#allocation2 + $0x1d0] sm:$0xff]
        %v1189 = vld [vmem:[#allocation2 + $0x1d8] sm:$0xff]
        %v1190 = vld [vmem:[#allocation2 + $0x1e0] sm:$0xff]
        %v1191 = vld [vmem:[#allocation2 + $0x1e8] sm:$0xff]
        %v1192 = vld [vmem:[#allocation2 + $0x1f0] sm:$0xff]
        %v1193 = vld [vmem:[#allocation2 + $0x1f8] sm:$0xff]
        %v1194 = vld [vmem:[%s2] sm:$0x1]
        %v1196 = vlaneseq
        %v1197 = vshrl.u32 %v1196, 7
        %v1198 = vsub.s32 0, %v1197
        %v1199 = vrot.slane %v1194, %v1198
        %v1201 = vadd.f32 %v1130, %v1199
        %v1202 = vadd.f32 %v1131, %v1199
        %v1203 = vadd.f32 %v1132, %v1199
        %v1204 = vadd.f32 %v1133, %v1199
        %v1205 = vadd.f32 %v1134, %v1199
        %v1206 = vadd.f32 %v1135, %v1199
        %v1207 = vadd.f32 %v1136, %v1199
        %v1208 = vadd.f32 %v1137, %v1199
        %v1209 = vadd.f32 %v1138, %v1199
        %v1210 = vadd.f32 %v1139, %v1199
        %v1211 = vadd.f32 %v1140, %v1199
        %v1212 = vadd.f32 %v1141, %v1199
        %v1213 = vadd.f32 %v1142, %v1199
        %v1214 = vadd.f32 %v1143, %v1199
        %v1215 = vadd.f32 %v1144, %v1199
        %v1216 = vadd.f32 %v1145, %v1199
        %v1217 = vadd.f32 %v1146, %v1199
        %v1218 = vadd.f32 %v1147, %v1199
        %v1219 = vadd.f32 %v1148, %v1199
        %v1220 = vadd.f32 %v1149, %v1199
        %v1221 = vadd.f32 %v1150, %v1199
        %v1222 = vadd.f32 %v1151, %v1199
        %v1223 = vadd.f32 %v1152, %v1199
        %v1224 = vadd.f32 %v1153, %v1199
        %v1225 = vadd.f32 %v1154, %v1199
        %v1226 = vadd.f32 %v1155, %v1199
        %v1227 = vadd.f32 %v1156, %v1199
        %v1228 = vadd.f32 %v1157, %v1199
        %v1229 = vadd.f32 %v1158, %v1199
        %v1230 = vadd.f32 %v1159, %v1199
        %v1231 = vadd.f32 %v1160, %v1199
        %v1232 = vadd.f32 %v1161, %v1199
        %v1233 = vadd.f32 %v1162, %v1199
        %v1234 = vadd.f32 %v1163, %v1199
        %v1235 = vadd.f32 %v1164, %v1199
        %v1236 = vadd.f32 %v1165, %v1199
        %v1237 = vadd.f32 %v1166, %v1199
        %v1238 = vadd.f32 %v1167, %v1199
        %v1239 = vadd.f32 %v1168, %v1199
        %v1240 = vadd.f32 %v1169, %v1199
        %v1241 = vadd.f32 %v1170, %v1199
        %v1242 = vadd.f32 %v1171, %v1199
        %v1243 = vadd.f32 %v1172, %v1199
        %v1244 = vadd.f32 %v1173, %v1199
        %v1245 = vadd.f32 %v1174, %v1199
        %v1246 = vadd.f32 %v1175, %v1199
        %v1247 = vadd.f32 %v1176, %v1199
        %v1248 = vadd.f32 %v1177, %v1199
        %v1249 = vadd.f32 %v1178, %v1199
        %v1250 = vadd.f32 %v1179, %v1199
        %v1251 = vadd.f32 %v1180, %v1199
        %v1252 = vadd.f32 %v1181, %v1199
        %v1253 = vadd.f32 %v1182, %v1199
        %v1254 = vadd.f32 %v1183, %v1199
        %v1255 = vadd.f32 %v1184, %v1199
        %v1256 = vadd.f32 %v1185, %v1199
        %v1257 = vadd.f32 %v1186, %v1199
        %v1258 = vadd.f32 %v1187, %v1199
        %v1259 = vadd.f32 %v1188, %v1199
        %v1260 = vadd.f32 %v1189, %v1199
        %v1261 = vadd.f32 %v1190, %v1199
        %v1262 = vadd.f32 %v1191, %v1199
        %v1263 = vadd.f32 %v1192, %v1199
        %v1264 = vadd.f32 %v1193, %v1199
        %1265 = vst [vmem:[%s251] sm:$0xff] %v1201
        %1266 = vst [vmem:[%s251 + $0x8] sm:$0xff] %v1202
        %1267 = vst [vmem:[%s251 + $0x10] sm:$0xff] %v1203
        %1268 = vst [vmem:[%s251 + $0x18] sm:$0xff] %v1204
        %1269 = vst [vmem:[%s251 + $0x20] sm:$0xff] %v1205
        %1270 = vst [vmem:[%s251 + $0x28] sm:$0xff] %v1206
        %1271 = vst [vmem:[%s251 + $0x30] sm:$0xff] %v1207
        %1272 = vst [vmem:[%s251 + $0x38] sm:$0xff] %v1208
        %1273 = vst [vmem:[%s251 + $0x40] sm:$0xff] %v1209
        %1274 = vst [vmem:[%s251 + $0x48] sm:$0xff] %v1210
        %1275 = vst [vmem:[%s251 + $0x50] sm:$0xff] %v1211
        %1276 = vst [vmem:[%s251 + $0x58] sm:$0xff] %v1212
        %1277 = vst [vmem:[%s251 + $0x60] sm:$0xff] %v1213
        %1278 = vst [vmem:[%s251 + $0x68] sm:$0xff] %v1214
        %1279 = vst [vmem:[%s251 + $0x70] sm:$0xff] %v1215
        %1280 = vst [vmem:[%s251 + $0x78] sm:$0xff] %v1216
        %1281 = vst [vmem:[%s251 + $0x80] sm:$0xff] %v1217
        %1282 = vst [vmem:[%s251 + $0x88] sm:$0xff] %v1218
        %1283 = vst [vmem:[%s251 + $0x90] sm:$0xff] %v1219
        %1284 = vst [vmem:[%s251 + $0x98] sm:$0xff] %v1220
        %1285 = vst [vmem:[%s251 + $0xa0] sm:$0xff] %v1221
        %1286 = vst [vmem:[%s251 + $0xa8] sm:$0xff] %v1222
        %1287 = vst [vmem:[%s251 + $0xb0] sm:$0xff] %v1223
        %1288 = vst [vmem:[%s251 + $0xb8] sm:$0xff] %v1224
        %1289 = vst [vmem:[%s251 + $0xc0] sm:$0xff] %v1225
        %1290 = vst [vmem:[%s251 + $0xc8] sm:$0xff] %v1226
        %1291 = vst [vmem:[%s251 + $0xd0] sm:$0xff] %v1227
        %1292 = vst [vmem:[%s251 + $0xd8] sm:$0xff] %v1228
        %1293 = vst [vmem:[%s251 + $0xe0] sm:$0xff] %v1229
        %1294 = vst [vmem:[%s251 + $0xe8] sm:$0xff] %v1230
        %1295 = vst [vmem:[%s251 + $0xf0] sm:$0xff] %v1231
        %1296 = vst [vmem:[%s251 + $0xf8] sm:$0xff] %v1232
        %1297 = vst [vmem:[%s251 + $0x100] sm:$0xff] %v1233
        %1298 = vst [vmem:[%s251 + $0x108] sm:$0xff] %v1234
        %1299 = vst [vmem:[%s251 + $0x110] sm:$0xff] %v1235
        %1300 = vst [vmem:[%s251 + $0x118] sm:$0xff] %v1236
        %1301 = vst [vmem:[%s251 + $0x120] sm:$0xff] %v1237
        %1302 = vst [vmem:[%s251 + $0x128] sm:$0xff] %v1238
        %1303 = vst [vmem:[%s251 + $0x130] sm:$0xff] %v1239
        %1304 = vst [vmem:[%s251 + $0x138] sm:$0xff] %v1240
        %1305 = vst [vmem:[%s251 + $0x140] sm:$0xff] %v1241
        %1306 = vst [vmem:[%s251 + $0x148] sm:$0xff] %v1242
        %1307 = vst [vmem:[%s251 + $0x150] sm:$0xff] %v1243
        %1308 = vst [vmem:[%s251 + $0x158] sm:$0xff] %v1244
        %1309 = vst [vmem:[%s251 + $0x160] sm:$0xff] %v1245
        %1310 = vst [vmem:[%s251 + $0x168] sm:$0xff] %v1246
        %1311 = vst [vmem:[%s251 + $0x170] sm:$0xff] %v1247
        %1312 = vst [vmem:[%s251 + $0x178] sm:$0xff] %v1248
        %1313 = vst [vmem:[%s251 + $0x180] sm:$0xff] %v1249
        %1314 = vst [vmem:[%s251 + $0x188] sm:$0xff] %v1250
        %1315 = vst [vmem:[%s251 + $0x190] sm:$0xff] %v1251
        %1316 = vst [vmem:[%s251 + $0x198] sm:$0xff] %v1252
        %1317 = vst [vmem:[%s251 + $0x1a0] sm:$0xff] %v1253
        %1318 = vst [vmem:[%s251 + $0x1a8] sm:$0xff] %v1254
        %1319 = vst [vmem:[%s251 + $0x1b0] sm:$0xff] %v1255
        %1320 = vst [vmem:[%s251 + $0x1b8] sm:$0xff] %v1256
        %1321 = vst [vmem:[%s251 + $0x1c0] sm:$0xff] %v1257
        %1322 = vst [vmem:[%s251 + $0x1c8] sm:$0xff] %v1258
        %1323 = vst [vmem:[%s251 + $0x1d0] sm:$0xff] %v1259
        %1324 = vst [vmem:[%s251 + $0x1d8] sm:$0xff] %v1260
        %1325 = vst [vmem:[%s251 + $0x1e0] sm:$0xff] %v1261
        %1326 = vst [vmem:[%s251 + $0x1e8] sm:$0xff] %v1262
        %1327 = vst [vmem:[%s251 + $0x1f0] sm:$0xff] %v1263
        %1328 = vst [vmem:[%s251 + $0x1f8] sm:$0xff] %v1264
        %v1329 = vadd.f32 %v1201, %v1202
        %v1330 = vadd.f32 %v1329, %v1203
        %v1331 = vadd.f32 %v1330, %v1204
        %v1332 = vadd.f32 %v1331, %v1205
        %v1333 = vadd.f32 %v1332, %v1206
        %v1334 = vadd.f32 %v1333, %v1207
        %v1335 = vadd.f32 %v1334, %v1208
        %v1336 = vadd.f32 %v1335, %v1209
        %v1337 = vadd.f32 %v1336, %v1210
        %v1338 = vadd.f32 %v1337, %v1211
        %v1339 = vadd.f32 %v1338, %v1212
        %v1340 = vadd.f32 %v1339, %v1213
        %v1341 = vadd.f32 %v1340, %v1214
        %v1342 = vadd.f32 %v1341, %v1215
        %v1343 = vadd.f32 %v1342, %v1216
        %v1344 = vadd.f32 %v1343, %v1217
        %v1345 = vadd.f32 %v1344, %v1218
        %v1346 = vadd.f32 %v1345, %v1219
        %v1347 = vadd.f32 %v1346, %v1220
        %v1348 = vadd.f32 %v1347, %v1221
        %v1349 = vadd.f32 %v1348, %v1222
        %v1350 = vadd.f32 %v1349, %v1223
        %v1351 = vadd.f32 %v1350, %v1224
        %v1352 = vadd.f32 %v1351, %v1225
        %v1353 = vadd.f32 %v1352, %v1226
        %v1354 = vadd.f32 %v1353, %v1227
        %v1355 = vadd.f32 %v1354, %v1228
        %v1356 = vadd.f32 %v1355, %v1229
        %v1357 = vadd.f32 %v1356, %v1230
        %v1358 = vadd.f32 %v1357, %v1231
        %v1359 = vadd.f32 %v1358, %v1232
        %v1360 = vadd.f32 %v1359, %v1233
        %v1361 = vadd.f32 %v1360, %v1234
        %v1362 = vadd.f32 %v1361, %v1235
        %v1363 = vadd.f32 %v1362, %v1236
        %v1364 = vadd.f32 %v1363, %v1237
        %v1365 = vadd.f32 %v1364, %v1238
        %v1366 = vadd.f32 %v1365, %v1239
        %v1367 = vadd.f32 %v1366, %v1240
        %v1368 = vadd.f32 %v1367, %v1241
        %v1369 = vadd.f32 %v1368, %v1242
        %v1370 = vadd.f32 %v1369, %v1243
        %v1371 = vadd.f32 %v1370, %v1244
        %v1372 = vadd.f32 %v1371, %v1245
        %v1373 = vadd.f32 %v1372, %v1246
        %v1374 = vadd.f32 %v1373, %v1247
        %v1375 = vadd.f32 %v1374, %v1248
        %v1376 = vadd.f32 %v1375, %v1249
        %v1377 = vadd.f32 %v1376, %v1250
        %v1378 = vadd.f32 %v1377, %v1251
        %v1379 = vadd.f32 %v1378, %v1252
        %v1380 = vadd.f32 %v1379, %v1253
        %v1381 = vadd.f32 %v1380, %v1254
        %v1382 = vadd.f32 %v1381, %v1255
        %v1383 = vadd.f32 %v1382, %v1256
        %v1384 = vadd.f32 %v1383, %v1257
        %v1385 = vadd.f32 %v1384, %v1258
        %v1386 = vadd.f32 %v1385, %v1259
        %v1387 = vadd.f32 %v1386, %v1260
        %v1388 = vadd.f32 %v1387, %v1261
        %v1389 = vadd.f32 %v1388, %v1262
        %v1390 = vadd.f32 %v1389, %v1263
        %v1391 = vadd.f32 %v1390, %v1264
        %v1392 = vrot.slane %v1391, 4
        %v1393 = vadd.f32 %v1391, %v1392
        %v1394 = vrot.slane %v1393, 2
        %v1395 = vadd.f32 %v1393, %v1394
        %v1396 = vrot.slane %v1395, 1
        %v1397 = vadd.f32 %v1395, %v1396
        %v1398 = vmul.f32 %v1201, %v1201
        %v1399 = vmul.f32 %v1202, %v1202
        %v1400 = vmul.f32 %v1203, %v1203
        %v1401 = vmul.f32 %v1204, %v1204
        %v1402 = vmul.f32 %v1205, %v1205
        %v1403 = vmul.f32 %v1206, %v1206
        %v1404 = vmul.f32 %v1207, %v1207
        %v1405 = vmul.f32 %v1208, %v1208
        %v1406 = vmul.f32 %v1209, %v1209
        %v1407 = vmul.f32 %v1210, %v1210
        %v1408 = vmul.f32 %v1211, %v1211
        %v1409 = vmul.f32 %v1212, %v1212
        %v1410 = vmul.f32 %v1213, %v1213
        %v1411 = vmul.f32 %v1214, %v1214
        %v1412 = vmul.f32 %v1215, %v1215
        %v1413 = vmul.f32 %v1216, %v1216
        %v1414 = vmul.f32 %v1217, %v1217
        %v1415 = vmul.f32 %v1218, %v1218
        %v1416 = vmul.f32 %v1219, %v1219
        %v1417 = vmul.f32 %v1220, %v1220
        %v1418 = vmul.f32 %v1221, %v1221
        %v1419 = vmul.f32 %v1222, %v1222
        %v1420 = vmul.f32 %v1223, %v1223
        %v1421 = vmul.f32 %v1224, %v1224
        %v1422 = vmul.f32 %v1225, %v1225
        %v1423 = vmul.f32 %v1226, %v1226
        %v1424 = vmul.f32 %v1227, %v1227
        %v1425 = vmul.f32 %v1228, %v1228
        %v1426 = vmul.f32 %v1229, %v1229
        %v1427 = vmul.f32 %v1230, %v1230
        %v1428 = vmul.f32 %v1231, %v1231
        %v1429 = vmul.f32 %v1232, %v1232
        %v1430 = vmul.f32 %v1233, %v1233
        %v1431 = vmul.f32 %v1234, %v1234
        %v1432 = vmul.f32 %v1235, %v1235
        %v1433 = vmul.f32 %v1236, %v1236
        %v1434 = vmul.f32 %v1237, %v1237
        %v1435 = vmul.f32 %v1238, %v1238
        %v1436 = vmul.f32 %v1239, %v1239
        %v1437 = vmul.f32 %v1240, %v1240
        %v1438 = vmul.f32 %v1241, %v1241
        %v1439 = vmul.f32 %v1242, %v1242
        %v1440 = vmul.f32 %v1243, %v1243
        %v1441 = vmul.f32 %v1244, %v1244
        %v1442 = vmul.f32 %v1245, %v1245
        %v1443 = vmul.f32 %v1246, %v1246
        %v1444 = vmul.f32 %v1247, %v1247
        %v1445 = vmul.f32 %v1248, %v1248
        %v1446 = vmul.f32 %v1249, %v1249
        %v1447 = vmul.f32 %v1250, %v1250
        %v1448 = vmul.f32 %v1251, %v1251
        %v1449 = vmul.f32 %v1252, %v1252
        %v1450 = vmul.f32 %v1253, %v1253
        %v1451 = vmul.f32 %v1254, %v1254
        %v1452 = vmul.f32 %v1255, %v1255
        %v1453 = vmul.f32 %v1256, %v1256
        %v1454 = vmul.f32 %v1257, %v1257
        %v1455 = vmul.f32 %v1258, %v1258
        %v1456 = vmul.f32 %v1259, %v1259
        %v1457 = vmul.f32 %v1260, %v1260
        %v1458 = vmul.f32 %v1261, %v1261
        %v1459 = vmul.f32 %v1262, %v1262
        %v1460 = vmul.f32 %v1263, %v1263
        %v1461 = vmul.f32 %v1264, %v1264
        %v1462 = vadd.f32 %v1398, %v1399
        %v1463 = vadd.f32 %v1462, %v1400
        %v1464 = vadd.f32 %v1463, %v1401
        %v1465 = vadd.f32 %v1464, %v1402
        %v1466 = vadd.f32 %v1465, %v1403
        %v1467 = vadd.f32 %v1466, %v1404
        %v1468 = vadd.f32 %v1467, %v1405
        %v1469 = vadd.f32 %v1468, %v1406
        %v1470 = vadd.f32 %v1469, %v1407
        %v1471 = vadd.f32 %v1470, %v1408
        %v1472 = vadd.f32 %v1471, %v1409
        %v1473 = vadd.f32 %v1472, %v1410
        %v1474 = vadd.f32 %v1473, %v1411
        %v1475 = vadd.f32 %v1474, %v1412
        %v1476 = vadd.f32 %v1475, %v1413
        %v1477 = vadd.f32 %v1476, %v1414
        %v1478 = vadd.f32 %v1477, %v1415
        %v1479 = vadd.f32 %v1478, %v1416
        %v1480 = vadd.f32 %v1479, %v1417
        %v1481 = vadd.f32 %v1480, %v1418
        %v1482 = vadd.f32 %v1481, %v1419
        %v1483 = vadd.f32 %v1482, %v1420
        %v1484 = vadd.f32 %v1483, %v1421
        %v1485 = vadd.f32 %v1484, %v1422
        %v1486 = vadd.f32 %v1485, %v1423
        %v1487 = vadd.f32 %v1486, %v1424
        %v1488 = vadd.f32 %v1487, %v1425
        %v1489 = vadd.f32 %v1488, %v1426
        %v1490 = vadd.f32 %v1489, %v1427
        %v1491 = vadd.f32 %v1490, %v1428
        %v1492 = vadd.f32 %v1491, %v1429
        %v1493 = vadd.f32 %v1492, %v1430
        %v1494 = vadd.f32 %v1493, %v1431
        %v1495 = vadd.f32 %v1494, %v1432
        %v1496 = vadd.f32 %v1495, %v1433
        %v1497 = vadd.f32 %v1496, %v1434
        %v1498 = vadd.f32 %v1497, %v1435
        %v1499 = vadd.f32 %v1498, %v1436
        %v1500 = vadd.f32 %v1499, %v1437
        %v1501 = vadd.f32 %v1500, %v1438
        %v1502 = vadd.f32 %v1501, %v1439
        %v1503 = vadd.f32 %v1502, %v1440
        %v1504 = vadd.f32 %v1503, %v1441
        %v1505 = vadd.f32 %v1504, %v1442
        %v1506 = vadd.f32 %v1505, %v1443
        %v1507 = vadd.f32 %v1506, %v1444
        %v1508 = vadd.f32 %v1507, %v1445
        %v1509 = vadd.f32 %v1508, %v1446
        %v1510 = vadd.f32 %v1509, %v1447
        %v1511 = vadd.f32 %v1510, %v1448
        %v1512 = vadd.f32 %v1511, %v1449
        %v1513 = vadd.f32 %v1512, %v1450
        %v1514 = vadd.f32 %v1513, %v1451
        %v1515 = vadd.f32 %v1514, %v1452
        %v1516 = vadd.f32 %v1515, %v1453
        %v1517 = vadd.f32 %v1516, %v1454
        %v1518 = vadd.f32 %v1517, %v1455
        %v1519 = vadd.f32 %v1518, %v1456
        %v1520 = vadd.f32 %v1519, %v1457
        %v1521 = vadd.f32 %v1520, %v1458
        %v1522 = vadd.f32 %v1521, %v1459
        %v1523 = vadd.f32 %v1522, %v1460
        %v1524 = vadd.f32 %v1523, %v1461
        %v1525 = vrot.slane %v1524, 4
        %v1526 = vadd.f32 %v1524, %v1525
        %v1527 = vrot.slane %v1526, 2
        %v1528 = vadd.f32 %v1526, %v1527
        %v1529 = vrot.slane %v1528, 1
        %v1530 = vadd.f32 %v1528, %v1529
        %v1531 = vlaneseq
        %v1532 = vshrl.u32 %v1531, 7
        %vm1533 = vcmp.eq.s32.totalorder %v1532, 0
        %v1534 = vsel %vm1533, %v1397, %v1530
        %1535 = vst [vmem:[%s256] sm:$0x3] %v1534
      $region40: #{_forward.8} parent=31 // pred_fallthru
        _
      %s1536 = smul.u32 64, %s20
      %p1537 = scmp.lt.s32.totalorder %s1536, 255
      %s1538 = scalar_select %p1537, %s1536, 255
      %s1539 = smul.addr %s1538, 8
      %s1540 = scalar_lea.vmem %s3, %s1539
      %p1541 = scmp.lt.s32.totalorder %s20, 3
      %s1542 = scalar_select %p1541, %s20, 3
      %s1543 = smul.addr %s1542, 2
      %s1544 = scalar_lea.vmem %s4, %s1543
      // Predicated region
      $region41: #{_forward.8} parent=31 // pred_check
        %p1545 = pneg %p121
      $region42: #{_forward.8} parent=31 // pred_check_branch
        %1547 = sbr.rel (%p1545) target = $region44
      $region43: #{_forward.8} parent=31 // pred_region
        %s1548 = smul.u32 64, %s20
      $region44: #{_forward.8} parent=31 // pred_fallthru
        _
      // Predicated region
      $region45: #{_forward.8} parent=31 // pred_check
        %p1549 = pneg %p147
      $region46: #{_forward.8} parent=31 // pred_check_branch
        %1551 = sbr.rel (%p1549) target = $region48
      $region47: #{_forward.8} parent=31 // pred_region
        _
      $region48: #{_forward.8} parent=31 // pred_fallthru
        _
    $region32: #{_forward.8} parent=5 // pred_fallthru
      _
    %p1552 = scmp.le.s32.totalorder 2, %s11
    // Predicated region
    $region49: #{_forward.8} parent=5 // pred_check
      %p1553 = pneg %p1552
    $region50: #{_forward.8} parent=5 // pred_check_branch
      %1555 = sbr.rel (%p1553) target = $region52
    $region51: #{_forward.8} parent=5 // pred_region
      %s1556 = ssub.s32 %s11, 2
      // Predicated region
      $region53: #{_forward.8} parent=51 // pred_check
        %p1557 = pneg %p127
      $region54: #{_forward.8} parent=51 // pred_check_branch
        %1559 = sbr.rel (%p1557) target = $region56
      $region55: #{_forward.8} parent=51 // pred_region
        %s1560 = smul.u32 64, %s22
        %p1561 = scmp.lt.s32.totalorder %s1560, 255
        %s1562 = scalar_select %p1561, %s1560, 255
        %s1563 = smul.addr %s1562, 8
        %s1564 = scalar_lea.vmem %s3, %s1563
      $region56: #{_forward.8} parent=51 // pred_fallthru
        _
      // Predicated region
      $region57: #{_forward.8} parent=51 // pred_check
        %p1565 = pneg %p153
      $region58: #{_forward.8} parent=51 // pred_check_branch
        %1567 = sbr.rel (%p1565) target = $region60
      $region59: #{_forward.8} parent=51 // pred_region
        %p1568 = scmp.lt.s32.totalorder %s22, 3
        %s1569 = scalar_select %p1568, %s22, 3
        %s1570 = smul.addr %s1569, 2
        %s1571 = scalar_lea.vmem %s4, %s1570
      $region60: #{_forward.8} parent=51 // pred_fallthru
        _
    $region52: #{_forward.8} parent=5 // pred_fallthru
      _
  $region6: #{_forward.8} parent=0 // loop_footer
    %s15 = sadd.s32 1, %s11
  $region7: #{_forward.8} parent=0 // loop_footer_branch
    %10 = sbr.rel target = $region3
  $region8: #{_forward.8} parent=0 // loop_exit
    _

// kernel: _forward.9
$region0: #{_forward.9}
  #allocation0 [shape = 'u32[]', space=smem, size = 0x4, offset = 0x4, fixed_abs, tag = 'smem constant byte address 0x4 - core index']
  #allocation1 [shape = 'u32[144,128]{1,0:T(1,128)}', space=vmem, size = 0x12000, scoped, tag = 'internal scratch']
  %s0 = inlined_call_operand.vmem [shape: f32[2048,128], index: 0, kind: input, shape index: {}]
  %s1 = inlined_call_operand.vmem [shape: f32[1,128], index: 1, kind: input, shape index: {}]
  %s2 = inlined_call_operand.vmem [shape: f32[1,128], index: 2, kind: input, shape index: {}]
  %s3 = inlined_call_operand.vmem [shape: f32[2048,128], index: 3, kind: output, shape index: {}]
  %s4 = sld [smem:[#allocation0]]
  $region45: #{_forward.9} parent=0
    _
  %s6 = ssub.s32 1, %s4
  %s7 = scalar_select 0, %s6, %s4
  loop: start=0, step=1, limit=4
  $region2: #{_forward.9} parent=0 // loop_pre_header
    _
  $region3: #{_forward.9} parent=0 // loop_header
    %s9 = sphi 0, %s13
    %p10 = scmp.ge.s32.totalorder %s9, 4
    %s19 = sphi 0, %s21
    %s22 = sphi 0, %s19
    %s23 = sphi 0, %s22
    %s39 = sphi 0, %s23
    %s43 = sphi 0, %s43
    %s45 = sphi 0, %s43
    %s46 = sphi 0, %s45
    %s60 = sphi 0, %s46
    %s64 = sphi 0, %s64
    %s66 = sphi 0, %s64
    %s67 = sphi 0, %s66
    %s81 = sphi 0, %s67
    %s87 = sphi 0, %s89
    %s90 = sphi 0, %s87
    %s91 = sphi 0, %s90
    %s107 = sphi 0, %s91
  $region4: #{_forward.9} parent=0 // loop_header_branch
    %12 = sbr.rel (%p10) target = $region8
  $region5: #{_forward.9} parent=0 // loop_body
    %s14 = ssub.s32 %s9, 1
    %s15 = ssub.s32 %s9, 2
    %s16 = sadd.s32 %s9, 1
    %s17 = ssub.s32 %s9, %s16
    %p18 = scmp.eq.s32.totalorder %s17, 0
    %s20 = sadd.s32 %s19, 1
    %s21 = scalar_select %p18, %s19, %s20
    %p24 = pneg %p18
    %p25 = scmp.eq.s32.totalorder %s9, 1
    %p26 = por %p24, %p25
    %p27 = scmp.ne.s32.totalorder %s19, %s22
    %p28 = scmp.eq.s32.totalorder %s9, 0
    %p29 = por %p27, %p28
    %p30 = scmp.ne.s32.totalorder %s19, %s22
    %p31 = scmp.eq.s32.totalorder %s14, 1
    %p32 = por %p30, %p31
    %p33 = scmp.ne.s32.totalorder %s22, %s23
    %p34 = scmp.eq.s32.totalorder %s14, 0
    %p35 = por %p33, %p34
    %p36 = scmp.ne.s32.totalorder %s22, %s23
    %p37 = scmp.eq.s32.totalorder %s15, 1
    %p38 = por %p36, %p37
    %p40 = scmp.ne.s32.totalorder %s23, %s39
    %p41 = scmp.eq.s32.totalorder %s15, 0
    %p42 = por %p40, %p41
    %s44 = sadd.s32 %s43, 1
    %p47 = scmp.eq.s32.totalorder %s9, 1
    %p48 = scmp.ne.s32.totalorder %s43, %s45
    %p49 = scmp.eq.s32.totalorder %s9, 0
    %p50 = por %p48, %p49
    %p51 = scmp.ne.s32.totalorder %s43, %s45
    %p52 = scmp.eq.s32.totalorder %s14, 1
    %p53 = por %p51, %p52
    %p54 = scmp.ne.s32.totalorder %s45, %s46
    %p55 = scmp.eq.s32.totalorder %s14, 0
    %p56 = por %p54, %p55
    %p57 = scmp.ne.s32.totalorder %s45, %s46
    %p58 = scmp.eq.s32.totalorder %s15, 1
    %p59 = por %p57, %p58
    %p61 = scmp.ne.s32.totalorder %s46, %s60
    %p62 = scmp.eq.s32.totalorder %s15, 0
    %p63 = por %p61, %p62
    %s65 = sadd.s32 %s64, 1
    %p68 = scmp.eq.s32.totalorder %s9, 1
    %p69 = scmp.ne.s32.totalorder %s64, %s66
    %p70 = scmp.eq.s32.totalorder %s9, 0
    %p71 = por %p69, %p70
    %p72 = scmp.ne.s32.totalorder %s64, %s66
    %p73 = scmp.eq.s32.totalorder %s14, 1
    %p74 = por %p72, %p73
    %p75 = scmp.ne.s32.totalorder %s66, %s67
    %p76 = scmp.eq.s32.totalorder %s14, 0
    %p77 = por %p75, %p76
    %p78 = scmp.ne.s32.totalorder %s66, %s67
    %p79 = scmp.eq.s32.totalorder %s15, 1
    %p80 = por %p78, %p79
    %p82 = scmp.ne.s32.totalorder %s67, %s81
    %p83 = scmp.eq.s32.totalorder %s15, 0
    %p84 = por %p82, %p83
    %s85 = ssub.s32 %s9, %s16
    %p86 = scmp.eq.s32.totalorder %s85, 0
    %s88 = sadd.s32 %s87, 1
    %s89 = scalar_select %p86, %s87, %s88
    %p92 = pneg %p86
    %p93 = scmp.eq.s32.totalorder %s9, 1
    %p94 = por %p92, %p93
    %p95 = scmp.ne.s32.totalorder %s87, %s90
    %p96 = scmp.eq.s32.totalorder %s9, 0
    %p97 = por %p95, %p96
    %p98 = scmp.ne.s32.totalorder %s87, %s90
    %p99 = scmp.eq.s32.totalorder %s14, 1
    %p100 = por %p98, %p99
    %p101 = scmp.ne.s32.totalorder %s90, %s91
    %p102 = scmp.eq.s32.totalorder %s14, 0
    %p103 = por %p101, %p102
    %p104 = scmp.ne.s32.totalorder %s90, %s91
    %p105 = scmp.eq.s32.totalorder %s15, 1
    %p106 = por %p104, %p105
    %p108 = scmp.ne.s32.totalorder %s91, %s107
    %p109 = scmp.eq.s32.totalorder %s15, 0
    %p110 = por %p108, %p109
    %p111 = scmp.le.s32.totalorder 1, %s9
    %p112 = scmp.lt.s32.totalorder %s9, 3
    %p113 = pnand %p111, %p112
    %p114 = pneg %p113
    // Predicated region
    $region9: #{_forward.9} parent=5 // pred_check
      _
    $region10: #{_forward.9} parent=5 // pred_check_branch
      %116 = sbr.rel (%p113) target = $region12
    $region11: #{_forward.9} parent=5 // pred_region
      %s117 = ssub.s32 %s9, 1
      // Predicated region
      $region13: #{_forward.9} parent=11 // pred_check
        %p118 = pneg %p56
      $region14: #{_forward.9} parent=11 // pred_check_branch
        %120 = sbr.rel (%p118) target = $region16
      $region15: #{_forward.9} parent=11 // pred_region
        _
      $region16: #{_forward.9} parent=11 // pred_fallthru
        _
      // Predicated region
      $region17: #{_forward.9} parent=11 // pred_check
        %p121 = pneg %p77
      $region18: #{_forward.9} parent=11 // pred_check_branch
        %123 = sbr.rel (%p121) target = $region20
      $region19: #{_forward.9} parent=11 // pred_region
        _
      $region20: #{_forward.9} parent=11 // pred_fallthru
        _
    $region12: #{_forward.9} parent=5 // pred_fallthru
      _
    %p124 = scmp.lt.s32.totalorder %s9, 2
    // Predicated region
    $region21: #{_forward.9} parent=5 // pred_check
      %p125 = pneg %p124
    $region22: #{_forward.9} parent=5 // pred_check_branch
      %127 = sbr.rel (%p125) target = $region24
    $region23: #{_forward.9} parent=5 // pred_region
      // Predicated region
      $region25: #{_forward.9} parent=23 // pred_check
        %p128 = pneg %p29
      $region26: #{_forward.9} parent=23 // pred_check_branch
        %130 = sbr.rel (%p128) target = $region28
      $region27: #{_forward.9} parent=23 // pred_region
        %s131 = smul.u32 128, %s9
        %p132 = scmp.lt.s32.totalorder %s131, 255
        %s133 = scalar_select %p132, %s131, 255
        %s134 = smul.addr %s133, 8
        %s135 = scalar_lea.vmem %s0, %s134
        %s136 = smul.u32 128, %s9
      $region28: #{_forward.9} parent=23 // pred_fallthru
        _
    $region24: #{_forward.9} parent=5 // pred_fallthru
      _
    %p137 = scmp.le.s32.totalorder 1, %s9
    %p138 = scmp.lt.s32.totalorder %s9, 3
    %p139 = pnand %p137, %p138
    %p140 = pneg %p139
    // Predicated region
    $region29: #{_forward.9} parent=5 // pred_check
      _
    $region30: #{_forward.9} parent=5 // pred_check_branch
      %142 = sbr.rel (%p139) target = $region32
    $region31: #{_forward.9} parent=5 // pred_region
      %s143 = ssub.s32 %s9, 1
      %s144 = smul.u32 128, %s14
      %p145 = scmp.lt.s32.totalorder %s144, 255
      %s146 = scalar_select %p145, %s144, 255
      %s147 = smul.addr %s146, 8
      %s148 = scalar_lea.vmem %s0, %s147
      %p149 = pneg %p35
      %p150 = pneg %p32
      %p151 = pneg %p56
      %p152 = pneg %p53
      %p153 = pneg %p77
      %p154 = pneg %p74
      %p155 = pneg %p103
      %p156 = pneg %p100
      %s157 = smul.u32 128, %s14
      %p158 = scmp.lt.s32.totalorder %s157, 255
      %s159 = scalar_select %p158, %s157, 255
      %s160 = smul.addr %s159, 8
      %s161 = scalar_lea.vmem %s3, %s160
      %s162 = smul.u32 128, %s14
      %p163 = scmp.lt.s32.totalorder %s162, 255
      %s164 = scalar_select %p163, %s162, 255
      %s165 = smul.addr %s164, 8
      %s166 = scalar_lea.vmem %s0, %s165
      %s167 = smul.u32 128, %s14
      %s168 = smul.u32 128, %s14
      %p169 = scmp.lt.s32.totalorder %s168, 255
      %s170 = scalar_select %p169, %s168, 255
      %s171 = smul.addr %s170, 8
      %s172 = scalar_lea.vmem %s3, %s171
      %s173 = smul.u32 128, %s14
      %v174 = vld [vmem:[%s166] sm:$0xff]
      %v175 = vld [vmem:[%s166 + $0x8] sm:$0xff]
      %v176 = vld [vmem:[%s166 + $0x10] sm:$0xff]
      %v177 = vld [vmem:[%s166 + $0x18] sm:$0xff]
      %v178 = vld [vmem:[%s166 + $0x20] sm:$0xff]
      %v179 = vld [vmem:[%s166 + $0x28] sm:$0xff]
      %v180 = vld [vmem:[%s166 + $0x30] sm:$0xff]
      %v181 = vld [vmem:[%s166 + $0x38] sm:$0xff]
      %v182 = vld [vmem:[%s166 + $0x40] sm:$0xff]
      %v183 = vld [vmem:[%s166 + $0x48] sm:$0xff]
      %v184 = vld [vmem:[%s166 + $0x50] sm:$0xff]
      %v185 = vld [vmem:[%s166 + $0x58] sm:$0xff]
      %v186 = vld [vmem:[%s166 + $0x60] sm:$0xff]
      %v187 = vld [vmem:[%s166 + $0x68] sm:$0xff]
      %v188 = vld [vmem:[%s166 + $0x70] sm:$0xff]
      %v189 = vld [vmem:[%s166 + $0x78] sm:$0xff]
      %v190 = vld [vmem:[%s166 + $0x80] sm:$0xff]
      %v191 = vld [vmem:[%s166 + $0x88] sm:$0xff]
      %v192 = vld [vmem:[%s166 + $0x90] sm:$0xff]
      %v193 = vld [vmem:[%s166 + $0x98] sm:$0xff]
      %v194 = vld [vmem:[%s166 + $0xa0] sm:$0xff]
      %v195 = vld [vmem:[%s166 + $0xa8] sm:$0xff]
      %v196 = vld [vmem:[%s166 + $0xb0] sm:$0xff]
      %v197 = vld [vmem:[%s166 + $0xb8] sm:$0xff]
      %v198 = vld [vmem:[%s166 + $0xc0] sm:$0xff]
      %v199 = vld [vmem:[%s166 + $0xc8] sm:$0xff]
      %v200 = vld [vmem:[%s166 + $0xd0] sm:$0xff]
      %v201 = vld [vmem:[%s166 + $0xd8] sm:$0xff]
      %v202 = vld [vmem:[%s166 + $0xe0] sm:$0xff]
      %v203 = vld [vmem:[%s166 + $0xe8] sm:$0xff]
      %v204 = vld [vmem:[%s166 + $0xf0] sm:$0xff]
      %v205 = vld [vmem:[%s166 + $0xf8] sm:$0xff]
      %v206 = vld [vmem:[%s166 + $0x100] sm:$0xff]
      %v207 = vld [vmem:[%s166 + $0x108] sm:$0xff]
      %v208 = vld [vmem:[%s166 + $0x110] sm:$0xff]
      %v209 = vld [vmem:[%s166 + $0x118] sm:$0xff]
      %v210 = vld [vmem:[%s166 + $0x120] sm:$0xff]
      %v211 = vld [vmem:[%s166 + $0x128] sm:$0xff]
      %v212 = vld [vmem:[%s166 + $0x130] sm:$0xff]
      %v213 = vld [vmem:[%s166 + $0x138] sm:$0xff]
      %v214 = vld [vmem:[%s166 + $0x140] sm:$0xff]
      %v215 = vld [vmem:[%s166 + $0x148] sm:$0xff]
      %v216 = vld [vmem:[%s166 + $0x150] sm:$0xff]
      %v217 = vld [vmem:[%s166 + $0x158] sm:$0xff]
      %v218 = vld [vmem:[%s166 + $0x160] sm:$0xff]
      %v219 = vld [vmem:[%s166 + $0x168] sm:$0xff]
      %v220 = vld [vmem:[%s166 + $0x170] sm:$0xff]
      %v221 = vld [vmem:[%s166 + $0x178] sm:$0xff]
      %v222 = vld [vmem:[%s166 + $0x180] sm:$0xff]
      %v223 = vld [vmem:[%s166 + $0x188] sm:$0xff]
      %v224 = vld [vmem:[%s166 + $0x190] sm:$0xff]
      %v225 = vld [vmem:[%s166 + $0x198] sm:$0xff]
      %v226 = vld [vmem:[%s166 + $0x1a0] sm:$0xff]
      %v227 = vld [vmem:[%s166 + $0x1a8] sm:$0xff]
      %v228 = vld [vmem:[%s166 + $0x1b0] sm:$0xff]
      %v229 = vld [vmem:[%s166 + $0x1b8] sm:$0xff]
      %v230 = vld [vmem:[%s166 + $0x1c0] sm:$0xff]
      %v231 = vld [vmem:[%s166 + $0x1c8] sm:$0xff]
      %v232 = vld [vmem:[%s166 + $0x1d0] sm:$0xff]
      %v233 = vld [vmem:[%s166 + $0x1d8] sm:$0xff]
      %v234 = vld [vmem:[%s166 + $0x1e0] sm:$0xff]
      %v235 = vld [vmem:[%s166 + $0x1e8] sm:$0xff]
      %v236 = vld [vmem:[%s166 + $0x1f0] sm:$0xff]
      %v237 = vld [vmem:[%s166 + $0x1f8] sm:$0xff]
      %v238 = vld [vmem:[%s166 + $0x200] sm:$0xff]
      %v239 = vld [vmem:[%s166 + $0x208] sm:$0xff]
      %v240 = vld [vmem:[%s166 + $0x210] sm:$0xff]
      %v241 = vld [vmem:[%s166 + $0x218] sm:$0xff]
      %v242 = vld [vmem:[%s166 + $0x220] sm:$0xff]
      %v243 = vld [vmem:[%s166 + $0x228] sm:$0xff]
      %v244 = vld [vmem:[%s166 + $0x230] sm:$0xff]
      %v245 = vld [vmem:[%s166 + $0x238] sm:$0xff]
      %v246 = vld [vmem:[%s166 + $0x240] sm:$0xff]
      %v247 = vld [vmem:[%s166 + $0x248] sm:$0xff]
      %v248 = vld [vmem:[%s166 + $0x250] sm:$0xff]
      %v249 = vld [vmem:[%s166 + $0x258] sm:$0xff]
      %v250 = vld [vmem:[%s166 + $0x260] sm:$0xff]
      %v251 = vld [vmem:[%s166 + $0x268] sm:$0xff]
      %v252 = vld [vmem:[%s166 + $0x270] sm:$0xff]
      %v253 = vld [vmem:[%s166 + $0x278] sm:$0xff]
      %v254 = vld [vmem:[%s166 + $0x280] sm:$0xff]
      %v255 = vld [vmem:[%s166 + $0x288] sm:$0xff]
      %v256 = vld [vmem:[%s166 + $0x290] sm:$0xff]
      %v257 = vld [vmem:[%s166 + $0x298] sm:$0xff]
      %v258 = vld [vmem:[%s166 + $0x2a0] sm:$0xff]
      %v259 = vld [vmem:[%s166 + $0x2a8] sm:$0xff]
      %v260 = vld [vmem:[%s166 + $0x2b0] sm:$0xff]
      %v261 = vld [vmem:[%s166 + $0x2b8] sm:$0xff]
      %v262 = vld [vmem:[%s166 + $0x2c0] sm:$0xff]
      %v263 = vld [vmem:[%s166 + $0x2c8] sm:$0xff]
      %v264 = vld [vmem:[%s166 + $0x2d0] sm:$0xff]
      %v265 = vld [vmem:[%s166 + $0x2d8] sm:$0xff]
      %v266 = vld [vmem:[%s166 + $0x2e0] sm:$0xff]
      %v267 = vld [vmem:[%s166 + $0x2e8] sm:$0xff]
      %v268 = vld [vmem:[%s166 + $0x2f0] sm:$0xff]
      %v269 = vld [vmem:[%s166 + $0x2f8] sm:$0xff]
      %v270 = vld [vmem:[%s166 + $0x300] sm:$0xff]
      %v271 = vld [vmem:[%s166 + $0x308] sm:$0xff]
      %v272 = vld [vmem:[%s166 + $0x310] sm:$0xff]
      %v273 = vld [vmem:[%s166 + $0x318] sm:$0xff]
      %v274 = vld [vmem:[%s166 + $0x320] sm:$0xff]
      %v275 = vld [vmem:[%s166 + $0x328] sm:$0xff]
      %v276 = vld [vmem:[%s166 + $0x330] sm:$0xff]
      %v277 = vld [vmem:[%s166 + $0x338] sm:$0xff]
      %v278 = vld [vmem:[%s166 + $0x340] sm:$0xff]
      %v279 = vld [vmem:[%s166 + $0x348] sm:$0xff]
      %v280 = vld [vmem:[%s166 + $0x350] sm:$0xff]
      %v281 = vld [vmem:[%s166 + $0x358] sm:$0xff]
      %v282 = vld [vmem:[%s166 + $0x360] sm:$0xff]
      %v283 = vld [vmem:[%s166 + $0x368] sm:$0xff]
      %v284 = vld [vmem:[%s166 + $0x370] sm:$0xff]
      %v285 = vld [vmem:[%s166 + $0x378] sm:$0xff]
      %v286 = vld [vmem:[%s166 + $0x380] sm:$0xff]
      %v287 = vld [vmem:[%s166 + $0x388] sm:$0xff]
      %v288 = vld [vmem:[%s166 + $0x390] sm:$0xff]
      %v289 = vld [vmem:[%s166 + $0x398] sm:$0xff]
      %v290 = vld [vmem:[%s166 + $0x3a0] sm:$0xff]
      %v291 = vld [vmem:[%s166 + $0x3a8] sm:$0xff]
      %v292 = vld [vmem:[%s166 + $0x3b0] sm:$0xff]
      %v293 = vld [vmem:[%s166 + $0x3b8] sm:$0xff]
      %v294 = vld [vmem:[%s166 + $0x3c0] sm:$0xff]
      %v295 = vld [vmem:[%s166 + $0x3c8] sm:$0xff]
      %v296 = vld [vmem:[%s166 + $0x3d0] sm:$0xff]
      %v297 = vld [vmem:[%s166 + $0x3d8] sm:$0xff]
      %v298 = vld [vmem:[%s166 + $0x3e0] sm:$0xff]
      %v299 = vld [vmem:[%s166 + $0x3e8] sm:$0xff]
      %v300 = vld [vmem:[%s166 + $0x3f0] sm:$0xff]
      %v301 = vld [vmem:[%s166 + $0x3f8] sm:$0xff]
      %v302 = vld [vmem:[%s1] sm:$0x1]
      %v304 = vlaneseq
      %v305 = vshrl.u32 %v304, 7
      %v306 = vsub.s32 0, %v305
      %v307 = vrot.slane %v302, %v306
      %v309 = vmul.f32 %v174, %v307
      %v310 = vmul.f32 %v175, %v307
      %v311 = vmul.f32 %v176, %v307
      %v312 = vmul.f32 %v177, %v307
      %v313 = vmul.f32 %v178, %v307
      %v314 = vmul.f32 %v179, %v307
      %v315 = vmul.f32 %v180, %v307
      %v316 = vmul.f32 %v181, %v307
      %v317 = vmul.f32 %v182, %v307
      %v318 = vmul.f32 %v183, %v307
      %v319 = vmul.f32 %v184, %v307
      %v320 = vmul.f32 %v185, %v307
      %v321 = vmul.f32 %v186, %v307
      %v322 = vmul.f32 %v187, %v307
      %v323 = vmul.f32 %v188, %v307
      %v324 = vmul.f32 %v189, %v307
      %v325 = vmul.f32 %v190, %v307
      %v326 = vmul.f32 %v191, %v307
      %v327 = vmul.f32 %v192, %v307
      %v328 = vmul.f32 %v193, %v307
      %v329 = vmul.f32 %v194, %v307
      %v330 = vmul.f32 %v195, %v307
      %v331 = vmul.f32 %v196, %v307
      %v332 = vmul.f32 %v197, %v307
      %v333 = vmul.f32 %v198, %v307
      %v334 = vmul.f32 %v199, %v307
      %v335 = vmul.f32 %v200, %v307
      %v336 = vmul.f32 %v201, %v307
      %v337 = vmul.f32 %v202, %v307
      %v338 = vmul.f32 %v203, %v307
      %v339 = vmul.f32 %v204, %v307
      %v340 = vmul.f32 %v205, %v307
      %v341 = vmul.f32 %v206, %v307
      %v342 = vmul.f32 %v207, %v307
      %v343 = vmul.f32 %v208, %v307
      %v344 = vmul.f32 %v209, %v307
      %v345 = vmul.f32 %v210, %v307
      %v346 = vmul.f32 %v211, %v307
      %v347 = vmul.f32 %v212, %v307
      %v348 = vmul.f32 %v213, %v307
      %v349 = vmul.f32 %v214, %v307
      %v350 = vmul.f32 %v215, %v307
      %v351 = vmul.f32 %v216, %v307
      %v352 = vmul.f32 %v217, %v307
      %v353 = vmul.f32 %v218, %v307
      %v354 = vmul.f32 %v219, %v307
      %v355 = vmul.f32 %v220, %v307
      %v356 = vmul.f32 %v221, %v307
      %v357 = vmul.f32 %v222, %v307
      %v358 = vmul.f32 %v223, %v307
      %v359 = vmul.f32 %v224, %v307
      %v360 = vmul.f32 %v225, %v307
      %v361 = vmul.f32 %v226, %v307
      %v362 = vmul.f32 %v227, %v307
      %v363 = vmul.f32 %v228, %v307
      %v364 = vmul.f32 %v229, %v307
      %v365 = vmul.f32 %v230, %v307
      %v366 = vmul.f32 %v231, %v307
      %v367 = vmul.f32 %v232, %v307
      %v368 = vmul.f32 %v233, %v307
      %v369 = vmul.f32 %v234, %v307
      %v370 = vmul.f32 %v235, %v307
      %v371 = vmul.f32 %v236, %v307
      %v372 = vmul.f32 %v237, %v307
      %v373 = vmul.f32 %v238, %v307
      %v374 = vmul.f32 %v239, %v307
      %v375 = vmul.f32 %v240, %v307
      %v376 = vmul.f32 %v241, %v307
      %v377 = vmul.f32 %v242, %v307
      %v378 = vmul.f32 %v243, %v307
      %v379 = vmul.f32 %v244, %v307
      %v380 = vmul.f32 %v245, %v307
      %v381 = vmul.f32 %v246, %v307
      %v382 = vmul.f32 %v247, %v307
      %v383 = vmul.f32 %v248, %v307
      %v384 = vmul.f32 %v249, %v307
      %v385 = vmul.f32 %v250, %v307
      %v386 = vmul.f32 %v251, %v307
      %v387 = vmul.f32 %v252, %v307
      %v388 = vmul.f32 %v253, %v307
      %v389 = vmul.f32 %v254, %v307
      %v390 = vmul.f32 %v255, %v307
      %v391 = vmul.f32 %v256, %v307
      %v392 = vmul.f32 %v257, %v307
      %v393 = vmul.f32 %v258, %v307
      %v394 = vmul.f32 %v259, %v307
      %v395 = vmul.f32 %v260, %v307
      %v396 = vmul.f32 %v261, %v307
      %v397 = vmul.f32 %v262, %v307
      %v398 = vmul.f32 %v263, %v307
      %v399 = vmul.f32 %v264, %v307
      %v400 = vmul.f32 %v265, %v307
      %v401 = vmul.f32 %v266, %v307
      %v402 = vmul.f32 %v267, %v307
      %v403 = vmul.f32 %v268, %v307
      %v404 = vmul.f32 %v269, %v307
      %v405 = vmul.f32 %v270, %v307
      %v406 = vmul.f32 %v271, %v307
      %v407 = vmul.f32 %v272, %v307
      %v408 = vmul.f32 %v273, %v307
      %v409 = vmul.f32 %v274, %v307
      %v410 = vmul.f32 %v275, %v307
      %v411 = vmul.f32 %v276, %v307
      %v412 = vmul.f32 %v277, %v307
      %v413 = vmul.f32 %v278, %v307
      %v414 = vmul.f32 %v279, %v307
      %v415 = vmul.f32 %v280, %v307
      %v416 = vmul.f32 %v281, %v307
      %v417 = vmul.f32 %v282, %v307
      %v418 = vmul.f32 %v283, %v307
      %v419 = vmul.f32 %v284, %v307
      %v420 = vmul.f32 %v285, %v307
      %v421 = vmul.f32 %v286, %v307
      %v422 = vmul.f32 %v287, %v307
      %v423 = vmul.f32 %v288, %v307
      %v424 = vmul.f32 %v289, %v307
      %v425 = vmul.f32 %v290, %v307
      %v426 = vmul.f32 %v291, %v307
      %v427 = vmul.f32 %v292, %v307
      %v428 = vmul.f32 %v293, %v307
      %v429 = vmul.f32 %v294, %v307
      %v430 = vmul.f32 %v295, %v307
      %v431 = vmul.f32 %v296, %v307
      %v432 = vmul.f32 %v297, %v307
      %v433 = vmul.f32 %v298, %v307
      %v434 = vmul.f32 %v299, %v307
      %v435 = vmul.f32 %v300, %v307
      %v436 = vmul.f32 %v301, %v307
      %v437 = vld [vmem:[%s2] sm:$0x1]
      %v439 = vlaneseq
      %v440 = vshrl.u32 %v439, 7
      %v441 = vsub.s32 0, %v440
      %v442 = vrot.slane %v437, %v441
      %v444 = vadd.f32 %v309, %v442
      %v445 = vadd.f32 %v310, %v442
      %v446 = vadd.f32 %v311, %v442
      %v447 = vadd.f32 %v312, %v442
      %v448 = vadd.f32 %v313, %v442
      %v449 = vadd.f32 %v314, %v442
      %v450 = vadd.f32 %v315, %v442
      %v451 = vadd.f32 %v316, %v442
      %v452 = vadd.f32 %v317, %v442
      %v453 = vadd.f32 %v318, %v442
      %v454 = vadd.f32 %v319, %v442
      %v455 = vadd.f32 %v320, %v442
      %v456 = vadd.f32 %v321, %v442
      %v457 = vadd.f32 %v322, %v442
      %v458 = vadd.f32 %v323, %v442
      %v459 = vadd.f32 %v324, %v442
      %v460 = vadd.f32 %v325, %v442
      %v461 = vadd.f32 %v326, %v442
      %v462 = vadd.f32 %v327, %v442
      %v463 = vadd.f32 %v328, %v442
      %v464 = vadd.f32 %v329, %v442
      %v465 = vadd.f32 %v330, %v442
      %v466 = vadd.f32 %v331, %v442
      %v467 = vadd.f32 %v332, %v442
      %v468 = vadd.f32 %v333, %v442
      %v469 = vadd.f32 %v334, %v442
      %v470 = vadd.f32 %v335, %v442
      %v471 = vadd.f32 %v336, %v442
      %v472 = vadd.f32 %v337, %v442
      %v473 = vadd.f32 %v338, %v442
      %v474 = vadd.f32 %v339, %v442
      %v475 = vadd.f32 %v340, %v442
      %v476 = vadd.f32 %v341, %v442
      %v477 = vadd.f32 %v342, %v442
      %v478 = vadd.f32 %v343, %v442
      %v479 = vadd.f32 %v344, %v442
      %v480 = vadd.f32 %v345, %v442
      %v481 = vadd.f32 %v346, %v442
      %v482 = vadd.f32 %v347, %v442
      %v483 = vadd.f32 %v348, %v442
      %v484 = vadd.f32 %v349, %v442
      %v485 = vadd.f32 %v350, %v442
      %v486 = vadd.f32 %v351, %v442
      %v487 = vadd.f32 %v352, %v442
      %v488 = vadd.f32 %v353, %v442
      %v489 = vadd.f32 %v354, %v442
      %v490 = vadd.f32 %v355, %v442
      %v491 = vadd.f32 %v356, %v442
      %v492 = vadd.f32 %v357, %v442
      %v493 = vadd.f32 %v358, %v442
      %v494 = vadd.f32 %v359, %v442
      %v495 = vadd.f32 %v360, %v442
      %v496 = vadd.f32 %v361, %v442
      %v497 = vadd.f32 %v362, %v442
      %v498 = vadd.f32 %v363, %v442
      %v499 = vadd.f32 %v364, %v442
      %v500 = vadd.f32 %v365, %v442
      %v501 = vadd.f32 %v366, %v442
      %v502 = vadd.f32 %v367, %v442
      %v503 = vadd.f32 %v368, %v442
      %v504 = vadd.f32 %v369, %v442
      %v505 = vadd.f32 %v370, %v442
      %v506 = vadd.f32 %v371, %v442
      %v507 = vadd.f32 %v372, %v442
      %v508 = vadd.f32 %v373, %v442
      %v509 = vadd.f32 %v374, %v442
      %v510 = vadd.f32 %v375, %v442
      %v511 = vadd.f32 %v376, %v442
      %v512 = vadd.f32 %v377, %v442
      %v513 = vadd.f32 %v378, %v442
      %v514 = vadd.f32 %v379, %v442
      %v515 = vadd.f32 %v380, %v442
      %v516 = vadd.f32 %v381, %v442
      %v517 = vadd.f32 %v382, %v442
      %v518 = vadd.f32 %v383, %v442
      %v519 = vadd.f32 %v384, %v442
      %v520 = vadd.f32 %v385, %v442
      %v521 = vadd.f32 %v386, %v442
      %v522 = vadd.f32 %v387, %v442
      %v523 = vadd.f32 %v388, %v442
      %v524 = vadd.f32 %v389, %v442
      %v525 = vadd.f32 %v390, %v442
      %v526 = vadd.f32 %v391, %v442
      %v527 = vadd.f32 %v392, %v442
      %v528 = vadd.f32 %v393, %v442
      %v529 = vadd.f32 %v394, %v442
      %v530 = vadd.f32 %v395, %v442
      %v531 = vadd.f32 %v396, %v442
      %v532 = vadd.f32 %v397, %v442
      %v533 = vadd.f32 %v398, %v442
      %v534 = vadd.f32 %v399, %v442
      %v535 = vadd.f32 %v400, %v442
      %v536 = vadd.f32 %v401, %v442
      %v537 = vadd.f32 %v402, %v442
      %v538 = vadd.f32 %v403, %v442
      %v539 = vadd.f32 %v404, %v442
      %v540 = vadd.f32 %v405, %v442
      %v541 = vadd.f32 %v406, %v442
      %v542 = vadd.f32 %v407, %v442
      %v543 = vadd.f32 %v408, %v442
      %v544 = vadd.f32 %v409, %v442
      %v545 = vadd.f32 %v410, %v442
      %v546 = vadd.f32 %v411, %v442
      %v547 = vadd.f32 %v412, %v442
      %v548 = vadd.f32 %v413, %v442
      %v549 = vadd.f32 %v414, %v442
      %v550 = vadd.f32 %v415, %v442
      %v551 = vadd.f32 %v416, %v442
      %v552 = vadd.f32 %v417, %v442
      %v553 = vadd.f32 %v418, %v442
      %v554 = vadd.f32 %v419, %v442
      %v555 = vadd.f32 %v420, %v442
      %v556 = vadd.f32 %v421, %v442
      %v557 = vadd.f32 %v422, %v442
      %v558 = vadd.f32 %v423, %v442
      %v559 = vadd.f32 %v424, %v442
      %v560 = vadd.f32 %v425, %v442
      %v561 = vadd.f32 %v426, %v442
      %v562 = vadd.f32 %v427, %v442
      %v563 = vadd.f32 %v428, %v442
      %v564 = vadd.f32 %v429, %v442
      %v565 = vadd.f32 %v430, %v442
      %v566 = vadd.f32 %v431, %v442
      %v567 = vadd.f32 %v432, %v442
      %v568 = vadd.f32 %v433, %v442
      %v569 = vadd.f32 %v434, %v442
      %v570 = vadd.f32 %v435, %v442
      %v571 = vadd.f32 %v436, %v442
      %v572 = vmax.f32 %v444, 0.0
      %v573 = vmax.f32 %v445, 0.0
      %v574 = vmax.f32 %v446, 0.0
      %v575 = vmax.f32 %v447, 0.0
      %v576 = vmax.f32 %v448, 0.0
      %v577 = vmax.f32 %v449, 0.0
      %v578 = vmax.f32 %v450, 0.0
      %v579 = vmax.f32 %v451, 0.0
      %v580 = vmax.f32 %v452, 0.0
      %v581 = vmax.f32 %v453, 0.0
      %v582 = vmax.f32 %v454, 0.0
      %v583 = vmax.f32 %v455, 0.0
      %v584 = vmax.f32 %v456, 0.0
      %v585 = vmax.f32 %v457, 0.0
      %v586 = vmax.f32 %v458, 0.0
      %v587 = vmax.f32 %v459, 0.0
      %v588 = vmax.f32 %v460, 0.0
      %v589 = vmax.f32 %v461, 0.0
      %v590 = vmax.f32 %v462, 0.0
      %v591 = vmax.f32 %v463, 0.0
      %v592 = vmax.f32 %v464, 0.0
      %v593 = vmax.f32 %v465, 0.0
      %v594 = vmax.f32 %v466, 0.0
      %v595 = vmax.f32 %v467, 0.0
      %v596 = vmax.f32 %v468, 0.0
      %v597 = vmax.f32 %v469, 0.0
      %v598 = vmax.f32 %v470, 0.0
      %v599 = vmax.f32 %v471, 0.0
      %v600 = vmax.f32 %v472, 0.0
      %v601 = vmax.f32 %v473, 0.0
      %v602 = vmax.f32 %v474, 0.0
      %v603 = vmax.f32 %v475, 0.0
      %v604 = vmax.f32 %v476, 0.0
      %v605 = vmax.f32 %v477, 0.0
      %v606 = vmax.f32 %v478, 0.0
      %v607 = vmax.f32 %v479, 0.0
      %v608 = vmax.f32 %v480, 0.0
      %v609 = vmax.f32 %v481, 0.0
      %v610 = vmax.f32 %v482, 0.0
      %v611 = vmax.f32 %v483, 0.0
      %v612 = vmax.f32 %v484, 0.0
      %v613 = vmax.f32 %v485, 0.0
      %v614 = vmax.f32 %v486, 0.0
      %v615 = vmax.f32 %v487, 0.0
      %v616 = vmax.f32 %v488, 0.0
      %v617 = vmax.f32 %v489, 0.0
      %v618 = vmax.f32 %v490, 0.0
      %v619 = vmax.f32 %v491, 0.0
      %v620 = vmax.f32 %v492, 0.0
      %v621 = vmax.f32 %v493, 0.0
      %v622 = vmax.f32 %v494, 0.0
      %v623 = vmax.f32 %v495, 0.0
      %v624 = vmax.f32 %v496, 0.0
      %v625 = vmax.f32 %v497, 0.0
      %v626 = vmax.f32 %v498, 0.0
      %v627 = vmax.f32 %v499, 0.0
      %v628 = vmax.f32 %v500, 0.0
      %v629 = vmax.f32 %v501, 0.0
      %v630 = vmax.f32 %v502, 0.0
      %v631 = vmax.f32 %v503, 0.0
      %v632 = vmax.f32 %v504, 0.0
      %v633 = vmax.f32 %v505, 0.0
      %v634 = vmax.f32 %v506, 0.0
      %v635 = vmax.f32 %v507, 0.0
      %v636 = vmax.f32 %v508, 0.0
      %v637 = vmax.f32 %v509, 0.0
      %v638 = vmax.f32 %v510, 0.0
      %v639 = vmax.f32 %v511, 0.0
      %v640 = vmax.f32 %v512, 0.0
      %v641 = vmax.f32 %v513, 0.0
      %v642 = vmax.f32 %v514, 0.0
      %v643 = vmax.f32 %v515, 0.0
      %v644 = vmax.f32 %v516, 0.0
      %v645 = vmax.f32 %v517, 0.0
      %v646 = vmax.f32 %v518, 0.0
      %v647 = vmax.f32 %v519, 0.0
      %v648 = vmax.f32 %v520, 0.0
      %v649 = vmax.f32 %v521, 0.0
      %v650 = vmax.f32 %v522, 0.0
      %v651 = vmax.f32 %v523, 0.0
      %v652 = vmax.f32 %v524, 0.0
      %v653 = vmax.f32 %v525, 0.0
      %v654 = vmax.f32 %v526, 0.0
      %v655 = vmax.f32 %v527, 0.0
      %v656 = vmax.f32 %v528, 0.0
      %v657 = vmax.f32 %v529, 0.0
      %v658 = vmax.f32 %v530, 0.0
      %v659 = vmax.f32 %v531, 0.0
      %v660 = vmax.f32 %v532, 0.0
      %v661 = vmax.f32 %v533, 0.0
      %v662 = vmax.f32 %v534, 0.0
      %v663 = vmax.f32 %v535, 0.0
      %v664 = vmax.f32 %v536, 0.0
      %v665 = vmax.f32 %v537, 0.0
      %v666 = vmax.f32 %v538, 0.0
      %v667 = vmax.f32 %v539, 0.0
      %v668 = vmax.f32 %v540, 0.0
      %v669 = vmax.f32 %v541, 0.0
      %v670 = vmax.f32 %v542, 0.0
      %v671 = vmax.f32 %v543, 0.0
      %v672 = vmax.f32 %v544, 0.0
      %v673 = vmax.f32 %v545, 0.0
      %v674 = vmax.f32 %v546, 0.0
      %v675 = vmax.f32 %v547, 0.0
      %v676 = vmax.f32 %v548, 0.0
      %v677 = vmax.f32 %v549, 0.0
      %v678 = vmax.f32 %v550, 0.0
      %v679 = vmax.f32 %v551, 0.0
      %v680 = vmax.f32 %v552, 0.0
      %v681 = vmax.f32 %v553, 0.0
      %v682 = vmax.f32 %v554, 0.0
      %v683 = vmax.f32 %v555, 0.0
      %v684 = vmax.f32 %v556, 0.0
      %v685 = vmax.f32 %v557, 0.0
      %v686 = vmax.f32 %v558, 0.0
      %v687 = vmax.f32 %v559, 0.0
      %v688 = vmax.f32 %v560, 0.0
      %v689 = vmax.f32 %v561, 0.0
      %v690 = vmax.f32 %v562, 0.0
      %v691 = vmax.f32 %v563, 0.0
      %v692 = vmax.f32 %v564, 0.0
      %v693 = vmax.f32 %v565, 0.0
      %v694 = vmax.f32 %v566, 0.0
      %v695 = vmax.f32 %v567, 0.0
      %v696 = vmax.f32 %v568, 0.0
      %v697 = vmax.f32 %v569, 0.0
      %v698 = vmax.f32 %v570, 0.0
      %v699 = vmax.f32 %v571, 0.0
      %700 = vst [vmem:[%s172] sm:$0xff] %v572
      %701 = vst [vmem:[%s172 + $0x8] sm:$0xff] %v573
      %702 = vst [vmem:[%s172 + $0x10] sm:$0xff] %v574
      %703 = vst [vmem:[%s172 + $0x18] sm:$0xff] %v575
      %704 = vst [vmem:[%s172 + $0x20] sm:$0xff] %v576
      %705 = vst [vmem:[%s172 + $0x28] sm:$0xff] %v577
      %706 = vst [vmem:[%s172 + $0x30] sm:$0xff] %v578
      %707 = vst [vmem:[%s172 + $0x38] sm:$0xff] %v579
      %708 = vst [vmem:[%s172 + $0x40] sm:$0xff] %v580
      %709 = vst [vmem:[%s172 + $0x48] sm:$0xff] %v581
      %710 = vst [vmem:[%s172 + $0x50] sm:$0xff] %v582
      %711 = vst [vmem:[%s172 + $0x58] sm:$0xff] %v583
      %712 = vst [vmem:[%s172 + $0x60] sm:$0xff] %v584
      %713 = vst [vmem:[%s172 + $0x68] sm:$0xff] %v585
      %714 = vst [vmem:[%s172 + $0x70] sm:$0xff] %v586
      %715 = vst [vmem:[%s172 + $0x78] sm:$0xff] %v587
      %716 = vst [vmem:[%s172 + $0x80] sm:$0xff] %v588
      %717 = vst [vmem:[%s172 + $0x88] sm:$0xff] %v589
      %718 = vst [vmem:[%s172 + $0x90] sm:$0xff] %v590
      %719 = vst [vmem:[%s172 + $0x98] sm:$0xff] %v591
      %720 = vst [vmem:[%s172 + $0xa0] sm:$0xff] %v592
      %721 = vst [vmem:[%s172 + $0xa8] sm:$0xff] %v593
      %722 = vst [vmem:[%s172 + $0xb0] sm:$0xff] %v594
      %723 = vst [vmem:[%s172 + $0xb8] sm:$0xff] %v595
      %724 = vst [vmem:[%s172 + $0xc0] sm:$0xff] %v596
      %725 = vst [vmem:[%s172 + $0xc8] sm:$0xff] %v597
      %726 = vst [vmem:[%s172 + $0xd0] sm:$0xff] %v598
      %727 = vst [vmem:[%s172 + $0xd8] sm:$0xff] %v599
      %728 = vst [vmem:[%s172 + $0xe0] sm:$0xff] %v600
      %729 = vst [vmem:[%s172 + $0xe8] sm:$0xff] %v601
      %730 = vst [vmem:[%s172 + $0xf0] sm:$0xff] %v602
      %731 = vst [vmem:[%s172 + $0xf8] sm:$0xff] %v603
      %732 = vst [vmem:[%s172 + $0x100] sm:$0xff] %v604
      %733 = vst [vmem:[%s172 + $0x108] sm:$0xff] %v605
      %734 = vst [vmem:[%s172 + $0x110] sm:$0xff] %v606
      %735 = vst [vmem:[%s172 + $0x118] sm:$0xff] %v607
      %736 = vst [vmem:[%s172 + $0x120] sm:$0xff] %v608
      %737 = vst [vmem:[%s172 + $0x128] sm:$0xff] %v609
      %738 = vst [vmem:[%s172 + $0x130] sm:$0xff] %v610
      %739 = vst [vmem:[%s172 + $0x138] sm:$0xff] %v611
      %740 = vst [vmem:[%s172 + $0x140] sm:$0xff] %v612
      %741 = vst [vmem:[%s172 + $0x148] sm:$0xff] %v613
      %742 = vst [vmem:[%s172 + $0x150] sm:$0xff] %v614
      %743 = vst [vmem:[%s172 + $0x158] sm:$0xff] %v615
      %744 = vst [vmem:[%s172 + $0x160] sm:$0xff] %v616
      %745 = vst [vmem:[%s172 + $0x168] sm:$0xff] %v617
      %746 = vst [vmem:[%s172 + $0x170] sm:$0xff] %v618
      %747 = vst [vmem:[%s172 + $0x178] sm:$0xff] %v619
      %748 = vst [vmem:[%s172 + $0x180] sm:$0xff] %v620
      %749 = vst [vmem:[%s172 + $0x188] sm:$0xff] %v621
      %750 = vst [vmem:[%s172 + $0x190] sm:$0xff] %v622
      %751 = vst [vmem:[%s172 + $0x198] sm:$0xff] %v623
      %752 = vst [vmem:[%s172 + $0x1a0] sm:$0xff] %v624
      %753 = vst [vmem:[%s172 + $0x1a8] sm:$0xff] %v625
      %754 = vst [vmem:[%s172 + $0x1b0] sm:$0xff] %v626
      %755 = vst [vmem:[%s172 + $0x1b8] sm:$0xff] %v627
      %756 = vst [vmem:[%s172 + $0x1c0] sm:$0xff] %v628
      %757 = vst [vmem:[%s172 + $0x1c8] sm:$0xff] %v629
      %758 = vst [vmem:[%s172 + $0x1d0] sm:$0xff] %v630
      %759 = vst [vmem:[%s172 + $0x1d8] sm:$0xff] %v631
      %760 = vst [vmem:[%s172 + $0x1e0] sm:$0xff] %v632
      %761 = vst [vmem:[%s172 + $0x1e8] sm:$0xff] %v633
      %762 = vst [vmem:[%s172 + $0x1f0] sm:$0xff] %v634
      %763 = vst [vmem:[%s172 + $0x1f8] sm:$0xff] %v635
      %764 = vst [vmem:[%s172 + $0x200] sm:$0xff] %v636
      %765 = vst [vmem:[%s172 + $0x208] sm:$0xff] %v637
      %766 = vst [vmem:[%s172 + $0x210] sm:$0xff] %v638
      %767 = vst [vmem:[%s172 + $0x218] sm:$0xff] %v639
      %768 = vst [vmem:[%s172 + $0x220] sm:$0xff] %v640
      %769 = vst [vmem:[%s172 + $0x228] sm:$0xff] %v641
      %770 = vst [vmem:[%s172 + $0x230] sm:$0xff] %v642
      %771 = vst [vmem:[%s172 + $0x238] sm:$0xff] %v643
      %772 = vst [vmem:[%s172 + $0x240] sm:$0xff] %v644
      %773 = vst [vmem:[%s172 + $0x248] sm:$0xff] %v645
      %774 = vst [vmem:[%s172 + $0x250] sm:$0xff] %v646
      %775 = vst [vmem:[%s172 + $0x258] sm:$0xff] %v647
      %776 = vst [vmem:[%s172 + $0x260] sm:$0xff] %v648
      %777 = vst [vmem:[%s172 + $0x268] sm:$0xff] %v649
      %778 = vst [vmem:[%s172 + $0x270] sm:$0xff] %v650
      %779 = vst [vmem:[%s172 + $0x278] sm:$0xff] %v651
      %780 = vst [vmem:[%s172 + $0x280] sm:$0xff] %v652
      %781 = vst [vmem:[%s172 + $0x288] sm:$0xff] %v653
      %782 = vst [vmem:[%s172 + $0x290] sm:$0xff] %v654
      %783 = vst [vmem:[%s172 + $0x298] sm:$0xff] %v655
      %784 = vst [vmem:[%s172 + $0x2a0] sm:$0xff] %v656
      %785 = vst [vmem:[%s172 + $0x2a8] sm:$0xff] %v657
      %786 = vst [vmem:[%s172 + $0x2b0] sm:$0xff] %v658
      %787 = vst [vmem:[%s172 + $0x2b8] sm:$0xff] %v659
      %788 = vst [vmem:[%s172 + $0x2c0] sm:$0xff] %v660
      %789 = vst [vmem:[%s172 + $0x2c8] sm:$0xff] %v661
      %790 = vst [vmem:[%s172 + $0x2d0] sm:$0xff] %v662
      %791 = vst [vmem:[%s172 + $0x2d8] sm:$0xff] %v663
      %792 = vst [vmem:[%s172 + $0x2e0] sm:$0xff] %v664
      %793 = vst [vmem:[%s172 + $0x2e8] sm:$0xff] %v665
      %794 = vst [vmem:[%s172 + $0x2f0] sm:$0xff] %v666
      %795 = vst [vmem:[%s172 + $0x2f8] sm:$0xff] %v667
      %796 = vst [vmem:[%s172 + $0x300] sm:$0xff] %v668
      %797 = vst [vmem:[%s172 + $0x308] sm:$0xff] %v669
      %798 = vst [vmem:[%s172 + $0x310] sm:$0xff] %v670
      %799 = vst [vmem:[%s172 + $0x318] sm:$0xff] %v671
      %800 = vst [vmem:[%s172 + $0x320] sm:$0xff] %v672
      %801 = vst [vmem:[%s172 + $0x328] sm:$0xff] %v673
      %802 = vst [vmem:[%s172 + $0x330] sm:$0xff] %v674
      %803 = vst [vmem:[%s172 + $0x338] sm:$0xff] %v675
      %804 = vst [vmem:[%s172 + $0x340] sm:$0xff] %v676
      %805 = vst [vmem:[%s172 + $0x348] sm:$0xff] %v677
      %806 = vst [vmem:[%s172 + $0x350] sm:$0xff] %v678
      %807 = vst [vmem:[%s172 + $0x358] sm:$0xff] %v679
      %808 = vst [vmem:[%s172 + $0x360] sm:$0xff] %v680
      %809 = vst [vmem:[%s172 + $0x368] sm:$0xff] %v681
      %810 = vst [vmem:[%s172 + $0x370] sm:$0xff] %v682
      %811 = vst [vmem:[%s172 + $0x378] sm:$0xff] %v683
      %812 = vst [vmem:[%s172 + $0x380] sm:$0xff] %v684
      %813 = vst [vmem:[%s172 + $0x388] sm:$0xff] %v685
      %814 = vst [vmem:[%s172 + $0x390] sm:$0xff] %v686
      %815 = vst [vmem:[%s172 + $0x398] sm:$0xff] %v687
      %816 = vst [vmem:[%s172 + $0x3a0] sm:$0xff] %v688
      %817 = vst [vmem:[%s172 + $0x3a8] sm:$0xff] %v689
      %818 = vst [vmem:[%s172 + $0x3b0] sm:$0xff] %v690
      %819 = vst [vmem:[%s172 + $0x3b8] sm:$0xff] %v691
      %820 = vst [vmem:[%s172 + $0x3c0] sm:$0xff] %v692
      %821 = vst [vmem:[%s172 + $0x3c8] sm:$0xff] %v693
      %822 = vst [vmem:[%s172 + $0x3d0] sm:$0xff] %v694
      %823 = vst [vmem:[%s172 + $0x3d8] sm:$0xff] %v695
      %824 = vst [vmem:[%s172 + $0x3e0] sm:$0xff] %v696
      %825 = vst [vmem:[%s172 + $0x3e8] sm:$0xff] %v697
      %826 = vst [vmem:[%s172 + $0x3f0] sm:$0xff] %v698
      %827 = vst [vmem:[%s172 + $0x3f8] sm:$0xff] %v699
      %s828 = smul.u32 128, %s14
      %p829 = scmp.lt.s32.totalorder %s828, 255
      %s830 = scalar_select %p829, %s828, 255
      %s831 = smul.addr %s830, 8
      %s832 = scalar_lea.vmem %s3, %s831
      // Predicated region
      $region33: #{_forward.9} parent=31 // pred_check
        %p833 = pneg %p100
      $region34: #{_forward.9} parent=31 // pred_check_branch
        %835 = sbr.rel (%p833) target = $region36
      $region35: #{_forward.9} parent=31 // pred_region
        %s836 = smul.u32 128, %s14
      $region36: #{_forward.9} parent=31 // pred_fallthru
        _
    $region32: #{_forward.9} parent=5 // pred_fallthru
      _
    %p837 = scmp.le.s32.totalorder 2, %s9
    // Predicated region
    $region37: #{_forward.9} parent=5 // pred_check
      %p838 = pneg %p837
    $region38: #{_forward.9} parent=5 // pred_check_branch
      %840 = sbr.rel (%p838) target = $region40
    $region39: #{_forward.9} parent=5 // pred_region
      %s841 = ssub.s32 %s9, 2
      // Predicated region
      $region41: #{_forward.9} parent=39 // pred_check
        %p842 = pneg %p106
      $region42: #{_forward.9} parent=39 // pred_check_branch
        %844 = sbr.rel (%p842) target = $region44
      $region43: #{_forward.9} parent=39 // pred_region
        %s845 = smul.u32 128, %s15
        %p846 = scmp.lt.s32.totalorder %s845, 255
        %s847 = scalar_select %p846, %s845, 255
        %s848 = smul.addr %s847, 8
        %s849 = scalar_lea.vmem %s3, %s848
      $region44: #{_forward.9} parent=39 // pred_fallthru
        _
    $region40: #{_forward.9} parent=5 // pred_fallthru
      _
  $region6: #{_forward.9} parent=0 // loop_footer
    %s13 = sadd.s32 1, %s9
  $region7: #{_forward.9} parent=0 // loop_footer_branch
    %8 = sbr.rel target = $region3
  $region8: #{_forward.9} parent=0 // loop_exit
    _

</llo_original>
